<compile_context>
chip_gen: v5e
topology: v5e:2x2
jax: 0.10.0
libtpu: 0.0.40
codegen_flags: <defaults>
</compile_context>

<pallas_src>
import functools

import jax
import jax.numpy as jnp
from jax import lax
from jax.experimental import pallas as pl
from jax.experimental.pallas import tpu as pltpu

EPS = 1e-5
_VMEM_LIMIT = 32 * 1024 * 1024  # safe on all generations (v7x physical = 64 MiB)


# ---------------------------------------------------------------------------
# Fused conv3x3 kernel factory
#   optional prologue: per-channel affine (fused BN apply of the previous BN)
#   optional epilogue: residual add, ReLU, per-channel partial sum / sum-of-squares
# ---------------------------------------------------------------------------
def _make_conv_kernel(H, W, C, Cout, TH, *, norm_in, residual, relu_out, stats,
                      out_dtype):
    def kernel(*refs):
        idx = 0
        x_ref = refs[idx]; idx += 1          # (1, H+2, W+2, C) padded slab (per-N)
        w_ref = refs[idx]; idx += 1          # (3, 3, C, Cout)
        b_ref = refs[idx]; idx += 1          # (1, Cout)
        if norm_in:
            sc_ref = refs[idx]; idx += 1     # (1, 1, C)
            sh_ref = refs[idx]; idx += 1     # (1, 1, C)
        if residual:
            r_ref = refs[idx]; idx += 1      # (1, TH, W, C)
        out_ref = refs[idx]; idx += 1        # (1, TH, W, Cout)
        if stats:
            st_ref = refs[idx]; idx += 1     # (1, 1, 2, Cout)

        i = pl.program_id(1)
        r0 = pl.multiple_of(i * TH, TH)

        # rows [r0, r0+TH+2) of the padded slab cover the halo for TH output rows.
        slab = x_ref[0, pl.ds(r0, TH + 2)].astype(jnp.float32)   # (TH+2, W+2, C)

        if norm_in:
            # Fused BN apply of the previous layer; keep the zero halo zero.
            slab = slab * sc_ref[...].astype(jnp.float32) + sh_ref[...].astype(jnp.float32)
            row = lax.broadcasted_iota(jnp.int32, (TH + 2, W + 2, C), 0) + r0
            col = lax.broadcasted_iota(jnp.int32, (TH + 2, W + 2, C), 1)
            valid = (row >= 1) & (row <= H) & (col >= 1) & (col <= W)
            slab = jnp.where(valid, slab, 0.0)

        w_all = w_ref[...].astype(jnp.float32)                   # (3, 3, C, Cout)
        acc = jnp.zeros((TH * W, Cout), jnp.float32)
        for kh in range(3):                                      # 9 shifted matmuls
            for kw in range(3):
                patch = slab[kh:kh + TH, kw:kw + W, :].reshape(TH * W, C)
                acc = acc + jnp.dot(patch, w_all[kh, kw],
                                    preferred_element_type=jnp.float32)
        acc = acc + b_ref[...].astype(jnp.float32)

        if residual:
            acc = acc + r_ref[0].astype(jnp.float32).reshape(TH * W, Cout)
        if relu_out:
            acc = jnp.maximum(acc, 0.0)

        out_ref[...] = acc.reshape(1, TH, W, Cout).astype(out_dtype)

        if stats:
            psum = jnp.sum(acc, axis=0, keepdims=True)           # (1, Cout)
            psq = jnp.sum(acc * acc, axis=0, keepdims=True)      # (1, Cout)
            st_ref[...] = jnp.concatenate([psum, psq], axis=0).reshape(1, 1, 2, Cout)

    return kernel


def _pick_tile_h(H, W, C, itemsize, budget_bytes=2 << 20):
    for th in range(H, 0, -1):
        if H % th == 0 and th * W * max(C, 1) * itemsize <= budget_bytes:
            return th
    return 1


def conv3x3_block(x, w, b, *, scale=None, shift=None, residual=None,
                  relu_out=False, want_stats=False, tile_h=None):
    """Fused 3x3 'same' conv. x: (N,H,W,C) NHWC, w: (3,3,C,Cout), b: (Cout,)."""
    N, H, W, C = x.shape
    Cout = w.shape[-1]
    TH = tile_h if tile_h is not None else _pick_tile_h(H, W, max(C, Cout), x.dtype.itemsize)
    assert H % TH == 0, f"tile_h={TH} must divide H={H}"
    HT = H // TH

    xp = jnp.pad(x, ((0, 0), (1, 1), (1, 1), (0, 0)))            # 1-pixel halo only
    norm_in = scale is not None
    has_res = residual is not None

    kernel = _make_conv_kernel(H, W, C, Cout, TH, norm_in=norm_in,
                               residual=has_res, relu_out=relu_out,
                               stats=want_stats, out_dtype=x.dtype)

    in_specs = [
        pl.BlockSpec((1, H + 2, W + 2, C), lambda n, i: (n, 0, 0, 0)),  # per-N slab
        pl.BlockSpec((3, 3, C, Cout), lambda n, i: (0, 0, 0, 0)),       # resident weights
        pl.BlockSpec((1, Cout), lambda n, i: (0, 0)),
    ]
    args = [xp, w, b.reshape(1, Cout)]
    if norm_in:
        in_specs += [pl.BlockSpec((1, 1, C), lambda n, i: (0, 0, 0)),
                     pl.BlockSpec((1, 1, C), lambda n, i: (0, 0, 0))]
        args += [scale.reshape(1, 1, C), shift.reshape(1, 1, C)]
    if has_res:
        in_specs.append(pl.BlockSpec((1, TH, W, C), lambda n, i: (n, i, 0, 0)))
        args.append(residual)

    out_shapes = [jax.ShapeDtypeStruct((N, H, W, Cout), x.dtype)]
    out_specs = [pl.BlockSpec((1, TH, W, Cout), lambda n, i: (n, i, 0, 0))]
    if want_stats:
        out_shapes.append(jax.ShapeDtypeStruct((N, HT, 2, Cout), jnp.float32))
        out_specs.append(pl.BlockSpec((1, 1, 2, Cout), lambda n, i: (n, i, 0, 0)))

    itemsize = x.dtype.itemsize
    cost = pl.CostEstimate(
        flops=2 * N * H * W * 9 * C * Cout,
        transcendentals=0,
        bytes_accessed=(xp.size + w.size + N * H * W * Cout) * itemsize)

    outs = pl.pallas_call(
        kernel,
        out_shape=tuple(out_shapes) if want_stats else out_shapes[0],
        grid=(N, HT),
        in_specs=in_specs,
        out_specs=tuple(out_specs) if want_stats else out_specs[0],
        compiler_params=pltpu.CompilerParams(
            dimension_semantics=("parallel", "parallel"),
            vmem_limit_bytes=_VMEM_LIMIT),
        cost_estimate=cost,
    )(*args)

    if want_stats:
        y, st = outs
        return y, jnp.sum(st, axis=(0, 1))    # (2, Cout) total sum / sum-of-squares
    return outs


# ---------------------------------------------------------------------------
# Final BN apply (tiled elementwise kernel)
# ---------------------------------------------------------------------------
def _affine_kernel(x_ref, sc_ref, sh_ref, o_ref):
    y = x_ref[...].astype(jnp.float32) * sc_ref[...] + sh_ref[...]
    o_ref[...] = y.astype(o_ref.dtype)


def affine_apply(x, scale, shift, tile_h=None):
    N, H, W, C = x.shape
    TH = tile_h if tile_h is not None else _pick_tile_h(H, W, C, x.dtype.itemsize)
    assert H % TH == 0
    HT = H // TH
    return pl.pallas_call(
        _affine_kernel,
        out_shape=jax.ShapeDtypeStruct(x.shape, x.dtype),
        grid=(N, HT),
        in_specs=[pl.BlockSpec((1, TH, W, C), lambda n, i: (n, i, 0, 0)),
                  pl.BlockSpec((1, 1, 1, C), lambda n, i: (0, 0, 0, 0)),
                  pl.BlockSpec((1, 1, 1, C), lambda n, i: (0, 0, 0, 0))],
        out_specs=pl.BlockSpec((1, TH, W, C), lambda n, i: (n, i, 0, 0)),
        compiler_params=pltpu.CompilerParams(
            dimension_semantics=("parallel", "parallel"),
            vmem_limit_bytes=_VMEM_LIMIT),
    )(x, scale.reshape(1, 1, 1, C).astype(jnp.float32),
      shift.reshape(1, 1, 1, C).astype(jnp.float32))


# ---------------------------------------------------------------------------
# BN statistics -> per-channel scale/shift (tiny per-channel JAX math)
# ---------------------------------------------------------------------------
def _bn_scale_shift(stats, gamma, beta, count):
    s, ss = stats[0], stats[1]
    mean = s / count
    var = ss / count - mean * mean          # biased variance (PyTorch training BN)
    inv = lax.rsqrt(var + EPS)
    scale = gamma * inv
    shift = beta - mean * scale
    return scale, shift


# ---------------------------------------------------------------------------
# ResBlock forward
# ---------------------------------------------------------------------------
def init_params(key, c):
    ks = jax.random.split(key, 16)
    bound = 1.0 / jnp.sqrt(9.0 * c)
    params = {}
    for i in range(6):
        params[f"w{i}"] = jax.random.uniform(ks[2 * i], (3, 3, c, c), jnp.float32, -bound, bound)
        params[f"b{i}"] = jax.random.uniform(ks[2 * i + 1], (c,), jnp.float32, -bound, bound)
    for i in range(4):
        params[f"g{i}"] = 1.0 + 0.1 * jax.random.normal(ks[12 + i], (c,), jnp.float32)
        params[f"be{i}"] = 0.1 * jax.random.normal(jax.random.fold_in(ks[12 + i], 7), (c,), jnp.float32)
    return params


@functools.partial(jax.jit, static_argnames=("tile_h",))
def resblock_forward(x_nchw, params, tile_h=None):
    x = jnp.transpose(x_nchw, (0, 2, 3, 1))  # NCHW -> NHWC
    N, H, W, C = x.shape
    count = float(N * H * W)

    # conv0 -> ReLU (+stats for BN0)
    y0, st0 = conv3x3_block(x, params["w0"], params["b0"],
                            relu_out=True, want_stats=True, tile_h=tile_h)
    sc0, sh0 = _bn_scale_shift(st0, params["g0"], params["be0"], count)

    # conv1 consumes BN0(y0) via fused prologue
    y1 = conv3x3_block(y0, params["w1"], params["b1"], scale=sc0, shift=sh0, tile_h=tile_h)
    # conv2 -> ReLU (+stats for BN1)
    y2, st1 = conv3x3_block(y1, params["w2"], params["b2"],
                            relu_out=True, want_stats=True, tile_h=tile_h)
    sc1, sh1 = _bn_scale_shift(st1, params["g1"], params["be1"], count)

    # conv3 consumes BN1(y2)
    y3 = conv3x3_block(y2, params["w3"], params["b3"], scale=sc1, shift=sh1, tile_h=tile_h)
    # conv4 -> ReLU (+stats for BN2)
    y4, st2 = conv3x3_block(y3, params["w4"], params["b4"],
                            relu_out=True, want_stats=True, tile_h=tile_h)
    sc2, sh2 = _bn_scale_shift(st2, params["g2"], params["be2"], count)

    # conv5 consumes BN2(y4), fused residual add + ReLU (+stats for BN3)
    y5, st3 = conv3x3_block(y4, params["w5"], params["b5"], scale=sc2, shift=sh2,
                            residual=x, relu_out=True, want_stats=True, tile_h=tile_h)
    sc3, sh3 = _bn_scale_shift(st3, params["g3"], params["be3"], count)

    out = affine_apply(y5, sc3, sh3, tile_h=tile_h)
    return jnp.transpose(out, (0, 3, 1, 2))  # NHWC -> NCHW


# ---------------------------------------------------------------------------
# Pure-JAX reference (for correctness check)
# ---------------------------------------------------------------------------
def _conv_ref(x, w, b):
    return lax.conv_general_dilated(
        x, w, (1, 1), "SAME",
        dimension_numbers=("NHWC", "HWIO", "NHWC"),
        precision=lax.Precision.HIGHEST) + b


def _relu_bn_ref(x, g, be):
    y = jnp.maximum(x, 0.0)
    m = jnp.mean(y, axis=(0, 1, 2), keepdims=True)
    v = jnp.mean((y - m) ** 2, axis=(0, 1, 2), keepdims=True)
    return (y - m) * lax.rsqrt(v + EPS) * g + be


def resblock_ref(x_nchw, p):
    x = jnp.transpose(x_nchw, (0, 2, 3, 1))
    z = _conv_ref(x, p["w0"], p["b0"]); z = _relu_bn_ref(z, p["g0"], p["be0"])
    z = _conv_ref(z, p["w1"], p["b1"]); z = _conv_ref(z, p["w2"], p["b2"])
    z = _relu_bn_ref(z, p["g1"], p["be1"])
    z = _conv_ref(z, p["w3"], p["b3"]); z = _conv_ref(z, p["w4"], p["b4"])
    z = _relu_bn_ref(z, p["g2"], p["be2"])
    z = _conv_ref(z, p["w5"], p["b5"])
    out = _relu_bn_ref(z + x, p["g3"], p["be3"])
    return jnp.transpose(out, (0, 3, 1, 2))


if __name__ == "__main__":
    key = jax.random.PRNGKey(0)
    k_x, k_p = jax.random.split(key)
    N, C, H, W = 2, 4, 16, 16
    x = jax.random.normal(k_x, (N, C, H, W), jnp.float32)
    params = init_params(k_p, C)

    # tile_h=8 -> grid (N, 2): exercises the spatially-tiled path (dynamic halo slice,
    # in-kernel BN-apply masking, multi-tile partial statistics).
    out = jax.block_until_ready(resblock_forward(x, params, tile_h=8))
    ref = jax.block_until_ready(resblock_ref(x, params))

    assert out.shape == (N, C, H, W) and out.dtype == jnp.float32
    assert bool(jnp.all(jnp.isfinite(out)))
    max_err = float(jnp.max(jnp.abs(out - ref)))
    assert max_err < 5e-3, f"mismatch vs reference: {max_err}"

    print("KERNEL_OK")
</pallas_src>

<mosaic_0001>
module attributes {stable_mosaic.version = 11 : i64} {
  func.func @kernel(%arg0: i32, %arg1: i32, %arg2: memref<1x18x18x4xf32, #tpu.memory_space<vmem>>, %arg3: memref<3x3x4x4xf32, #tpu.memory_space<vmem>>, %arg4: memref<1x4xf32, #tpu.memory_space<vmem>>, %arg5: memref<1x8x16x4xf32, #tpu.memory_space<vmem>>, %arg6: memref<1x1x2x4xf32, #tpu.memory_space<vmem>>) attributes {dimension_semantics = [#tpu.dimension_semantics<parallel>, #tpu.dimension_semantics<parallel>], iteration_bounds = array<i64: 2, 2>, scalar_prefetch = 0 : i64, scratch_operands = 0 : i64, tpu.core_type = #tpu.core_type<tc>, window_params = [{transform_indices = @transform_0, window_bounds = array<i64: 1, 18, 18, 4>}, {pipeline_mode = #tpu.pipeline_mode<synchronous>, transform_indices = @transform_1, window_bounds = array<i64: 3, 3, 4, 4>}, {pipeline_mode = #tpu.pipeline_mode<synchronous>, transform_indices = @transform_2, window_bounds = array<i64: 1, 4>}, {transform_indices = @transform_3, window_bounds = array<i64: 1, 8, 16, 4>}, {transform_indices = @transform_4, window_bounds = array<i64: 1, 1, 2, 4>}]} {
    %c8_i32 = arith.constant 8 : i32
    %0 = arith.muli %arg1, %c8_i32 : i32
    %1 = tpu.assume_multiple %0, 8 : i32
    %c0 = arith.constant 0 : index
    %2 = arith.index_cast %1 : i32 to index
    %c0_0 = arith.constant 0 : index
    %c0_1 = arith.constant 0 : index
    %3 = vector.load %arg2[%c0, %2, %c0_0, %c0_1] : memref<1x18x18x4xf32, #tpu.memory_space<vmem>>, vector<1x10x18x4xf32>
    %4 = vector.shape_cast %3 : vector<1x10x18x4xf32> to vector<10x18x4xf32>
    %c0_2 = arith.constant 0 : index
    %c0_3 = arith.constant 0 : index
    %c0_4 = arith.constant 0 : index
    %c0_5 = arith.constant 0 : index
    %5 = vector.load %arg3[%c0_2, %c0_3, %c0_4, %c0_5] : memref<3x3x4x4xf32, #tpu.memory_space<vmem>>, vector<3x3x4x4xf32>
    %cst = arith.constant 0.000000e+00 : f32
    %6 = vector.broadcast %cst : f32 to vector<128x4xf32>
    %7 = vector.extract_strided_slice %4 {offsets = [0, 0, 0], sizes = [8, 16, 4], strides = [1, 1, 1]} : vector<10x18x4xf32> to vector<8x16x4xf32>
    %8 = vector.shape_cast %7 : vector<8x16x4xf32> to vector<128x4xf32>
    %9 = vector.extract_strided_slice %5 {offsets = [0, 0, 0, 0], sizes = [1, 1, 4, 4], strides = [1, 1, 1, 1]} : vector<3x3x4x4xf32> to vector<1x1x4x4xf32>
    %10 = vector.shape_cast %9 : vector<1x1x4x4xf32> to vector<4x4xf32>
    %cst_6 = arith.constant dense<0.000000e+00> : vector<128x4xf32>
    %11 = tpu.matmul %8, %10, %cst_6 {dimension_numbers = #tpu.dot_dimension_numbers<[1], [0], [0], [1], [0, 0, 1, 1], [], []>} : vector<128x4xf32>, vector<4x4xf32>, vector<128x4xf32> -> vector<128x4xf32>
    %12 = arith.addf %6, %11 : vector<128x4xf32>
    %13 = vector.extract_strided_slice %4 {offsets = [0, 1, 0], sizes = [8, 16, 4], strides = [1, 1, 1]} : vector<10x18x4xf32> to vector<8x16x4xf32>
    %14 = vector.shape_cast %13 : vector<8x16x4xf32> to vector<128x4xf32>
    %15 = vector.extract_strided_slice %5 {offsets = [0, 1, 0, 0], sizes = [1, 1, 4, 4], strides = [1, 1, 1, 1]} : vector<3x3x4x4xf32> to vector<1x1x4x4xf32>
    %16 = vector.shape_cast %15 : vector<1x1x4x4xf32> to vector<4x4xf32>
    %cst_7 = arith.constant dense<0.000000e+00> : vector<128x4xf32>
    %17 = tpu.matmul %14, %16, %cst_7 {dimension_numbers = #tpu.dot_dimension_numbers<[1], [0], [0], [1], [0, 0, 1, 1], [], []>} : vector<128x4xf32>, vector<4x4xf32>, vector<128x4xf32> -> vector<128x4xf32>
    %18 = arith.addf %12, %17 : vector<128x4xf32>
    %19 = vector.extract_strided_slice %4 {offsets = [0, 2, 0], sizes = [8, 16, 4], strides = [1, 1, 1]} : vector<10x18x4xf32> to vector<8x16x4xf32>
    %20 = vector.shape_cast %19 : vector<8x16x4xf32> to vector<128x4xf32>
    %21 = vector.extract_strided_slice %5 {offsets = [0, 2, 0, 0], sizes = [1, 1, 4, 4], strides = [1, 1, 1, 1]} : vector<3x3x4x4xf32> to vector<1x1x4x4xf32>
    %22 = vector.shape_cast %21 : vector<1x1x4x4xf32> to vector<4x4xf32>
    %cst_8 = arith.constant dense<0.000000e+00> : vector<128x4xf32>
    %23 = tpu.matmul %20, %22, %cst_8 {dimension_numbers = #tpu.dot_dimension_numbers<[1], [0], [0], [1], [0, 0, 1, 1], [], []>} : vector<128x4xf32>, vector<4x4xf32>, vector<128x4xf32> -> vector<128x4xf32>
    %24 = arith.addf %18, %23 : vector<128x4xf32>
    %25 = vector.extract_strided_slice %4 {offsets = [1, 0, 0], sizes = [8, 16, 4], strides = [1, 1, 1]} : vector<10x18x4xf32> to vector<8x16x4xf32>
    %26 = vector.shape_cast %25 : vector<8x16x4xf32> to vector<128x4xf32>
    %27 = vector.extract_strided_slice %5 {offsets = [1, 0, 0, 0], sizes = [1, 1, 4, 4], strides = [1, 1, 1, 1]} : vector<3x3x4x4xf32> to vector<1x1x4x4xf32>
    %28 = vector.shape_cast %27 : vector<1x1x4x4xf32> to vector<4x4xf32>
    %cst_9 = arith.constant dense<0.000000e+00> : vector<128x4xf32>
    %29 = tpu.matmul %26, %28, %cst_9 {dimension_numbers = #tpu.dot_dimension_numbers<[1], [0], [0], [1], [0, 0, 1, 1], [], []>} : vector<128x4xf32>, vector<4x4xf32>, vector<128x4xf32> -> vector<128x4xf32>
    %30 = arith.addf %24, %29 : vector<128x4xf32>
    %31 = vector.extract_strided_slice %4 {offsets = [1, 1, 0], sizes = [8, 16, 4], strides = [1, 1, 1]} : vector<10x18x4xf32> to vector<8x16x4xf32>
    %32 = vector.shape_cast %31 : vector<8x16x4xf32> to vector<128x4xf32>
    %33 = vector.extract_strided_slice %5 {offsets = [1, 1, 0, 0], sizes = [1, 1, 4, 4], strides = [1, 1, 1, 1]} : vector<3x3x4x4xf32> to vector<1x1x4x4xf32>
    %34 = vector.shape_cast %33 : vector<1x1x4x4xf32> to vector<4x4xf32>
    %cst_10 = arith.constant dense<0.000000e+00> : vector<128x4xf32>
    %35 = tpu.matmul %32, %34, %cst_10 {dimension_numbers = #tpu.dot_dimension_numbers<[1], [0], [0], [1], [0, 0, 1, 1], [], []>} : vector<128x4xf32>, vector<4x4xf32>, vector<128x4xf32> -> vector<128x4xf32>
    %36 = arith.addf %30, %35 : vector<128x4xf32>
    %37 = vector.extract_strided_slice %4 {offsets = [1, 2, 0], sizes = [8, 16, 4], strides = [1, 1, 1]} : vector<10x18x4xf32> to vector<8x16x4xf32>
    %38 = vector.shape_cast %37 : vector<8x16x4xf32> to vector<128x4xf32>
    %39 = vector.extract_strided_slice %5 {offsets = [1, 2, 0, 0], sizes = [1, 1, 4, 4], strides = [1, 1, 1, 1]} : vector<3x3x4x4xf32> to vector<1x1x4x4xf32>
    %40 = vector.shape_cast %39 : vector<1x1x4x4xf32> to vector<4x4xf32>
    %cst_11 = arith.constant dense<0.000000e+00> : vector<128x4xf32>
    %41 = tpu.matmul %38, %40, %cst_11 {dimension_numbers = #tpu.dot_dimension_numbers<[1], [0], [0], [1], [0, 0, 1, 1], [], []>} : vector<128x4xf32>, vector<4x4xf32>, vector<128x4xf32> -> vector<128x4xf32>
    %42 = arith.addf %36, %41 : vector<128x4xf32>
    %43 = vector.extract_strided_slice %4 {offsets = [2, 0, 0], sizes = [8, 16, 4], strides = [1, 1, 1]} : vector<10x18x4xf32> to vector<8x16x4xf32>
    %44 = vector.shape_cast %43 : vector<8x16x4xf32> to vector<128x4xf32>
    %45 = vector.extract_strided_slice %5 {offsets = [2, 0, 0, 0], sizes = [1, 1, 4, 4], strides = [1, 1, 1, 1]} : vector<3x3x4x4xf32> to vector<1x1x4x4xf32>
    %46 = vector.shape_cast %45 : vector<1x1x4x4xf32> to vector<4x4xf32>
    %cst_12 = arith.constant dense<0.000000e+00> : vector<128x4xf32>
    %47 = tpu.matmul %44, %46, %cst_12 {dimension_numbers = #tpu.dot_dimension_numbers<[1], [0], [0], [1], [0, 0, 1, 1], [], []>} : vector<128x4xf32>, vector<4x4xf32>, vector<128x4xf32> -> vector<128x4xf32>
    %48 = arith.addf %42, %47 : vector<128x4xf32>
    %49 = vector.extract_strided_slice %4 {offsets = [2, 1, 0], sizes = [8, 16, 4], strides = [1, 1, 1]} : vector<10x18x4xf32> to vector<8x16x4xf32>
    %50 = vector.shape_cast %49 : vector<8x16x4xf32> to vector<128x4xf32>
    %51 = vector.extract_strided_slice %5 {offsets = [2, 1, 0, 0], sizes = [1, 1, 4, 4], strides = [1, 1, 1, 1]} : vector<3x3x4x4xf32> to vector<1x1x4x4xf32>
    %52 = vector.shape_cast %51 : vector<1x1x4x4xf32> to vector<4x4xf32>
    %cst_13 = arith.constant dense<0.000000e+00> : vector<128x4xf32>
    %53 = tpu.matmul %50, %52, %cst_13 {dimension_numbers = #tpu.dot_dimension_numbers<[1], [0], [0], [1], [0, 0, 1, 1], [], []>} : vector<128x4xf32>, vector<4x4xf32>, vector<128x4xf32> -> vector<128x4xf32>
    %54 = arith.addf %48, %53 : vector<128x4xf32>
    %55 = vector.extract_strided_slice %4 {offsets = [2, 2, 0], sizes = [8, 16, 4], strides = [1, 1, 1]} : vector<10x18x4xf32> to vector<8x16x4xf32>
    %56 = vector.shape_cast %55 : vector<8x16x4xf32> to vector<128x4xf32>
    %57 = vector.extract_strided_slice %5 {offsets = [2, 2, 0, 0], sizes = [1, 1, 4, 4], strides = [1, 1, 1, 1]} : vector<3x3x4x4xf32> to vector<1x1x4x4xf32>
    %58 = vector.shape_cast %57 : vector<1x1x4x4xf32> to vector<4x4xf32>
    %cst_14 = arith.constant dense<0.000000e+00> : vector<128x4xf32>
    %59 = tpu.matmul %56, %58, %cst_14 {dimension_numbers = #tpu.dot_dimension_numbers<[1], [0], [0], [1], [0, 0, 1, 1], [], []>} : vector<128x4xf32>, vector<4x4xf32>, vector<128x4xf32> -> vector<128x4xf32>
    %60 = arith.addf %54, %59 : vector<128x4xf32>
    %c0_15 = arith.constant 0 : index
    %c0_16 = arith.constant 0 : index
    %61 = vector.load %arg4[%c0_15, %c0_16] : memref<1x4xf32, #tpu.memory_space<vmem>>, vector<1x4xf32>
    %62 = vector.broadcast %61 : vector<1x4xf32> to vector<128x4xf32>
    %63 = arith.addf %60, %62 : vector<128x4xf32>
    %cst_17 = arith.constant 0.000000e+00 : f32
    %64 = vector.broadcast %cst_17 : f32 to vector<128x4xf32>
    %65 = arith.maximumf %63, %64 : vector<128x4xf32>
    %66 = vector.shape_cast %65 : vector<128x4xf32> to vector<1x8x16x4xf32>
    %c0_18 = arith.constant 0 : index
    %c0_19 = arith.constant 0 : index
    %c0_20 = arith.constant 0 : index
    %c0_21 = arith.constant 0 : index
    %67 = vector.load %arg5[%c0_18, %c0_19, %c0_20, %c0_21] : memref<1x8x16x4xf32, #tpu.memory_space<vmem>>, vector<1x8x16x4xf32>
    tpu.vector_store %arg5[%c0_18, %c0_19, %c0_20, %c0_21], %66 {strides = array<i32>} : memref<1x8x16x4xf32, #tpu.memory_space<vmem>>, vector<1x8x16x4xf32>,
    %cst_22 = arith.constant dense<0.000000e+00> : vector<4xf32>
    %68 = vector.multi_reduction <add>, %65, %cst_22 [0] : vector<128x4xf32> to vector<4xf32>
    %69 = vector.shape_cast %68 : vector<4xf32> to vector<1x4xf32>
    %70 = arith.mulf %65, %65 : vector<128x4xf32>
    %cst_23 = arith.constant dense<0.000000e+00> : vector<4xf32>
    %71 = vector.multi_reduction <add>, %70, %cst_23 [0] : vector<128x4xf32> to vector<4xf32>
    %72 = vector.shape_cast %71 : vector<4xf32> to vector<1x4xf32>
    %73 = tpu.concatenate %69, %72 in 0 : vector<1x4xf32>, vector<1x4xf32> -> vector<2x4xf32>
    %74 = vector.shape_cast %73 : vector<2x4xf32> to vector<1x1x2x4xf32>
    %c0_24 = arith.constant 0 : index
    %c0_25 = arith.constant 0 : index
    %c0_26 = arith.constant 0 : index
    %c0_27 = arith.constant 0 : index
    %75 = vector.load %arg6[%c0_24, %c0_25, %c0_26, %c0_27] : memref<1x1x2x4xf32, #tpu.memory_space<vmem>>, vector<1x1x2x4xf32>
    tpu.vector_store %arg6[%c0_24, %c0_25, %c0_26, %c0_27], %74 {strides = array<i32>} : memref<1x1x2x4xf32, #tpu.memory_space<vmem>>, vector<1x1x2x4xf32>,
    return
  }
  func.func @transform_0(%arg0: i32, %arg1: i32) -> (i32, i32, i32, i32) {
    %c0_i32 = arith.constant 0 : i32
    %c0_i32_0 = arith.constant 0 : i32
    %c0_i32_1 = arith.constant 0 : i32
    %c0_i32_2 = arith.constant 0 : i32
    return %arg0, %c0_i32, %c0_i32_0, %c0_i32_1 : i32, i32, i32, i32
  }
  func.func @transform_1(%arg0: i32, %arg1: i32) -> (i32, i32, i32, i32) {
    %c0_i32 = arith.constant 0 : i32
    %c0_i32_0 = arith.constant 0 : i32
    %c0_i32_1 = arith.constant 0 : i32
    %c0_i32_2 = arith.constant 0 : i32
    %c0_i32_3 = arith.constant 0 : i32
    return %c0_i32, %c0_i32_0, %c0_i32_1, %c0_i32_2 : i32, i32, i32, i32
  }
  func.func @transform_2(%arg0: i32, %arg1: i32) -> (i32, i32) {
    %c0_i32 = arith.constant 0 : i32
    %c0_i32_0 = arith.constant 0 : i32
    %c0_i32_1 = arith.constant 0 : i32
    return %c0_i32, %c0_i32_0 : i32, i32
  }
  func.func @transform_3(%arg0: i32, %arg1: i32) -> (i32, i32, i32, i32) {
    %c0_i32 = arith.constant 0 : i32
    %c0_i32_0 = arith.constant 0 : i32
    %c0_i32_1 = arith.constant 0 : i32
    return %arg0, %arg1, %c0_i32, %c0_i32_0 : i32, i32, i32, i32
  }
  func.func @transform_4(%arg0: i32, %arg1: i32) -> (i32, i32, i32, i32) {
    %c0_i32 = arith.constant 0 : i32
    %c0_i32_0 = arith.constant 0 : i32
    %c0_i32_1 = arith.constant 0 : i32
    return %arg0, %arg1, %c0_i32, %c0_i32_0 : i32, i32, i32, i32
  }
}

module attributes {stable_mosaic.version = 11 : i64} {
  func.func @kernel(%arg0: i32, %arg1: i32, %arg2: memref<1x18x18x4xf32, #tpu.memory_space<vmem>>, %arg3: memref<3x3x4x4xf32, #tpu.memory_space<vmem>>, %arg4: memref<1x4xf32, #tpu.memory_space<vmem>>, %arg5: memref<1x1x4xf32, #tpu.memory_space<vmem>>, %arg6: memref<1x1x4xf32, #tpu.memory_space<vmem>>, %arg7: memref<1x8x16x4xf32, #tpu.memory_space<vmem>>) attributes {dimension_semantics = [#tpu.dimension_semantics<parallel>, #tpu.dimension_semantics<parallel>], iteration_bounds = array<i64: 2, 2>, scalar_prefetch = 0 : i64, scratch_operands = 0 : i64, tpu.core_type = #tpu.core_type<tc>, window_params = [{transform_indices = @transform_0, window_bounds = array<i64: 1, 18, 18, 4>}, {pipeline_mode = #tpu.pipeline_mode<synchronous>, transform_indices = @transform_1, window_bounds = array<i64: 3, 3, 4, 4>}, {pipeline_mode = #tpu.pipeline_mode<synchronous>, transform_indices = @transform_2, window_bounds = array<i64: 1, 4>}, {pipeline_mode = #tpu.pipeline_mode<synchronous>, transform_indices = @transform_3, window_bounds = array<i64: 1, 1, 4>}, {pipeline_mode = #tpu.pipeline_mode<synchronous>, transform_indices = @transform_4, window_bounds = array<i64: 1, 1, 4>}, {transform_indices = @transform_5, window_bounds = array<i64: 1, 8, 16, 4>}]} {
    %c8_i32 = arith.constant 8 : i32
    %0 = arith.muli %arg1, %c8_i32 : i32
    %1 = tpu.assume_multiple %0, 8 : i32
    %c0 = arith.constant 0 : index
    %2 = arith.index_cast %1 : i32 to index
    %c0_0 = arith.constant 0 : index
    %c0_1 = arith.constant 0 : index
    %3 = vector.load %arg2[%c0, %2, %c0_0, %c0_1] : memref<1x18x18x4xf32, #tpu.memory_space<vmem>>, vector<1x10x18x4xf32>
    %4 = vector.shape_cast %3 : vector<1x10x18x4xf32> to vector<10x18x4xf32>
    %c0_2 = arith.constant 0 : index
    %c0_3 = arith.constant 0 : index
    %c0_4 = arith.constant 0 : index
    %5 = vector.load %arg5[%c0_2, %c0_3, %c0_4] : memref<1x1x4xf32, #tpu.memory_space<vmem>>, vector<1x1x4xf32>
    %6 = vector.broadcast %5 : vector<1x1x4xf32> to vector<10x18x4xf32>
    %7 = arith.mulf %4, %6 : vector<10x18x4xf32>
    %c0_5 = arith.constant 0 : index
    %c0_6 = arith.constant 0 : index
    %c0_7 = arith.constant 0 : index
    %8 = vector.load %arg6[%c0_5, %c0_6, %c0_7] : memref<1x1x4xf32, #tpu.memory_space<vmem>>, vector<1x1x4xf32>
    %9 = vector.broadcast %8 : vector<1x1x4xf32> to vector<10x18x4xf32>
    %10 = arith.addf %7, %9 : vector<10x18x4xf32>
    %11 = tpu.iota {dimensions = array<i32: 0>} : vector<10x18x4xi32>
    %12 = vector.broadcast %1 : i32 to vector<10x18x4xi32>
    %13 = arith.addi %11, %12 : vector<10x18x4xi32>
    %14 = tpu.iota {dimensions = array<i32: 1>} : vector<10x18x4xi32>
    %c1_i32 = arith.constant 1 : i32
    %15 = vector.broadcast %c1_i32 : i32 to vector<10x18x4xi32>
    %16 = arith.cmpi sge, %13, %15 : vector<10x18x4xi32>
    %c16_i32 = arith.constant 16 : i32
    %17 = vector.broadcast %c16_i32 : i32 to vector<10x18x4xi32>
    %18 = arith.cmpi sle, %13, %17 : vector<10x18x4xi32>
    %19 = arith.andi %16, %18 : vector<10x18x4xi1>
    %c1_i32_8 = arith.constant 1 : i32
    %20 = vector.broadcast %c1_i32_8 : i32 to vector<10x18x4xi32>
    %21 = arith.cmpi sge, %14, %20 : vector<10x18x4xi32>
    %22 = arith.andi %19, %21 : vector<10x18x4xi1>
    %c16_i32_9 = arith.constant 16 : i32
    %23 = vector.broadcast %c16_i32_9 : i32 to vector<10x18x4xi32>
    %24 = arith.cmpi sle, %14, %23 : vector<10x18x4xi32>
    %25 = arith.andi %22, %24 : vector<10x18x4xi1>
    %cst = arith.constant 0.000000e+00 : f32
    %26 = vector.broadcast %cst : f32 to vector<10x18x4xf32>
    %27 = arith.select %25, %10, %26 : vector<10x18x4xi1>, vector<10x18x4xf32>
    %c0_10 = arith.constant 0 : index
    %c0_11 = arith.constant 0 : index
    %c0_12 = arith.constant 0 : index
    %c0_13 = arith.constant 0 : index
    %28 = vector.load %arg3[%c0_10, %c0_11, %c0_12, %c0_13] : memref<3x3x4x4xf32, #tpu.memory_space<vmem>>, vector<3x3x4x4xf32>
    %cst_14 = arith.constant 0.000000e+00 : f32
    %29 = vector.broadcast %cst_14 : f32 to vector<128x4xf32>
    %30 = vector.extract_strided_slice %27 {offsets = [0, 0, 0], sizes = [8, 16, 4], strides = [1, 1, 1]} : vector<10x18x4xf32> to vector<8x16x4xf32>
    %31 = vector.shape_cast %30 : vector<8x16x4xf32> to vector<128x4xf32>
    %32 = vector.extract_strided_slice %28 {offsets = [0, 0, 0, 0], sizes = [1, 1, 4, 4], strides = [1, 1, 1, 1]} : vector<3x3x4x4xf32> to vector<1x1x4x4xf32>
    %33 = vector.shape_cast %32 : vector<1x1x4x4xf32> to vector<4x4xf32>
    %cst_15 = arith.constant dense<0.000000e+00> : vector<128x4xf32>
    %34 = tpu.matmul %31, %33, %cst_15 {dimension_numbers = #tpu.dot_dimension_numbers<[1], [0], [0], [1], [0, 0, 1, 1], [], []>} : vector<128x4xf32>, vector<4x4xf32>, vector<128x4xf32> -> vector<128x4xf32>
    %35 = arith.addf %29, %34 : vector<128x4xf32>
    %36 = vector.extract_strided_slice %27 {offsets = [0, 1, 0], sizes = [8, 16, 4], strides = [1, 1, 1]} : vector<10x18x4xf32> to vector<8x16x4xf32>
    %37 = vector.shape_cast %36 : vector<8x16x4xf32> to vector<128x4xf32>
    %38 = vector.extract_strided_slice %28 {offsets = [0, 1, 0, 0], sizes = [1, 1, 4, 4], strides = [1, 1, 1, 1]} : vector<3x3x4x4xf32> to vector<1x1x4x4xf32>
    %39 = vector.shape_cast %38 : vector<1x1x4x4xf32> to vector<4x4xf32>
    %cst_16 = arith.constant dense<0.000000e+00> : vector<128x4xf32>
    %40 = tpu.matmul %37, %39, %cst_16 {dimension_numbers = #tpu.dot_dimension_numbers<[1], [0], [0], [1], [0, 0, 1, 1], [], []>} : vector<128x4xf32>, vector<4x4xf32>, vector<128x4xf32> -> vector<128x4xf32>
    %41 = arith.addf %35, %40 : vector<128x4xf32>
    %42 = vector.extract_strided_slice %27 {offsets = [0, 2, 0], sizes = [8, 16, 4], strides = [1, 1, 1]} : vector<10x18x4xf32> to vector<8x16x4xf32>
    %43 = vector.shape_cast %42 : vector<8x16x4xf32> to vector<128x4xf32>
    %44 = vector.extract_strided_slice %28 {offsets = [0, 2, 0, 0], sizes = [1, 1, 4, 4], strides = [1, 1, 1, 1]} : vector<3x3x4x4xf32> to vector<1x1x4x4xf32>
    %45 = vector.shape_cast %44 : vector<1x1x4x4xf32> to vector<4x4xf32>
    %cst_17 = arith.constant dense<0.000000e+00> : vector<128x4xf32>
    %46 = tpu.matmul %43, %45, %cst_17 {dimension_numbers = #tpu.dot_dimension_numbers<[1], [0], [0], [1], [0, 0, 1, 1], [], []>} : vector<128x4xf32>, vector<4x4xf32>, vector<128x4xf32> -> vector<128x4xf32>
    %47 = arith.addf %41, %46 : vector<128x4xf32>
    %48 = vector.extract_strided_slice %27 {offsets = [1, 0, 0], sizes = [8, 16, 4], strides = [1, 1, 1]} : vector<10x18x4xf32> to vector<8x16x4xf32>
    %49 = vector.shape_cast %48 : vector<8x16x4xf32> to vector<128x4xf32>
    %50 = vector.extract_strided_slice %28 {offsets = [1, 0, 0, 0], sizes = [1, 1, 4, 4], strides = [1, 1, 1, 1]} : vector<3x3x4x4xf32> to vector<1x1x4x4xf32>
    %51 = vector.shape_cast %50 : vector<1x1x4x4xf32> to vector<4x4xf32>
    %cst_18 = arith.constant dense<0.000000e+00> : vector<128x4xf32>
    %52 = tpu.matmul %49, %51, %cst_18 {dimension_numbers = #tpu.dot_dimension_numbers<[1], [0], [0], [1], [0, 0, 1, 1], [], []>} : vector<128x4xf32>, vector<4x4xf32>, vector<128x4xf32> -> vector<128x4xf32>
    %53 = arith.addf %47, %52 : vector<128x4xf32>
    %54 = vector.extract_strided_slice %27 {offsets = [1, 1, 0], sizes = [8, 16, 4], strides = [1, 1, 1]} : vector<10x18x4xf32> to vector<8x16x4xf32>
    %55 = vector.shape_cast %54 : vector<8x16x4xf32> to vector<128x4xf32>
    %56 = vector.extract_strided_slice %28 {offsets = [1, 1, 0, 0], sizes = [1, 1, 4, 4], strides = [1, 1, 1, 1]} : vector<3x3x4x4xf32> to vector<1x1x4x4xf32>
    %57 = vector.shape_cast %56 : vector<1x1x4x4xf32> to vector<4x4xf32>
    %cst_19 = arith.constant dense<0.000000e+00> : vector<128x4xf32>
    %58 = tpu.matmul %55, %57, %cst_19 {dimension_numbers = #tpu.dot_dimension_numbers<[1], [0], [0], [1], [0, 0, 1, 1], [], []>} : vector<128x4xf32>, vector<4x4xf32>, vector<128x4xf32> -> vector<128x4xf32>
    %59 = arith.addf %53, %58 : vector<128x4xf32>
    %60 = vector.extract_strided_slice %27 {offsets = [1, 2, 0], sizes = [8, 16, 4], strides = [1, 1, 1]} : vector<10x18x4xf32> to vector<8x16x4xf32>
    %61 = vector.shape_cast %60 : vector<8x16x4xf32> to vector<128x4xf32>
    %62 = vector.extract_strided_slice %28 {offsets = [1, 2, 0, 0], sizes = [1, 1, 4, 4], strides = [1, 1, 1, 1]} : vector<3x3x4x4xf32> to vector<1x1x4x4xf32>
    %63 = vector.shape_cast %62 : vector<1x1x4x4xf32> to vector<4x4xf32>
    %cst_20 = arith.constant dense<0.000000e+00> : vector<128x4xf32>
    %64 = tpu.matmul %61, %63, %cst_20 {dimension_numbers = #tpu.dot_dimension_numbers<[1], [0], [0], [1], [0, 0, 1, 1], [], []>} : vector<128x4xf32>, vector<4x4xf32>, vector<128x4xf32> -> vector<128x4xf32>
    %65 = arith.addf %59, %64 : vector<128x4xf32>
    %66 = vector.extract_strided_slice %27 {offsets = [2, 0, 0], sizes = [8, 16, 4], strides = [1, 1, 1]} : vector<10x18x4xf32> to vector<8x16x4xf32>
    %67 = vector.shape_cast %66 : vector<8x16x4xf32> to vector<128x4xf32>
    %68 = vector.extract_strided_slice %28 {offsets = [2, 0, 0, 0], sizes = [1, 1, 4, 4], strides = [1, 1, 1, 1]} : vector<3x3x4x4xf32> to vector<1x1x4x4xf32>
    %69 = vector.shape_cast %68 : vector<1x1x4x4xf32> to vector<4x4xf32>
    %cst_21 = arith.constant dense<0.000000e+00> : vector<128x4xf32>
    %70 = tpu.matmul %67, %69, %cst_21 {dimension_numbers = #tpu.dot_dimension_numbers<[1], [0], [0], [1], [0, 0, 1, 1], [], []>} : vector<128x4xf32>, vector<4x4xf32>, vector<128x4xf32> -> vector<128x4xf32>
    %71 = arith.addf %65, %70 : vector<128x4xf32>
    %72 = vector.extract_strided_slice %27 {offsets = [2, 1, 0], sizes = [8, 16, 4], strides = [1, 1, 1]} : vector<10x18x4xf32> to vector<8x16x4xf32>
    %73 = vector.shape_cast %72 : vector<8x16x4xf32> to vector<128x4xf32>
    %74 = vector.extract_strided_slice %28 {offsets = [2, 1, 0, 0], sizes = [1, 1, 4, 4], strides = [1, 1, 1, 1]} : vector<3x3x4x4xf32> to vector<1x1x4x4xf32>
    %75 = vector.shape_cast %74 : vector<1x1x4x4xf32> to vector<4x4xf32>
    %cst_22 = arith.constant dense<0.000000e+00> : vector<128x4xf32>
    %76 = tpu.matmul %73, %75, %cst_22 {dimension_numbers = #tpu.dot_dimension_numbers<[1], [0], [0], [1], [0, 0, 1, 1], [], []>} : vector<128x4xf32>, vector<4x4xf32>, vector<128x4xf32> -> vector<128x4xf32>
    %77 = arith.addf %71, %76 : vector<128x4xf32>
    %78 = vector.extract_strided_slice %27 {offsets = [2, 2, 0], sizes = [8, 16, 4], strides = [1, 1, 1]} : vector<10x18x4xf32> to vector<8x16x4xf32>
    %79 = vector.shape_cast %78 : vector<8x16x4xf32> to vector<128x4xf32>
    %80 = vector.extract_strided_slice %28 {offsets = [2, 2, 0, 0], sizes = [1, 1, 4, 4], strides = [1, 1, 1, 1]} : vector<3x3x4x4xf32> to vector<1x1x4x4xf32>
    %81 = vector.shape_cast %80 : vector<1x1x4x4xf32> to vector<4x4xf32>
    %cst_23 = arith.constant dense<0.000000e+00> : vector<128x4xf32>
    %82 = tpu.matmul %79, %81, %cst_23 {dimension_numbers = #tpu.dot_dimension_numbers<[1], [0], [0], [1], [0, 0, 1, 1], [], []>} : vector<128x4xf32>, vector<4x4xf32>, vector<128x4xf32> -> vector<128x4xf32>
    %83 = arith.addf %77, %82 : vector<128x4xf32>
    %c0_24 = arith.constant 0 : index
    %c0_25 = arith.constant 0 : index
    %84 = vector.load %arg4[%c0_24, %c0_25] : memref<1x4xf32, #tpu.memory_space<vmem>>, vector<1x4xf32>
    %85 = vector.broadcast %84 : vector<1x4xf32> to vector<128x4xf32>
    %86 = arith.addf %83, %85 : vector<128x4xf32>
    %87 = vector.shape_cast %86 : vector<128x4xf32> to vector<1x8x16x4xf32>
    %c0_26 = arith.constant 0 : index
    %c0_27 = arith.constant 0 : index
    %c0_28 = arith.constant 0 : index
    %c0_29 = arith.constant 0 : index
    %88 = vector.load %arg7[%c0_26, %c0_27, %c0_28, %c0_29] : memref<1x8x16x4xf32, #tpu.memory_space<vmem>>, vector<1x8x16x4xf32>
    tpu.vector_store %arg7[%c0_26, %c0_27, %c0_28, %c0_29], %87 {strides = array<i32>} : memref<1x8x16x4xf32, #tpu.memory_space<vmem>>, vector<1x8x16x4xf32>,
    return
  }
  func.func @transform_0(%arg0: i32, %arg1: i32) -> (i32, i32, i32, i32) {
    %c0_i32 = arith.constant 0 : i32
    %c0_i32_0 = arith.constant 0 : i32
    %c0_i32_1 = arith.constant 0 : i32
    %c0_i32_2 = arith.constant 0 : i32
    return %arg0, %c0_i32, %c0_i32_0, %c0_i32_1 : i32, i32, i32, i32
  }
  func.func @transform_1(%arg0: i32, %arg1: i32) -> (i32, i32, i32, i32) {
    %c0_i32 = arith.constant 0 : i32
    %c0_i32_0 = arith.constant 0 : i32
    %c0_i32_1 = arith.constant 0 : i32
    %c0_i32_2 = arith.constant 0 : i32
    %c0_i32_3 = arith.constant 0 : i32
    return %c0_i32, %c0_i32_0, %c0_i32_1, %c0_i32_2 : i32, i32, i32, i32
  }
  func.func @transform_2(%arg0: i32, %arg1: i32) -> (i32, i32) {
    %c0_i32 = arith.constant 0 : i32
    %c0_i32_0 = arith.constant 0 : i32
    %c0_i32_1 = arith.constant 0 : i32
    return %c0_i32, %c0_i32_0 : i32, i32
  }
  func.func @transform_3(%arg0: i32, %arg1: i32) -> (i32, i32, i32) {
    %c0_i32 = arith.constant 0 : i32
    %c0_i32_0 = arith.constant 0 : i32
    %c0_i32_1 = arith.constant 0 : i32
    %c0_i32_2 = arith.constant 0 : i32
    return %c0_i32, %c0_i32_0, %c0_i32_1 : i32, i32, i32
  }
  func.func @transform_4(%arg0: i32, %arg1: i32) -> (i32, i32, i32) {
    %c0_i32 = arith.constant 0 : i32
    %c0_i32_0 = arith.constant 0 : i32
    %c0_i32_1 = arith.constant 0 : i32
    %c0_i32_2 = arith.constant 0 : i32
    return %c0_i32, %c0_i32_0, %c0_i32_1 : i32, i32, i32
  }
  func.func @transform_5(%arg0: i32, %arg1: i32) -> (i32, i32, i32, i32) {
    %c0_i32 = arith.constant 0 : i32
    %c0_i32_0 = arith.constant 0 : i32
    %c0_i32_1 = arith.constant 0 : i32
    return %arg0, %arg1, %c0_i32, %c0_i32_0 : i32, i32, i32, i32
  }
}

module attributes {stable_mosaic.version = 11 : i64} {
  func.func @_affine_kernel(%arg0: i32, %arg1: i32, %arg2: memref<1x8x16x4xf32, #tpu.memory_space<vmem>>, %arg3: memref<1x1x1x4xf32, #tpu.memory_space<vmem>>, %arg4: memref<1x1x1x4xf32, #tpu.memory_space<vmem>>, %arg5: memref<1x8x16x4xf32, #tpu.memory_space<vmem>>) attributes {dimension_semantics = [#tpu.dimension_semantics<parallel>, #tpu.dimension_semantics<parallel>], iteration_bounds = array<i64: 2, 2>, scalar_prefetch = 0 : i64, scratch_operands = 0 : i64, tpu.core_type = #tpu.core_type<tc>, window_params = [{transform_indices = @transform_0, window_bounds = array<i64: 1, 8, 16, 4>}, {pipeline_mode = #tpu.pipeline_mode<synchronous>, transform_indices = @transform_1, window_bounds = array<i64: 1, 1, 1, 4>}, {pipeline_mode = #tpu.pipeline_mode<synchronous>, transform_indices = @transform_2, window_bounds = array<i64: 1, 1, 1, 4>}, {transform_indices = @transform_3, window_bounds = array<i64: 1, 8, 16, 4>}]} {
    %c0 = arith.constant 0 : index
    %c0_0 = arith.constant 0 : index
    %c0_1 = arith.constant 0 : index
    %c0_2 = arith.constant 0 : index
    %0 = vector.load %arg2[%c0, %c0_0, %c0_1, %c0_2] : memref<1x8x16x4xf32, #tpu.memory_space<vmem>>, vector<1x8x16x4xf32>
    %c0_3 = arith.constant 0 : index
    %c0_4 = arith.constant 0 : index
    %c0_5 = arith.constant 0 : index
    %c0_6 = arith.constant 0 : index
    %1 = vector.load %arg3[%c0_3, %c0_4, %c0_5, %c0_6] : memref<1x1x1x4xf32, #tpu.memory_space<vmem>>, vector<1x1x1x4xf32>
    %2 = vector.broadcast %1 : vector<1x1x1x4xf32> to vector<1x8x16x4xf32>
    %3 = arith.mulf %0, %2 : vector<1x8x16x4xf32>
    %c0_7 = arith.constant 0 : index
    %c0_8 = arith.constant 0 : index
    %c0_9 = arith.constant 0 : index
    %c0_10 = arith.constant 0 : index
    %4 = vector.load %arg4[%c0_7, %c0_8, %c0_9, %c0_10] : memref<1x1x1x4xf32, #tpu.memory_space<vmem>>, vector<1x1x1x4xf32>
    %5 = vector.broadcast %4 : vector<1x1x1x4xf32> to vector<1x8x16x4xf32>
    %6 = arith.addf %3, %5 : vector<1x8x16x4xf32>
    %c0_11 = arith.constant 0 : index
    %c0_12 = arith.constant 0 : index
    %c0_13 = arith.constant 0 : index
    %c0_14 = arith.constant 0 : index
    %7 = vector.load %arg5[%c0_11, %c0_12, %c0_13, %c0_14] : memref<1x8x16x4xf32, #tpu.memory_space<vmem>>, vector<1x8x16x4xf32>
    tpu.vector_store %arg5[%c0_11, %c0_12, %c0_13, %c0_14], %6 {strides = array<i32>} : memref<1x8x16x4xf32, #tpu.memory_space<vmem>>, vector<1x8x16x4xf32>,
    return
  }
  func.func @transform_0(%arg0: i32, %arg1: i32) -> (i32, i32, i32, i32) {
    %c0_i32 = arith.constant 0 : i32
    %c0_i32_0 = arith.constant 0 : i32
    %c0_i32_1 = arith.constant 0 : i32
    return %arg0, %arg1, %c0_i32, %c0_i32_0 : i32, i32, i32, i32
  }
  func.func @transform_1(%arg0: i32, %arg1: i32) -> (i32, i32, i32, i32) {
    %c0_i32 = arith.constant 0 : i32
    %c0_i32_0 = arith.constant 0 : i32
    %c0_i32_1 = arith.constant 0 : i32
    %c0_i32_2 = arith.constant 0 : i32
    %c0_i32_3 = arith.constant 0 : i32
    return %c0_i32, %c0_i32_0, %c0_i32_1, %c0_i32_2 : i32, i32, i32, i32
  }
  func.func @transform_2(%arg0: i32, %arg1: i32) -> (i32, i32, i32, i32) {
    %c0_i32 = arith.constant 0 : i32
    %c0_i32_0 = arith.constant 0 : i32
    %c0_i32_1 = arith.constant 0 : i32
    %c0_i32_2 = arith.constant 0 : i32
    %c0_i32_3 = arith.constant 0 : i32
    return %c0_i32, %c0_i32_0, %c0_i32_1, %c0_i32_2 : i32, i32, i32, i32
  }
  func.func @transform_3(%arg0: i32, %arg1: i32) -> (i32, i32, i32, i32) {
    %c0_i32 = arith.constant 0 : i32
    %c0_i32_0 = arith.constant 0 : i32
    %c0_i32_1 = arith.constant 0 : i32
    return %arg0, %arg1, %c0_i32, %c0_i32_0 : i32, i32, i32, i32
  }
}

module attributes {stable_mosaic.version = 11 : i64} {
  func.func @kernel(%arg0: i32, %arg1: i32, %arg2: memref<1x18x18x4xf32, #tpu.memory_space<vmem>>, %arg3: memref<3x3x4x4xf32, #tpu.memory_space<vmem>>, %arg4: memref<1x4xf32, #tpu.memory_space<vmem>>, %arg5: memref<1x1x4xf32, #tpu.memory_space<vmem>>, %arg6: memref<1x1x4xf32, #tpu.memory_space<vmem>>, %arg7: memref<1x8x16x4xf32, #tpu.memory_space<vmem>>, %arg8: memref<1x8x16x4xf32, #tpu.memory_space<vmem>>, %arg9: memref<1x1x2x4xf32, #tpu.memory_space<vmem>>) attributes {dimension_semantics = [#tpu.dimension_semantics<parallel>, #tpu.dimension_semantics<parallel>], iteration_bounds = array<i64: 2, 2>, scalar_prefetch = 0 : i64, scratch_operands = 0 : i64, tpu.core_type = #tpu.core_type<tc>, window_params = [{transform_indices = @transform_0, window_bounds = array<i64: 1, 18, 18, 4>}, {pipeline_mode = #tpu.pipeline_mode<synchronous>, transform_indices = @transform_1, window_bounds = array<i64: 3, 3, 4, 4>}, {pipeline_mode = #tpu.pipeline_mode<synchronous>, transform_indices = @transform_2, window_bounds = array<i64: 1, 4>}, {pipeline_mode = #tpu.pipeline_mode<synchronous>, transform_indices = @transform_3, window_bounds = array<i64: 1, 1, 4>}, {pipeline_mode = #tpu.pipeline_mode<synchronous>, transform_indices = @transform_4, window_bounds = array<i64: 1, 1, 4>}, {transform_indices = @transform_5, window_bounds = array<i64: 1, 8, 16, 4>}, {transform_indices = @transform_6, window_bounds = array<i64: 1, 8, 16, 4>}, {transform_indices = @transform_7, window_bounds = array<i64: 1, 1, 2, 4>}]} {
    %c8_i32 = arith.constant 8 : i32
    %0 = arith.muli %arg1, %c8_i32 : i32
    %1 = tpu.assume_multiple %0, 8 : i32
    %c0 = arith.constant 0 : index
    %2 = arith.index_cast %1 : i32 to index
    %c0_0 = arith.constant 0 : index
    %c0_1 = arith.constant 0 : index
    %3 = vector.load %arg2[%c0, %2, %c0_0, %c0_1] : memref<1x18x18x4xf32, #tpu.memory_space<vmem>>, vector<1x10x18x4xf32>
    %4 = vector.shape_cast %3 : vector<1x10x18x4xf32> to vector<10x18x4xf32>
    %c0_2 = arith.constant 0 : index
    %c0_3 = arith.constant 0 : index
    %c0_4 = arith.constant 0 : index
    %5 = vector.load %arg5[%c0_2, %c0_3, %c0_4] : memref<1x1x4xf32, #tpu.memory_space<vmem>>, vector<1x1x4xf32>
    %6 = vector.broadcast %5 : vector<1x1x4xf32> to vector<10x18x4xf32>
    %7 = arith.mulf %4, %6 : vector<10x18x4xf32>
    %c0_5 = arith.constant 0 : index
    %c0_6 = arith.constant 0 : index
    %c0_7 = arith.constant 0 : index
    %8 = vector.load %arg6[%c0_5, %c0_6, %c0_7] : memref<1x1x4xf32, #tpu.memory_space<vmem>>, vector<1x1x4xf32>
    %9 = vector.broadcast %8 : vector<1x1x4xf32> to vector<10x18x4xf32>
    %10 = arith.addf %7, %9 : vector<10x18x4xf32>
    %11 = tpu.iota {dimensions = array<i32: 0>} : vector<10x18x4xi32>
    %12 = vector.broadcast %1 : i32 to vector<10x18x4xi32>
    %13 = arith.addi %11, %12 : vector<10x18x4xi32>
    %14 = tpu.iota {dimensions = array<i32: 1>} : vector<10x18x4xi32>
    %c1_i32 = arith.constant 1 : i32
    %15 = vector.broadcast %c1_i32 : i32 to vector<10x18x4xi32>
    %16 = arith.cmpi sge, %13, %15 : vector<10x18x4xi32>
    %c16_i32 = arith.constant 16 : i32
    %17 = vector.broadcast %c16_i32 : i32 to vector<10x18x4xi32>
    %18 = arith.cmpi sle, %13, %17 : vector<10x18x4xi32>
    %19 = arith.andi %16, %18 : vector<10x18x4xi1>
    %c1_i32_8 = arith.constant 1 : i32
    %20 = vector.broadcast %c1_i32_8 : i32 to vector<10x18x4xi32>
    %21 = arith.cmpi sge, %14, %20 : vector<10x18x4xi32>
    %22 = arith.andi %19, %21 : vector<10x18x4xi1>
    %c16_i32_9 = arith.constant 16 : i32
    %23 = vector.broadcast %c16_i32_9 : i32 to vector<10x18x4xi32>
    %24 = arith.cmpi sle, %14, %23 : vector<10x18x4xi32>
    %25 = arith.andi %22, %24 : vector<10x18x4xi1>
    %cst = arith.constant 0.000000e+00 : f32
    %26 = vector.broadcast %cst : f32 to vector<10x18x4xf32>
    %27 = arith.select %25, %10, %26 : vector<10x18x4xi1>, vector<10x18x4xf32>
    %c0_10 = arith.constant 0 : index
    %c0_11 = arith.constant 0 : index
    %c0_12 = arith.constant 0 : index
    %c0_13 = arith.constant 0 : index
    %28 = vector.load %arg3[%c0_10, %c0_11, %c0_12, %c0_13] : memref<3x3x4x4xf32, #tpu.memory_space<vmem>>, vector<3x3x4x4xf32>
    %cst_14 = arith.constant 0.000000e+00 : f32
    %29 = vector.broadcast %cst_14 : f32 to vector<128x4xf32>
    %30 = vector.extract_strided_slice %27 {offsets = [0, 0, 0], sizes = [8, 16, 4], strides = [1, 1, 1]} : vector<10x18x4xf32> to vector<8x16x4xf32>
    %31 = vector.shape_cast %30 : vector<8x16x4xf32> to vector<128x4xf32>
    %32 = vector.extract_strided_slice %28 {offsets = [0, 0, 0, 0], sizes = [1, 1, 4, 4], strides = [1, 1, 1, 1]} : vector<3x3x4x4xf32> to vector<1x1x4x4xf32>
    %33 = vector.shape_cast %32 : vector<1x1x4x4xf32> to vector<4x4xf32>
    %cst_15 = arith.constant dense<0.000000e+00> : vector<128x4xf32>
    %34 = tpu.matmul %31, %33, %cst_15 {dimension_numbers = #tpu.dot_dimension_numbers<[1], [0], [0], [1], [0, 0, 1, 1], [], []>} : vector<128x4xf32>, vector<4x4xf32>, vector<128x4xf32> -> vector<128x4xf32>
    %35 = arith.addf %29, %34 : vector<128x4xf32>
    %36 = vector.extract_strided_slice %27 {offsets = [0, 1, 0], sizes = [8, 16, 4], strides = [1, 1, 1]} : vector<10x18x4xf32> to vector<8x16x4xf32>
    %37 = vector.shape_cast %36 : vector<8x16x4xf32> to vector<128x4xf32>
    %38 = vector.extract_strided_slice %28 {offsets = [0, 1, 0, 0], sizes = [1, 1, 4, 4], strides = [1, 1, 1, 1]} : vector<3x3x4x4xf32> to vector<1x1x4x4xf32>
    %39 = vector.shape_cast %38 : vector<1x1x4x4xf32> to vector<4x4xf32>
    %cst_16 = arith.constant dense<0.000000e+00> : vector<128x4xf32>
    %40 = tpu.matmul %37, %39, %cst_16 {dimension_numbers = #tpu.dot_dimension_numbers<[1], [0], [0], [1], [0, 0, 1, 1], [], []>} : vector<128x4xf32>, vector<4x4xf32>, vector<128x4xf32> -> vector<128x4xf32>
    %41 = arith.addf %35, %40 : vector<128x4xf32>
    %42 = vector.extract_strided_slice %27 {offsets = [0, 2, 0], sizes = [8, 16, 4], strides = [1, 1, 1]} : vector<10x18x4xf32> to vector<8x16x4xf32>
    %43 = vector.shape_cast %42 : vector<8x16x4xf32> to vector<128x4xf32>
    %44 = vector.extract_strided_slice %28 {offsets = [0, 2, 0, 0], sizes = [1, 1, 4, 4], strides = [1, 1, 1, 1]} : vector<3x3x4x4xf32> to vector<1x1x4x4xf32>
    %45 = vector.shape_cast %44 : vector<1x1x4x4xf32> to vector<4x4xf32>
    %cst_17 = arith.constant dense<0.000000e+00> : vector<128x4xf32>
    %46 = tpu.matmul %43, %45, %cst_17 {dimension_numbers = #tpu.dot_dimension_numbers<[1], [0], [0], [1], [0, 0, 1, 1], [], []>} : vector<128x4xf32>, vector<4x4xf32>, vector<128x4xf32> -> vector<128x4xf32>
    %47 = arith.addf %41, %46 : vector<128x4xf32>
    %48 = vector.extract_strided_slice %27 {offsets = [1, 0, 0], sizes = [8, 16, 4], strides = [1, 1, 1]} : vector<10x18x4xf32> to vector<8x16x4xf32>
    %49 = vector.shape_cast %48 : vector<8x16x4xf32> to vector<128x4xf32>
    %50 = vector.extract_strided_slice %28 {offsets = [1, 0, 0, 0], sizes = [1, 1, 4, 4], strides = [1, 1, 1, 1]} : vector<3x3x4x4xf32> to vector<1x1x4x4xf32>
    %51 = vector.shape_cast %50 : vector<1x1x4x4xf32> to vector<4x4xf32>
    %cst_18 = arith.constant dense<0.000000e+00> : vector<128x4xf32>
    %52 = tpu.matmul %49, %51, %cst_18 {dimension_numbers = #tpu.dot_dimension_numbers<[1], [0], [0], [1], [0, 0, 1, 1], [], []>} : vector<128x4xf32>, vector<4x4xf32>, vector<128x4xf32> -> vector<128x4xf32>
    %53 = arith.addf %47, %52 : vector<128x4xf32>
    %54 = vector.extract_strided_slice %27 {offsets = [1, 1, 0], sizes = [8, 16, 4], strides = [1, 1, 1]} : vector<10x18x4xf32> to vector<8x16x4xf32>
    %55 = vector.shape_cast %54 : vector<8x16x4xf32> to vector<128x4xf32>
    %56 = vector.extract_strided_slice %28 {offsets = [1, 1, 0, 0], sizes = [1, 1, 4, 4], strides = [1, 1, 1, 1]} : vector<3x3x4x4xf32> to vector<1x1x4x4xf32>
    %57 = vector.shape_cast %56 : vector<1x1x4x4xf32> to vector<4x4xf32>
    %cst_19 = arith.constant dense<0.000000e+00> : vector<128x4xf32>
    %58 = tpu.matmul %55, %57, %cst_19 {dimension_numbers = #tpu.dot_dimension_numbers<[1], [0], [0], [1], [0, 0, 1, 1], [], []>} : vector<128x4xf32>, vector<4x4xf32>, vector<128x4xf32> -> vector<128x4xf32>
    %59 = arith.addf %53, %58 : vector<128x4xf32>
    %60 = vector.extract_strided_slice %27 {offsets = [1, 2, 0], sizes = [8, 16, 4], strides = [1, 1, 1]} : vector<10x18x4xf32> to vector<8x16x4xf32>
    %61 = vector.shape_cast %60 : vector<8x16x4xf32> to vector<128x4xf32>
    %62 = vector.extract_strided_slice %28 {offsets = [1, 2, 0, 0], sizes = [1, 1, 4, 4], strides = [1, 1, 1, 1]} : vector<3x3x4x4xf32> to vector<1x1x4x4xf32>
    %63 = vector.shape_cast %62 : vector<1x1x4x4xf32> to vector<4x4xf32>
    %cst_20 = arith.constant dense<0.000000e+00> : vector<128x4xf32>
    %64 = tpu.matmul %61, %63, %cst_20 {dimension_numbers = #tpu.dot_dimension_numbers<[1], [0], [0], [1], [0, 0, 1, 1], [], []>} : vector<128x4xf32>, vector<4x4xf32>, vector<128x4xf32> -> vector<128x4xf32>
    %65 = arith.addf %59, %64 : vector<128x4xf32>
    %66 = vector.extract_strided_slice %27 {offsets = [2, 0, 0], sizes = [8, 16, 4], strides = [1, 1, 1]} : vector<10x18x4xf32> to vector<8x16x4xf32>
    %67 = vector.shape_cast %66 : vector<8x16x4xf32> to vector<128x4xf32>
    %68 = vector.extract_strided_slice %28 {offsets = [2, 0, 0, 0], sizes = [1, 1, 4, 4], strides = [1, 1, 1, 1]} : vector<3x3x4x4xf32> to vector<1x1x4x4xf32>
    %69 = vector.shape_cast %68 : vector<1x1x4x4xf32> to vector<4x4xf32>
    %cst_21 = arith.constant dense<0.000000e+00> : vector<128x4xf32>
    %70 = tpu.matmul %67, %69, %cst_21 {dimension_numbers = #tpu.dot_dimension_numbers<[1], [0], [0], [1], [0, 0, 1, 1], [], []>} : vector<128x4xf32>, vector<4x4xf32>, vector<128x4xf32> -> vector<128x4xf32>
    %71 = arith.addf %65, %70 : vector<128x4xf32>
    %72 = vector.extract_strided_slice %27 {offsets = [2, 1, 0], sizes = [8, 16, 4], strides = [1, 1, 1]} : vector<10x18x4xf32> to vector<8x16x4xf32>
    %73 = vector.shape_cast %72 : vector<8x16x4xf32> to vector<128x4xf32>
    %74 = vector.extract_strided_slice %28 {offsets = [2, 1, 0, 0], sizes = [1, 1, 4, 4], strides = [1, 1, 1, 1]} : vector<3x3x4x4xf32> to vector<1x1x4x4xf32>
    %75 = vector.shape_cast %74 : vector<1x1x4x4xf32> to vector<4x4xf32>
    %cst_22 = arith.constant dense<0.000000e+00> : vector<128x4xf32>
    %76 = tpu.matmul %73, %75, %cst_22 {dimension_numbers = #tpu.dot_dimension_numbers<[1], [0], [0], [1], [0, 0, 1, 1], [], []>} : vector<128x4xf32>, vector<4x4xf32>, vector<128x4xf32> -> vector<128x4xf32>
    %77 = arith.addf %71, %76 : vector<128x4xf32>
    %78 = vector.extract_strided_slice %27 {offsets = [2, 2, 0], sizes = [8, 16, 4], strides = [1, 1, 1]} : vector<10x18x4xf32> to vector<8x16x4xf32>
    %79 = vector.shape_cast %78 : vector<8x16x4xf32> to vector<128x4xf32>
    %80 = vector.extract_strided_slice %28 {offsets = [2, 2, 0, 0], sizes = [1, 1, 4, 4], strides = [1, 1, 1, 1]} : vector<3x3x4x4xf32> to vector<1x1x4x4xf32>
    %81 = vector.shape_cast %80 : vector<1x1x4x4xf32> to vector<4x4xf32>
    %cst_23 = arith.constant dense<0.000000e+00> : vector<128x4xf32>
    %82 = tpu.matmul %79, %81, %cst_23 {dimension_numbers = #tpu.dot_dimension_numbers<[1], [0], [0], [1], [0, 0, 1, 1], [], []>} : vector<128x4xf32>, vector<4x4xf32>, vector<128x4xf32> -> vector<128x4xf32>
    %83 = arith.addf %77, %82 : vector<128x4xf32>
    %c0_24 = arith.constant 0 : index
    %c0_25 = arith.constant 0 : index
    %84 = vector.load %arg4[%c0_24, %c0_25] : memref<1x4xf32, #tpu.memory_space<vmem>>, vector<1x4xf32>
    %85 = vector.broadcast %84 : vector<1x4xf32> to vector<128x4xf32>
    %86 = arith.addf %83, %85 : vector<128x4xf32>
    %c0_26 = arith.constant 0 : index
    %c0_27 = arith.constant 0 : index
    %c0_28 = arith.constant 0 : index
    %c0_29 = arith.constant 0 : index
    %87 = vector.load %arg7[%c0_26, %c0_27, %c0_28, %c0_29] : memref<1x8x16x4xf32, #tpu.memory_space<vmem>>, vector<1x8x16x4xf32>
    %88 = vector.shape_cast %87 : vector<1x8x16x4xf32> to vector<8x16x4xf32>
    %89 = vector.shape_cast %88 : vector<8x16x4xf32> to vector<128x4xf32>
    %90 = arith.addf %86, %89 : vector<128x4xf32>
    %cst_30 = arith.constant 0.000000e+00 : f32
    %91 = vector.broadcast %cst_30 : f32 to vector<128x4xf32>
    %92 = arith.maximumf %90, %91 : vector<128x4xf32>
    %93 = vector.shape_cast %92 : vector<128x4xf32> to vector<1x8x16x4xf32>
    %c0_31 = arith.constant 0 : index
    %c0_32 = arith.constant 0 : index
    %c0_33 = arith.constant 0 : index
    %c0_34 = arith.constant 0 : index
    %94 = vector.load %arg8[%c0_31, %c0_32, %c0_33, %c0_34] : memref<1x8x16x4xf32, #tpu.memory_space<vmem>>, vector<1x8x16x4xf32>
    tpu.vector_store %arg8[%c0_31, %c0_32, %c0_33, %c0_34], %93 {strides = array<i32>} : memref<1x8x16x4xf32, #tpu.memory_space<vmem>>, vector<1x8x16x4xf32>,
    %cst_35 = arith.constant dense<0.000000e+00> : vector<4xf32>
    %95 = vector.multi_reduction <add>, %92, %cst_35 [0] : vector<128x4xf32> to vector<4xf32>
    %96 = vector.shape_cast %95 : vector<4xf32> to vector<1x4xf32>
    %97 = arith.mulf %92, %92 : vector<128x4xf32>
    %cst_36 = arith.constant dense<0.000000e+00> : vector<4xf32>
    %98 = vector.multi_reduction <add>, %97, %cst_36 [0] : vector<128x4xf32> to vector<4xf32>
    %99 = vector.shape_cast %98 : vector<4xf32> to vector<1x4xf32>
    %100 = tpu.concatenate %96, %99 in 0 : vector<1x4xf32>, vector<1x4xf32> -> vector<2x4xf32>
    %101 = vector.shape_cast %100 : vector<2x4xf32> to vector<1x1x2x4xf32>
    %c0_37 = arith.constant 0 : index
    %c0_38 = arith.constant 0 : index
    %c0_39 = arith.constant 0 : index
    %c0_40 = arith.constant 0 : index
    %102 = vector.load %arg9[%c0_37, %c0_38, %c0_39, %c0_40] : memref<1x1x2x4xf32, #tpu.memory_space<vmem>>, vector<1x1x2x4xf32>
    tpu.vector_store %arg9[%c0_37, %c0_38, %c0_39, %c0_40], %101 {strides = array<i32>} : memref<1x1x2x4xf32, #tpu.memory_space<vmem>>, vector<1x1x2x4xf32>,
    return
  }
  func.func @transform_0(%arg0: i32, %arg1: i32) -> (i32, i32, i32, i32) {
    %c0_i32 = arith.constant 0 : i32
    %c0_i32_0 = arith.constant 0 : i32
    %c0_i32_1 = arith.constant 0 : i32
    %c0_i32_2 = arith.constant 0 : i32
    return %arg0, %c0_i32, %c0_i32_0, %c0_i32_1 : i32, i32, i32, i32
  }
  func.func @transform_1(%arg0: i32, %arg1: i32) -> (i32, i32, i32, i32) {
    %c0_i32 = arith.constant 0 : i32
    %c0_i32_0 = arith.constant 0 : i32
    %c0_i32_1 = arith.constant 0 : i32
    %c0_i32_2 = arith.constant 0 : i32
    %c0_i32_3 = arith.constant 0 : i32
    return %c0_i32, %c0_i32_0, %c0_i32_1, %c0_i32_2 : i32, i32, i32, i32
  }
  func.func @transform_2(%arg0: i32, %arg1: i32) -> (i32, i32) {
    %c0_i32 = arith.constant 0 : i32
    %c0_i32_0 = arith.constant 0 : i32
    %c0_i32_1 = arith.constant 0 : i32
    return %c0_i32, %c0_i32_0 : i32, i32
  }
  func.func @transform_3(%arg0: i32, %arg1: i32) -> (i32, i32, i32) {
    %c0_i32 = arith.constant 0 : i32
    %c0_i32_0 = arith.constant 0 : i32
    %c0_i32_1 = arith.constant 0 : i32
    %c0_i32_2 = arith.constant 0 : i32
    return %c0_i32, %c0_i32_0, %c0_i32_1 : i32, i32, i32
  }
  func.func @transform_4(%arg0: i32, %arg1: i32) -> (i32, i32, i32) {
    %c0_i32 = arith.constant 0 : i32
    %c0_i32_0 = arith.constant 0 : i32
    %c0_i32_1 = arith.constant 0 : i32
    %c0_i32_2 = arith.constant 0 : i32
    return %c0_i32, %c0_i32_0, %c0_i32_1 : i32, i32, i32
  }
  func.func @transform_5(%arg0: i32, %arg1: i32) -> (i32, i32, i32, i32) {
    %c0_i32 = arith.constant 0 : i32
    %c0_i32_0 = arith.constant 0 : i32
    %c0_i32_1 = arith.constant 0 : i32
    return %arg0, %arg1, %c0_i32, %c0_i32_0 : i32, i32, i32, i32
  }
  func.func @transform_6(%arg0: i32, %arg1: i32) -> (i32, i32, i32, i32) {
    %c0_i32 = arith.constant 0 : i32
    %c0_i32_0 = arith.constant 0 : i32
    %c0_i32_1 = arith.constant 0 : i32
    return %arg0, %arg1, %c0_i32, %c0_i32_0 : i32, i32, i32, i32
  }
  func.func @transform_7(%arg0: i32, %arg1: i32) -> (i32, i32, i32, i32) {
    %c0_i32 = arith.constant 0 : i32
    %c0_i32_0 = arith.constant 0 : i32
    %c0_i32_1 = arith.constant 0 : i32
    return %arg0, %arg1, %c0_i32, %c0_i32_0 : i32, i32, i32, i32
  }
}

</mosaic_0001>

<llo_original>
// kernel: resblock_forward.13
$region0: #{resblock_forward.13}
  #allocation0 [shape = 'u32[]', space=smem, size = 0x4, offset = 0x4, fixed_abs, tag = 'smem constant byte address 0x4 - core index']
  #allocation1 [shape = 'u32[72,128]{1,0:T(1,128)}', space=vmem, size = 0x9000, scoped, tag = 'internal scratch']
  %s0 = inlined_call_operand.vmem [shape: f32[2,16,16,4], index: 0, kind: input, shape index: {}]
  %s1 = inlined_call_operand.vmem [shape: f32[1,1,1,4], index: 1, kind: input, shape index: {}]
  %s2 = inlined_call_operand.vmem [shape: f32[1,1,1,4], index: 2, kind: input, shape index: {}]
  %s3 = inlined_call_operand.vmem [shape: f32[2,16,16,4], index: 3, kind: output, shape index: {}]
  %s4 = sld [smem:[#allocation0]]
  $region45: #{resblock_forward.13} parent=0
    _
  %s6 = ssub.s32 1, %s4
  %s7 = scalar_select 0, %s6, %s4
  loop: start=0, step=1, limit=6
  $region2: #{resblock_forward.13} parent=0 // loop_pre_header
    _
  $region3: #{resblock_forward.13} parent=0 // loop_header
    %s9 = sphi 0, %s13
    %p10 = scmp.ge.s32.totalorder %s9, 6
    %s16 = sphi 0, %s28
    %s17 = sphi 0, %s24
    %s18 = sphi 0, %s16
    %s19 = sphi 0, %s17
    %s20 = sphi 0, %s18
    %s21 = sphi 0, %s19
    %s33 = sphi 0, %s35
    %s36 = sphi 0, %s33
    %s37 = sphi 0, %s36
    %s53 = sphi 0, %s37
    %s57 = sphi 0, %s57
    %s59 = sphi 0, %s57
    %s60 = sphi 0, %s59
    %s74 = sphi 0, %s60
    %s78 = sphi 0, %s78
    %s80 = sphi 0, %s78
    %s81 = sphi 0, %s80
    %s95 = sphi 0, %s81
    %s103 = sphi 0, %s105
    %s106 = sphi 0, %s103
    %s107 = sphi 0, %s106
    %s123 = sphi 0, %s107
  $region4: #{resblock_forward.13} parent=0 // loop_header_branch
    %12 = sbr.rel (%p10) target = $region8
  $region5: #{resblock_forward.13} parent=0 // loop_body
    %s14 = ssub.s32 %s9, 1
    %s15 = ssub.s32 %s9, 2
    %s22 = sadd.s32 1, %s17
    %p23 = scmp.ge.s32.totalorder %s22, 2
    %s24 = scalar_select %p23, 0, %s22
    %s25 = sadd.s32 1, %s16
    %s26 = scalar_select %p23, %s25, %s16
    %p27 = scmp.ge.s32.totalorder %s26, 2
    %s28 = scalar_select %p27, 0, %s26
    %s29 = ssub.s32 %s16, %s28
    %s30 = ssub.s32 %s17, %s24
    %s31 = sor.u32 %s29, %s30
    %p32 = scmp.eq.s32.totalorder %s31, 0
    %s34 = sadd.s32 %s33, 1
    %s35 = scalar_select %p32, %s33, %s34
    %p38 = pneg %p32
    %p39 = scmp.eq.s32.totalorder %s9, 3
    %p40 = por %p38, %p39
    %p41 = scmp.ne.s32.totalorder %s33, %s36
    %p42 = scmp.eq.s32.totalorder %s9, 0
    %p43 = por %p41, %p42
    %p44 = scmp.ne.s32.totalorder %s33, %s36
    %p45 = scmp.eq.s32.totalorder %s14, 3
    %p46 = por %p44, %p45
    %p47 = scmp.ne.s32.totalorder %s36, %s37
    %p48 = scmp.eq.s32.totalorder %s14, 0
    %p49 = por %p47, %p48
    %p50 = scmp.ne.s32.totalorder %s36, %s37
    %p51 = scmp.eq.s32.totalorder %s15, 3
    %p52 = por %p50, %p51
    %p54 = scmp.ne.s32.totalorder %s37, %s53
    %p55 = scmp.eq.s32.totalorder %s15, 0
    %p56 = por %p54, %p55
    %s58 = sadd.s32 %s57, 1
    %p61 = scmp.eq.s32.totalorder %s9, 3
    %p62 = scmp.ne.s32.totalorder %s57, %s59
    %p63 = scmp.eq.s32.totalorder %s9, 0
    %p64 = por %p62, %p63
    %p65 = scmp.ne.s32.totalorder %s57, %s59
    %p66 = scmp.eq.s32.totalorder %s14, 3
    %p67 = por %p65, %p66
    %p68 = scmp.ne.s32.totalorder %s59, %s60
    %p69 = scmp.eq.s32.totalorder %s14, 0
    %p70 = por %p68, %p69
    %p71 = scmp.ne.s32.totalorder %s59, %s60
    %p72 = scmp.eq.s32.totalorder %s15, 3
    %p73 = por %p71, %p72
    %p75 = scmp.ne.s32.totalorder %s60, %s74
    %p76 = scmp.eq.s32.totalorder %s15, 0
    %p77 = por %p75, %p76
    %s79 = sadd.s32 %s78, 1
    %p82 = scmp.eq.s32.totalorder %s9, 3
    %p83 = scmp.ne.s32.totalorder %s78, %s80
    %p84 = scmp.eq.s32.totalorder %s9, 0
    %p85 = por %p83, %p84
    %p86 = scmp.ne.s32.totalorder %s78, %s80
    %p87 = scmp.eq.s32.totalorder %s14, 3
    %p88 = por %p86, %p87
    %p89 = scmp.ne.s32.totalorder %s80, %s81
    %p90 = scmp.eq.s32.totalorder %s14, 0
    %p91 = por %p89, %p90
    %p92 = scmp.ne.s32.totalorder %s80, %s81
    %p93 = scmp.eq.s32.totalorder %s15, 3
    %p94 = por %p92, %p93
    %p96 = scmp.ne.s32.totalorder %s81, %s95
    %p97 = scmp.eq.s32.totalorder %s15, 0
    %p98 = por %p96, %p97
    %s99 = ssub.s32 %s16, %s28
    %s100 = ssub.s32 %s17, %s24
    %s101 = sor.u32 %s99, %s100
    %p102 = scmp.eq.s32.totalorder %s101, 0
    %s104 = sadd.s32 %s103, 1
    %s105 = scalar_select %p102, %s103, %s104
    %p108 = pneg %p102
    %p109 = scmp.eq.s32.totalorder %s9, 3
    %p110 = por %p108, %p109
    %p111 = scmp.ne.s32.totalorder %s103, %s106
    %p112 = scmp.eq.s32.totalorder %s9, 0
    %p113 = por %p111, %p112
    %p114 = scmp.ne.s32.totalorder %s103, %s106
    %p115 = scmp.eq.s32.totalorder %s14, 3
    %p116 = por %p114, %p115
    %p117 = scmp.ne.s32.totalorder %s106, %s107
    %p118 = scmp.eq.s32.totalorder %s14, 0
    %p119 = por %p117, %p118
    %p120 = scmp.ne.s32.totalorder %s106, %s107
    %p121 = scmp.eq.s32.totalorder %s15, 3
    %p122 = por %p120, %p121
    %p124 = scmp.ne.s32.totalorder %s107, %s123
    %p125 = scmp.eq.s32.totalorder %s15, 0
    %p126 = por %p124, %p125
    %p127 = scmp.le.s32.totalorder 1, %s9
    %p128 = scmp.lt.s32.totalorder %s9, 5
    %p129 = pnand %p127, %p128
    %p130 = pneg %p129
    // Predicated region
    $region9: #{resblock_forward.13} parent=5 // pred_check
      _
    $region10: #{resblock_forward.13} parent=5 // pred_check_branch
      %132 = sbr.rel (%p129) target = $region12
    $region11: #{resblock_forward.13} parent=5 // pred_region
      %s133 = ssub.s32 %s9, 1
      // Predicated region
      $region13: #{resblock_forward.13} parent=11 // pred_check
        %p134 = pneg %p70
      $region14: #{resblock_forward.13} parent=11 // pred_check_branch
        %136 = sbr.rel (%p134) target = $region16
      $region15: #{resblock_forward.13} parent=11 // pred_region
        _
      $region16: #{resblock_forward.13} parent=11 // pred_fallthru
        _
      // Predicated region
      $region17: #{resblock_forward.13} parent=11 // pred_check
        %p137 = pneg %p91
      $region18: #{resblock_forward.13} parent=11 // pred_check_branch
        %139 = sbr.rel (%p137) target = $region20
      $region19: #{resblock_forward.13} parent=11 // pred_region
        _
      $region20: #{resblock_forward.13} parent=11 // pred_fallthru
        _
    $region12: #{resblock_forward.13} parent=5 // pred_fallthru
      _
    %p140 = scmp.lt.s32.totalorder %s9, 4
    // Predicated region
    $region21: #{resblock_forward.13} parent=5 // pred_check
      %p141 = pneg %p140
    $region22: #{resblock_forward.13} parent=5 // pred_check_branch
      %143 = sbr.rel (%p141) target = $region24
    $region23: #{resblock_forward.13} parent=5 // pred_region
      // Predicated region
      $region25: #{resblock_forward.13} parent=23 // pred_check
        %p144 = pneg %p43
      $region26: #{resblock_forward.13} parent=23 // pred_check_branch
        %146 = sbr.rel (%p144) target = $region28
      $region27: #{resblock_forward.13} parent=23 // pred_region
        %s147 = smul.u32 8, %s17
        %p148 = scmp.lt.s32.totalorder %s16, 1
        %s149 = scalar_select %p148, %s16, 1
        %p150 = scmp.lt.s32.totalorder %s147, 15
        %s151 = scalar_select %p150, %s147, 15
        %s152 = smul.addr %s151, 2
        %s153 = smul.addr %s149, 32
        %s154 = sadd.s32 %s152, %s153
        %s155 = smul.addr %s154, 8
        %s156 = scalar_lea.vmem %s0, %s155
        %s157 = smul.u32 8, %s17
      $region28: #{resblock_forward.13} parent=23 // pred_fallthru
        _
    $region24: #{resblock_forward.13} parent=5 // pred_fallthru
      _
    %p158 = scmp.le.s32.totalorder 1, %s9
    %p159 = scmp.lt.s32.totalorder %s9, 5
    %p160 = pnand %p158, %p159
    %p161 = pneg %p160
    // Predicated region
    $region29: #{resblock_forward.13} parent=5 // pred_check
      _
    $region30: #{resblock_forward.13} parent=5 // pred_check_branch
      %163 = sbr.rel (%p160) target = $region32
    $region31: #{resblock_forward.13} parent=5 // pred_region
      %s164 = ssub.s32 %s9, 1
      %s165 = smul.u32 8, %s19
      %p166 = scmp.lt.s32.totalorder %s18, 1
      %s167 = scalar_select %p166, %s18, 1
      %p168 = scmp.lt.s32.totalorder %s165, 15
      %s169 = scalar_select %p168, %s165, 15
      %s170 = smul.addr %s169, 2
      %s171 = smul.addr %s167, 32
      %s172 = sadd.s32 %s170, %s171
      %s173 = smul.addr %s172, 8
      %s174 = scalar_lea.vmem %s0, %s173
      %p175 = pneg %p49
      %p176 = pneg %p46
      %p177 = pneg %p70
      %p178 = pneg %p67
      %p179 = pneg %p91
      %p180 = pneg %p88
      %p181 = pneg %p119
      %p182 = pneg %p116
      %s183 = smul.u32 8, %s19
      %p184 = scmp.lt.s32.totalorder %s18, 1
      %s185 = scalar_select %p184, %s18, 1
      %p186 = scmp.lt.s32.totalorder %s183, 15
      %s187 = scalar_select %p186, %s183, 15
      %s188 = smul.addr %s187, 2
      %s189 = smul.addr %s185, 32
      %s190 = sadd.s32 %s188, %s189
      %s191 = smul.addr %s190, 8
      %s192 = scalar_lea.vmem %s3, %s191
      %s193 = smul.u32 8, %s19
      %p194 = scmp.lt.s32.totalorder %s18, 1
      %s195 = scalar_select %p194, %s18, 1
      %p196 = scmp.lt.s32.totalorder %s193, 15
      %s197 = scalar_select %p196, %s193, 15
      %s198 = smul.addr %s197, 2
      %s199 = smul.addr %s195, 32
      %s200 = sadd.s32 %s198, %s199
      %s201 = smul.addr %s200, 8
      %s202 = scalar_lea.vmem %s0, %s201
      %s203 = smul.u32 8, %s19
      %s204 = smul.u32 8, %s19
      %p205 = scmp.lt.s32.totalorder %s18, 1
      %s206 = scalar_select %p205, %s18, 1
      %p207 = scmp.lt.s32.totalorder %s204, 15
      %s208 = scalar_select %p207, %s204, 15
      %s209 = smul.addr %s208, 2
      %s210 = smul.addr %s206, 32
      %s211 = sadd.s32 %s209, %s210
      %s212 = smul.addr %s211, 8
      %s213 = scalar_lea.vmem %s3, %s212
      %s214 = smul.u32 8, %s19
      %v215 = vld [vmem:[%s202] sm:$0xff]
      %v216 = vld [vmem:[%s202 + $0x8] sm:$0xff]
      %v217 = vld [vmem:[%s202 + $0x10] sm:$0xff]
      %v218 = vld [vmem:[%s202 + $0x18] sm:$0xff]
      %v219 = vld [vmem:[%s202 + $0x20] sm:$0xff]
      %v220 = vld [vmem:[%s202 + $0x28] sm:$0xff]
      %v221 = vld [vmem:[%s202 + $0x30] sm:$0xff]
      %v222 = vld [vmem:[%s202 + $0x38] sm:$0xff]
      %v223 = vld [vmem:[%s202 + $0x40] sm:$0xff]
      %v224 = vld [vmem:[%s202 + $0x48] sm:$0xff]
      %v225 = vld [vmem:[%s202 + $0x50] sm:$0xff]
      %v226 = vld [vmem:[%s202 + $0x58] sm:$0xff]
      %v227 = vld [vmem:[%s202 + $0x60] sm:$0xff]
      %v228 = vld [vmem:[%s202 + $0x68] sm:$0xff]
      %v229 = vld [vmem:[%s202 + $0x70] sm:$0xff]
      %v230 = vld [vmem:[%s202 + $0x78] sm:$0xff]
      %v231 = vld [vmem:[%s1] sm:$0x1]
      %v233 = vperm.slane %v231, 0
      %v235 = vmul.f32 %v215, %v233
      %v236 = vmul.f32 %v216, %v233
      %v237 = vmul.f32 %v217, %v233
      %v238 = vmul.f32 %v218, %v233
      %v239 = vmul.f32 %v219, %v233
      %v240 = vmul.f32 %v220, %v233
      %v241 = vmul.f32 %v221, %v233
      %v242 = vmul.f32 %v222, %v233
      %v243 = vmul.f32 %v223, %v233
      %v244 = vmul.f32 %v224, %v233
      %v245 = vmul.f32 %v225, %v233
      %v246 = vmul.f32 %v226, %v233
      %v247 = vmul.f32 %v227, %v233
      %v248 = vmul.f32 %v228, %v233
      %v249 = vmul.f32 %v229, %v233
      %v250 = vmul.f32 %v230, %v233
      %v251 = vld [vmem:[%s2] sm:$0x1]
      %v253 = vperm.slane %v251, 0
      %v255 = vadd.f32 %v235, %v253
      %v256 = vadd.f32 %v236, %v253
      %v257 = vadd.f32 %v237, %v253
      %v258 = vadd.f32 %v238, %v253
      %v259 = vadd.f32 %v239, %v253
      %v260 = vadd.f32 %v240, %v253
      %v261 = vadd.f32 %v241, %v253
      %v262 = vadd.f32 %v242, %v253
      %v263 = vadd.f32 %v243, %v253
      %v264 = vadd.f32 %v244, %v253
      %v265 = vadd.f32 %v245, %v253
      %v266 = vadd.f32 %v246, %v253
      %v267 = vadd.f32 %v247, %v253
      %v268 = vadd.f32 %v248, %v253
      %v269 = vadd.f32 %v249, %v253
      %v270 = vadd.f32 %v250, %v253
      %vm271 = vcmask 31744
      %272 = vst.msk [vmem:[%s213] sm:$0xff] %vm271, %v255
      %273 = vst.msk [vmem:[%s213 + $0x8] sm:$0xff] %vm271, %v256
      %274 = vst.msk [vmem:[%s213 + $0x10] sm:$0xff] %vm271, %v257
      %275 = vst.msk [vmem:[%s213 + $0x18] sm:$0xff] %vm271, %v258
      %276 = vst.msk [vmem:[%s213 + $0x20] sm:$0xff] %vm271, %v259
      %277 = vst.msk [vmem:[%s213 + $0x28] sm:$0xff] %vm271, %v260
      %278 = vst.msk [vmem:[%s213 + $0x30] sm:$0xff] %vm271, %v261
      %279 = vst.msk [vmem:[%s213 + $0x38] sm:$0xff] %vm271, %v262
      %280 = vst.msk [vmem:[%s213 + $0x40] sm:$0xff] %vm271, %v263
      %281 = vst.msk [vmem:[%s213 + $0x48] sm:$0xff] %vm271, %v264
      %282 = vst.msk [vmem:[%s213 + $0x50] sm:$0xff] %vm271, %v265
      %283 = vst.msk [vmem:[%s213 + $0x58] sm:$0xff] %vm271, %v266
      %284 = vst.msk [vmem:[%s213 + $0x60] sm:$0xff] %vm271, %v267
      %285 = vst.msk [vmem:[%s213 + $0x68] sm:$0xff] %vm271, %v268
      %286 = vst.msk [vmem:[%s213 + $0x70] sm:$0xff] %vm271, %v269
      %287 = vst.msk [vmem:[%s213 + $0x78] sm:$0xff] %vm271, %v270
      %s288 = smul.u32 8, %s19
      %p289 = scmp.lt.s32.totalorder %s18, 1
      %s290 = scalar_select %p289, %s18, 1
      %p291 = scmp.lt.s32.totalorder %s288, 15
      %s292 = scalar_select %p291, %s288, 15
      %s293 = smul.addr %s292, 2
      %s294 = smul.addr %s290, 32
      %s295 = sadd.s32 %s293, %s294
      %s296 = smul.addr %s295, 8
      %s297 = scalar_lea.vmem %s3, %s296
      // Predicated region
      $region33: #{resblock_forward.13} parent=31 // pred_check
        %p298 = pneg %p116
      $region34: #{resblock_forward.13} parent=31 // pred_check_branch
        %300 = sbr.rel (%p298) target = $region36
      $region35: #{resblock_forward.13} parent=31 // pred_region
        %s301 = smul.u32 8, %s19
      $region36: #{resblock_forward.13} parent=31 // pred_fallthru
        _
    $region32: #{resblock_forward.13} parent=5 // pred_fallthru
      _
    %p302 = scmp.le.s32.totalorder 2, %s9
    // Predicated region
    $region37: #{resblock_forward.13} parent=5 // pred_check
      %p303 = pneg %p302
    $region38: #{resblock_forward.13} parent=5 // pred_check_branch
      %305 = sbr.rel (%p303) target = $region40
    $region39: #{resblock_forward.13} parent=5 // pred_region
      %s306 = ssub.s32 %s9, 2
      // Predicated region
      $region41: #{resblock_forward.13} parent=39 // pred_check
        %p307 = pneg %p122
      $region42: #{resblock_forward.13} parent=39 // pred_check_branch
        %309 = sbr.rel (%p307) target = $region44
      $region43: #{resblock_forward.13} parent=39 // pred_region
        %s310 = smul.u32 8, %s21
        %p311 = scmp.lt.s32.totalorder %s20, 1
        %s312 = scalar_select %p311, %s20, 1
        %p313 = scmp.lt.s32.totalorder %s310, 15
        %s314 = scalar_select %p313, %s310, 15
        %s315 = smul.addr %s314, 2
        %s316 = smul.addr %s312, 32
        %s317 = sadd.s32 %s315, %s316
        %s318 = smul.addr %s317, 8
        %s319 = scalar_lea.vmem %s3, %s318
      $region44: #{resblock_forward.13} parent=39 // pred_fallthru
        _
    $region40: #{resblock_forward.13} parent=5 // pred_fallthru
      _
  $region6: #{resblock_forward.13} parent=0 // loop_footer
    %s13 = sadd.s32 1, %s9
  $region7: #{resblock_forward.13} parent=0 // loop_footer_branch
    %8 = sbr.rel target = $region3
  $region8: #{resblock_forward.13} parent=0 // loop_exit
    _

// kernel: resblock_forward.7
$region0: #{resblock_forward.7}
  #allocation0 [shape = 'u32[]', space=smem, size = 0x4, offset = 0x4, fixed_abs, tag = 'smem constant byte address 0x4 - core index']
  #allocation1 [shape = 'u32[72,128]{1,0:T(1,128)}', space=vmem, size = 0x9000, scoped, tag = 'internal scratch']
  %s0 = inlined_call_operand.vmem [shape: f32[2,18,18,4], index: 0, kind: input, shape index: {}]
  %s1 = inlined_call_operand.vmem [shape: f32[3,3,4,4], index: 1, kind: input, shape index: {}]
  %s2 = inlined_call_operand.vmem [shape: f32[1,4], index: 2, kind: input, shape index: {}]
  %s3 = inlined_call_operand.vmem [shape: f32[2,16,16,4], index: 3, kind: output, shape index: {0}]
  %s4 = inlined_call_operand.vmem [shape: f32[2,2,2,4], index: 4, kind: output, shape index: {1}]
  %5 = xla_tuple %s3, %s4
  %s6 = sld [smem:[#allocation0]]
  $region53: #{resblock_forward.7} parent=0
    _
  %s8 = ssub.s32 1, %s6
  %s9 = scalar_select 0, %s8, %s6
  loop: start=0, step=1, limit=6
  $region2: #{resblock_forward.7} parent=0 // loop_pre_header
    _
  $region3: #{resblock_forward.7} parent=0 // loop_header
    %s11 = sphi 0, %s15
    %p12 = scmp.ge.s32.totalorder %s11, 6
    %s18 = sphi 0, %s30
    %s19 = sphi 0, %s26
    %s20 = sphi 0, %s18
    %s21 = sphi 0, %s19
    %s22 = sphi 0, %s20
    %s23 = sphi 0, %s21
    %s33 = sphi 0, %s35
    %s36 = sphi 0, %s33
    %s37 = sphi 0, %s36
    %s53 = sphi 0, %s37
    %s57 = sphi 0, %s57
    %s59 = sphi 0, %s57
    %s60 = sphi 0, %s59
    %s74 = sphi 0, %s60
    %s78 = sphi 0, %s78
    %s80 = sphi 0, %s78
    %s81 = sphi 0, %s80
    %s95 = sphi 0, %s81
    %s103 = sphi 0, %s105
    %s106 = sphi 0, %s103
    %s107 = sphi 0, %s106
    %s123 = sphi 0, %s107
    %s131 = sphi 0, %s133
    %s134 = sphi 0, %s131
    %s135 = sphi 0, %s134
    %s151 = sphi 0, %s135
  $region4: #{resblock_forward.7} parent=0 // loop_header_branch
    %14 = sbr.rel (%p12) target = $region8
  $region5: #{resblock_forward.7} parent=0 // loop_body
    %s16 = ssub.s32 %s11, 1
    %s17 = ssub.s32 %s11, 2
    %s24 = sadd.s32 1, %s19
    %p25 = scmp.ge.s32.totalorder %s24, 2
    %s26 = scalar_select %p25, 0, %s24
    %s27 = sadd.s32 1, %s18
    %s28 = scalar_select %p25, %s27, %s18
    %p29 = scmp.ge.s32.totalorder %s28, 2
    %s30 = scalar_select %p29, 0, %s28
    %s31 = ssub.s32 %s18, %s30
    %p32 = scmp.eq.s32.totalorder %s31, 0
    %s34 = sadd.s32 %s33, 1
    %s35 = scalar_select %p32, %s33, %s34
    %p38 = pneg %p32
    %p39 = scmp.eq.s32.totalorder %s11, 3
    %p40 = por %p38, %p39
    %p41 = scmp.ne.s32.totalorder %s33, %s36
    %p42 = scmp.eq.s32.totalorder %s11, 0
    %p43 = por %p41, %p42
    %p44 = scmp.ne.s32.totalorder %s33, %s36
    %p45 = scmp.eq.s32.totalorder %s16, 3
    %p46 = por %p44, %p45
    %p47 = scmp.ne.s32.totalorder %s36, %s37
    %p48 = scmp.eq.s32.totalorder %s16, 0
    %p49 = por %p47, %p48
    %p50 = scmp.ne.s32.totalorder %s36, %s37
    %p51 = scmp.eq.s32.totalorder %s17, 3
    %p52 = por %p50, %p51
    %p54 = scmp.ne.s32.totalorder %s37, %s53
    %p55 = scmp.eq.s32.totalorder %s17, 0
    %p56 = por %p54, %p55
    %s58 = sadd.s32 %s57, 1
    %p61 = scmp.eq.s32.totalorder %s11, 3
    %p62 = scmp.ne.s32.totalorder %s57, %s59
    %p63 = scmp.eq.s32.totalorder %s11, 0
    %p64 = por %p62, %p63
    %p65 = scmp.ne.s32.totalorder %s57, %s59
    %p66 = scmp.eq.s32.totalorder %s16, 3
    %p67 = por %p65, %p66
    %p68 = scmp.ne.s32.totalorder %s59, %s60
    %p69 = scmp.eq.s32.totalorder %s16, 0
    %p70 = por %p68, %p69
    %p71 = scmp.ne.s32.totalorder %s59, %s60
    %p72 = scmp.eq.s32.totalorder %s17, 3
    %p73 = por %p71, %p72
    %p75 = scmp.ne.s32.totalorder %s60, %s74
    %p76 = scmp.eq.s32.totalorder %s17, 0
    %p77 = por %p75, %p76
    %s79 = sadd.s32 %s78, 1
    %p82 = scmp.eq.s32.totalorder %s11, 3
    %p83 = scmp.ne.s32.totalorder %s78, %s80
    %p84 = scmp.eq.s32.totalorder %s11, 0
    %p85 = por %p83, %p84
    %p86 = scmp.ne.s32.totalorder %s78, %s80
    %p87 = scmp.eq.s32.totalorder %s16, 3
    %p88 = por %p86, %p87
    %p89 = scmp.ne.s32.totalorder %s80, %s81
    %p90 = scmp.eq.s32.totalorder %s16, 0
    %p91 = por %p89, %p90
    %p92 = scmp.ne.s32.totalorder %s80, %s81
    %p93 = scmp.eq.s32.totalorder %s17, 3
    %p94 = por %p92, %p93
    %p96 = scmp.ne.s32.totalorder %s81, %s95
    %p97 = scmp.eq.s32.totalorder %s17, 0
    %p98 = por %p96, %p97
    %s99 = ssub.s32 %s18, %s30
    %s100 = ssub.s32 %s19, %s26
    %s101 = sor.u32 %s99, %s100
    %p102 = scmp.eq.s32.totalorder %s101, 0
    %s104 = sadd.s32 %s103, 1
    %s105 = scalar_select %p102, %s103, %s104
    %p108 = pneg %p102
    %p109 = scmp.eq.s32.totalorder %s11, 3
    %p110 = por %p108, %p109
    %p111 = scmp.ne.s32.totalorder %s103, %s106
    %p112 = scmp.eq.s32.totalorder %s11, 0
    %p113 = por %p111, %p112
    %p114 = scmp.ne.s32.totalorder %s103, %s106
    %p115 = scmp.eq.s32.totalorder %s16, 3
    %p116 = por %p114, %p115
    %p117 = scmp.ne.s32.totalorder %s106, %s107
    %p118 = scmp.eq.s32.totalorder %s16, 0
    %p119 = por %p117, %p118
    %p120 = scmp.ne.s32.totalorder %s106, %s107
    %p121 = scmp.eq.s32.totalorder %s17, 3
    %p122 = por %p120, %p121
    %p124 = scmp.ne.s32.totalorder %s107, %s123
    %p125 = scmp.eq.s32.totalorder %s17, 0
    %p126 = por %p124, %p125
    %s127 = ssub.s32 %s18, %s30
    %s128 = ssub.s32 %s19, %s26
    %s129 = sor.u32 %s127, %s128
    %p130 = scmp.eq.s32.totalorder %s129, 0
    %s132 = sadd.s32 %s131, 1
    %s133 = scalar_select %p130, %s131, %s132
    %p136 = pneg %p130
    %p137 = scmp.eq.s32.totalorder %s11, 3
    %p138 = por %p136, %p137
    %p139 = scmp.ne.s32.totalorder %s131, %s134
    %p140 = scmp.eq.s32.totalorder %s11, 0
    %p141 = por %p139, %p140
    %p142 = scmp.ne.s32.totalorder %s131, %s134
    %p143 = scmp.eq.s32.totalorder %s16, 3
    %p144 = por %p142, %p143
    %p145 = scmp.ne.s32.totalorder %s134, %s135
    %p146 = scmp.eq.s32.totalorder %s16, 0
    %p147 = por %p145, %p146
    %p148 = scmp.ne.s32.totalorder %s134, %s135
    %p149 = scmp.eq.s32.totalorder %s17, 3
    %p150 = por %p148, %p149
    %p152 = scmp.ne.s32.totalorder %s135, %s151
    %p153 = scmp.eq.s32.totalorder %s17, 0
    %p154 = por %p152, %p153
    %p155 = scmp.le.s32.totalorder 1, %s11
    %p156 = scmp.lt.s32.totalorder %s11, 5
    %p157 = pnand %p155, %p156
    %p158 = pneg %p157
    // Predicated region
    $region9: #{resblock_forward.7} parent=5 // pred_check
      _
    $region10: #{resblock_forward.7} parent=5 // pred_check_branch
      %160 = sbr.rel (%p157) target = $region12
    $region11: #{resblock_forward.7} parent=5 // pred_region
      %s161 = ssub.s32 %s11, 1
      // Predicated region
      $region13: #{resblock_forward.7} parent=11 // pred_check
        %p162 = pneg %p70
      $region14: #{resblock_forward.7} parent=11 // pred_check_branch
        %164 = sbr.rel (%p162) target = $region16
      $region15: #{resblock_forward.7} parent=11 // pred_region
        _
      $region16: #{resblock_forward.7} parent=11 // pred_fallthru
        _
      // Predicated region
      $region17: #{resblock_forward.7} parent=11 // pred_check
        %p165 = pneg %p91
      $region18: #{resblock_forward.7} parent=11 // pred_check_branch
        %167 = sbr.rel (%p165) target = $region20
      $region19: #{resblock_forward.7} parent=11 // pred_region
        _
      $region20: #{resblock_forward.7} parent=11 // pred_fallthru
        _
    $region12: #{resblock_forward.7} parent=5 // pred_fallthru
      _
    %p168 = scmp.lt.s32.totalorder %s11, 4
    // Predicated region
    $region21: #{resblock_forward.7} parent=5 // pred_check
      %p169 = pneg %p168
    $region22: #{resblock_forward.7} parent=5 // pred_check_branch
      %171 = sbr.rel (%p169) target = $region24
    $region23: #{resblock_forward.7} parent=5 // pred_region
      // Predicated region
      $region25: #{resblock_forward.7} parent=23 // pred_check
        %p172 = pneg %p43
      $region26: #{resblock_forward.7} parent=23 // pred_check_branch
        %174 = sbr.rel (%p172) target = $region28
      $region27: #{resblock_forward.7} parent=23 // pred_region
        %p175 = scmp.lt.s32.totalorder %s18, 1
        %s176 = scalar_select %p175, %s18, 1
        %s177 = smul.addr %s176, 54
        %s178 = smul.addr %s177, 8
        %s179 = scalar_lea.vmem %s0, %s178
      $region28: #{resblock_forward.7} parent=23 // pred_fallthru
        _
    $region24: #{resblock_forward.7} parent=5 // pred_fallthru
      _
    %p180 = scmp.le.s32.totalorder 1, %s11
    %p181 = scmp.lt.s32.totalorder %s11, 5
    %p182 = pnand %p180, %p181
    %p183 = pneg %p182
    // Predicated region
    $region29: #{resblock_forward.7} parent=5 // pred_check
      _
    $region30: #{resblock_forward.7} parent=5 // pred_check_branch
      %185 = sbr.rel (%p182) target = $region32
    $region31: #{resblock_forward.7} parent=5 // pred_region
      %s186 = ssub.s32 %s11, 1
      %p187 = scmp.lt.s32.totalorder %s20, 1
      %s188 = scalar_select %p187, %s20, 1
      %s189 = smul.addr %s188, 54
      %s190 = smul.addr %s189, 8
      %s191 = scalar_lea.vmem %s0, %s190
      %p192 = pneg %p49
      %p193 = pneg %p46
      %p194 = pneg %p70
      %p195 = pneg %p67
      %p196 = pneg %p91
      %p197 = pneg %p88
      %p198 = pneg %p119
      %p199 = pneg %p116
      %s200 = smul.u32 8, %s21
      %p201 = scmp.lt.s32.totalorder %s20, 1
      %s202 = scalar_select %p201, %s20, 1
      %p203 = scmp.lt.s32.totalorder %s200, 15
      %s204 = scalar_select %p203, %s200, 15
      %s205 = smul.addr %s204, 2
      %s206 = smul.addr %s202, 32
      %s207 = sadd.s32 %s205, %s206
      %s208 = smul.addr %s207, 8
      %s209 = scalar_lea.vmem %s3, %s208
      %p210 = pneg %p147
      %p211 = pneg %p144
      %p212 = scmp.lt.s32.totalorder %s20, 1
      %s213 = scalar_select %p212, %s20, 1
      %p214 = scmp.lt.s32.totalorder %s21, 1
      %s215 = scalar_select %p214, %s21, 1
      %s216 = smul.addr %s213, 2
      %s217 = sadd.s32 %s215, %s216
      %s218 = smul.addr %s217, 2
      %s219 = scalar_lea.vmem %s4, %s218
      %p220 = scmp.lt.s32.totalorder %s20, 1
      %s221 = scalar_select %p220, %s20, 1
      %s222 = smul.addr %s221, 54
      %s223 = smul.addr %s222, 8
      %s224 = scalar_lea.vmem %s0, %s223
      %s225 = smul.u32 8, %s21
      %p226 = scmp.lt.s32.totalorder %s20, 1
      %s227 = scalar_select %p226, %s20, 1
      %p228 = scmp.lt.s32.totalorder %s225, 15
      %s229 = scalar_select %p228, %s225, 15
      %s230 = smul.addr %s229, 2
      %s231 = smul.addr %s227, 32
      %s232 = sadd.s32 %s230, %s231
      %s233 = smul.addr %s232, 8
      %s234 = scalar_lea.vmem %s3, %s233
      %s235 = smul.u32 8, %s21
      %p236 = scmp.lt.s32.totalorder %s20, 1
      %s237 = scalar_select %p236, %s20, 1
      %p238 = scmp.lt.s32.totalorder %s21, 1
      %s239 = scalar_select %p238, %s21, 1
      %s240 = smul.addr %s237, 2
      %s241 = sadd.s32 %s239, %s240
      %s242 = smul.addr %s241, 2
      %s243 = scalar_lea.vmem %s4, %s242
      %s244 = smul.u32 %s21, 8
      %s245 = smul.u32 %s244, 24
      %s246 = scalar_lea.vmem %s224, %s245
      %v247 = vld [vmem:[%s246] sm:$0xff]
      %v248 = vld [vmem:[%s246 + $0x8] sm:$0xff]
      %v249 = vld [vmem:[%s246 + $0x10] sm:$0x3]
      %v250 = vld [vmem:[%s246 + $0x18] sm:$0xff]
      %v251 = vld [vmem:[%s246 + $0x20] sm:$0xff]
      %v252 = vld [vmem:[%s246 + $0x28] sm:$0x3]
      %v253 = vld [vmem:[%s246 + $0x30] sm:$0xff]
      %v254 = vld [vmem:[%s246 + $0x38] sm:$0xff]
      %v255 = vld [vmem:[%s246 + $0x40] sm:$0x3]
      %v256 = vld [vmem:[%s246 + $0x48] sm:$0xff]
      %v257 = vld [vmem:[%s246 + $0x50] sm:$0xff]
      %v258 = vld [vmem:[%s246 + $0x58] sm:$0x3]
      %v259 = vld [vmem:[%s246 + $0x60] sm:$0xff]
      %v260 = vld [vmem:[%s246 + $0x68] sm:$0xff]
      %v261 = vld [vmem:[%s246 + $0x70] sm:$0x3]
      %v262 = vld [vmem:[%s246 + $0x78] sm:$0xff]
      %v263 = vld [vmem:[%s246 + $0x80] sm:$0xff]
      %v264 = vld [vmem:[%s246 + $0x88] sm:$0x3]
      %v265 = vld [vmem:[%s246 + $0x90] sm:$0xff]
      %v266 = vld [vmem:[%s246 + $0x98] sm:$0xff]
      %v267 = vld [vmem:[%s246 + $0xa0] sm:$0x3]
      %v268 = vld [vmem:[%s246 + $0xa8] sm:$0xff]
      %v269 = vld [vmem:[%s246 + $0xb0] sm:$0xff]
      %v270 = vld [vmem:[%s246 + $0xb8] sm:$0x3]
      %v271 = vld [vmem:[%s246 + $0xc0] sm:$0xff]
      %v272 = vld [vmem:[%s246 + $0xc8] sm:$0xff]
      %v273 = vld [vmem:[%s246 + $0xd0] sm:$0x3]
      %v274 = vld [vmem:[%s246 + $0xd8] sm:$0xff]
      %v275 = vld [vmem:[%s246 + $0xe0] sm:$0xff]
      %v276 = vld [vmem:[%s246 + $0xe8] sm:$0x3]
      %v277 = vld [vmem:[%s1] sm:$0xf]
      %v278 = vld [vmem:[%s1 + $0x4] sm:$0xf]
      %v279 = vld [vmem:[%s1 + $0x8] sm:$0xf]
      %v280 = vld [vmem:[%s1 + $0xc] sm:$0xf]
      %v281 = vld [vmem:[%s1 + $0x10] sm:$0xf]
      %v282 = vld [vmem:[%s1 + $0x14] sm:$0xf]
      %v283 = vld [vmem:[%s1 + $0x18] sm:$0xf]
      %v284 = vld [vmem:[%s1 + $0x1c] sm:$0xf]
      %v285 = vld [vmem:[%s1 + $0x20] sm:$0xf]
      %vm310 = vcmask 1046528
      %v311 = vrot.slane %v247, 1
      %v312 = vrot.slane %v248, 1
      %v313 = vsel %vm310, %v311, %v312
      %v314 = vrot.slane %v249, 1
      %v315 = vsel %vm310, %v312, %v314
      %v316 = vrot.slane %v250, 1
      %v317 = vrot.slane %v251, 1
      %v318 = vsel %vm310, %v316, %v317
      %v319 = vrot.slane %v252, 1
      %v320 = vsel %vm310, %v317, %v319
      %v321 = vrot.slane %v253, 1
      %v322 = vrot.slane %v254, 1
      %v323 = vsel %vm310, %v321, %v322
      %v324 = vrot.slane %v255, 1
      %v325 = vsel %vm310, %v322, %v324
      %v326 = vrot.slane %v256, 1
      %v327 = vrot.slane %v257, 1
      %v328 = vsel %vm310, %v326, %v327
      %v329 = vrot.slane %v258, 1
      %v330 = vsel %vm310, %v327, %v329
      %v331 = vrot.slane %v259, 1
      %v332 = vrot.slane %v260, 1
      %v333 = vsel %vm310, %v331, %v332
      %v334 = vrot.slane %v261, 1
      %v335 = vsel %vm310, %v332, %v334
      %v336 = vrot.slane %v262, 1
      %v337 = vrot.slane %v263, 1
      %v338 = vsel %vm310, %v336, %v337
      %v339 = vrot.slane %v264, 1
      %v340 = vsel %vm310, %v337, %v339
      %v341 = vrot.slane %v265, 1
      %v342 = vrot.slane %v266, 1
      %v343 = vsel %vm310, %v341, %v342
      %v344 = vrot.slane %v267, 1
      %v345 = vsel %vm310, %v342, %v344
      %v346 = vrot.slane %v268, 1
      %v347 = vrot.slane %v269, 1
      %v348 = vsel %vm310, %v346, %v347
      %v349 = vrot.slane %v270, 1
      %v350 = vsel %vm310, %v347, %v349
      %vm351 = vcmask 31744
      %v352 = vsel %vm351, %v313, 0
      %v354 = vsel %vm351, %v315, 0
      %v356 = vsel %vm351, %v318, 0
      %v358 = vsel %vm351, %v320, 0
      %v360 = vsel %vm351, %v323, 0
      %v362 = vsel %vm351, %v325, 0
      %v364 = vsel %vm351, %v328, 0
      %v366 = vsel %vm351, %v330, 0
      %v368 = vsel %vm351, %v333, 0
      %v370 = vsel %vm351, %v335, 0
      %v372 = vsel %vm351, %v338, 0
      %v374 = vsel %vm351, %v340, 0
      %v376 = vsel %vm351, %v343, 0
      %v378 = vsel %vm351, %v345, 0
      %v380 = vsel %vm351, %v348, 0
      %v382 = vsel %vm351, %v350, 0
      %vm384 = vcmask 1043456
      %v386 = vsel %vm384, %v278, 0
      %388 = vmatpush.msra.mxu0 0.0
      %389 = vmatpush.msra.mxu0 0.0
      %390 = vmatpush.msra.mxu0 0.0
      %391 = vmatpush.msra.mxu0 0.0
      %392 = vmatpush.msra.mxu0 0.0
      %393 = vmatpush.msra.mxu0 0.0
      %394 = vmatpush.msra.mxu0 0.0
      %395 = vmatpush.msra.mxu0 0.0
      %396 = vmatpush.msra.mxu0 0.0
      %397 = vmatpush.msra.mxu0 0.0
      %398 = vmatpush.msra.mxu0 0.0
      %399 = vmatpush.msra.mxu0 0.0
      %400 = vmatpush.msra.mxu0 0.0
      %401 = vmatpush.msra.mxu0 0.0
      %402 = vmatpush.msra.mxu0 0.0
      %403 = vmatpush.msra.mxu0 %v386
      %404 = vmatmul.f32.gmra.mxu0 %v352
      %v405 = vpop.f32.mrf.mxu0
      %v406 = vadd.f32 0.0, %v405
      %407 = vmatmul.f32.gmra.mxu0 %v354
      %v408 = vpop.f32.mrf.mxu0
      %v409 = vadd.f32 0.0, %v408
      %410 = vmatmul.f32.gmra.mxu0 %v356
      %v411 = vpop.f32.mrf.mxu0
      %v412 = vadd.f32 0.0, %v411
      %413 = vmatmul.f32.gmra.mxu0 %v358
      %v414 = vpop.f32.mrf.mxu0
      %v415 = vadd.f32 0.0, %v414
      %416 = vmatmul.f32.gmra.mxu0 %v360
      %v417 = vpop.f32.mrf.mxu0
      %v418 = vadd.f32 0.0, %v417
      %419 = vmatmul.f32.gmra.mxu0 %v362
      %v420 = vpop.f32.mrf.mxu0
      %v421 = vadd.f32 0.0, %v420
      %422 = vmatmul.f32.gmra.mxu0 %v364
      %v423 = vpop.f32.mrf.mxu0
      %v424 = vadd.f32 0.0, %v423
      %425 = vmatmul.f32.gmra.mxu0 %v366
      %v426 = vpop.f32.mrf.mxu0
      %v427 = vadd.f32 0.0, %v426
      %428 = vmatmul.f32.gmra.mxu0 %v368
      %v429 = vpop.f32.mrf.mxu0
      %v430 = vadd.f32 0.0, %v429
      %431 = vmatmul.f32.gmra.mxu0 %v370
      %v432 = vpop.f32.mrf.mxu0
      %v433 = vadd.f32 0.0, %v432
      %434 = vmatmul.f32.gmra.mxu0 %v372
      %v435 = vpop.f32.mrf.mxu0
      %v436 = vadd.f32 0.0, %v435
      %437 = vmatmul.f32.gmra.mxu0 %v374
      %v438 = vpop.f32.mrf.mxu0
      %v439 = vadd.f32 0.0, %v438
      %440 = vmatmul.f32.gmra.mxu0 %v376
      %v441 = vpop.f32.mrf.mxu0
      %v442 = vadd.f32 0.0, %v441
      %443 = vmatmul.f32.gmra.mxu0 %v378
      %v444 = vpop.f32.mrf.mxu0
      %v445 = vadd.f32 0.0, %v444
      %446 = vmatmul.f32.gmra.mxu0 %v380
      %v447 = vpop.f32.mrf.mxu0
      %v448 = vadd.f32 0.0, %v447
      %449 = vmatmul.f32.gmra.mxu0 %v382
      %v450 = vpop.f32.mrf.mxu0
      %v451 = vadd.f32 0.0, %v450
      %452 = vdwg.mxu0
      %v453 = vsel %vm351, %v247, 0
      %v455 = vsel %vm351, %v248, 0
      %v457 = vsel %vm351, %v250, 0
      %v459 = vsel %vm351, %v251, 0
      %v461 = vsel %vm351, %v253, 0
      %v463 = vsel %vm351, %v254, 0
      %v465 = vsel %vm351, %v256, 0
      %v467 = vsel %vm351, %v257, 0
      %v469 = vsel %vm351, %v259, 0
      %v471 = vsel %vm351, %v260, 0
      %v473 = vsel %vm351, %v262, 0
      %v475 = vsel %vm351, %v263, 0
      %v477 = vsel %vm351, %v265, 0
      %v479 = vsel %vm351, %v266, 0
      %v481 = vsel %vm351, %v268, 0
      %v483 = vsel %vm351, %v269, 0
      %v486 = vsel %vm384, %v277, 0
      %488 = vmatpush.msra.mxu0 0.0
      %489 = vmatpush.msra.mxu0 0.0
      %490 = vmatpush.msra.mxu0 0.0
      %491 = vmatpush.msra.mxu0 0.0
      %492 = vmatpush.msra.mxu0 0.0
      %493 = vmatpush.msra.mxu0 0.0
      %494 = vmatpush.msra.mxu0 0.0
      %495 = vmatpush.msra.mxu0 0.0
      %496 = vmatpush.msra.mxu0 0.0
      %497 = vmatpush.msra.mxu0 0.0
      %498 = vmatpush.msra.mxu0 0.0
      %499 = vmatpush.msra.mxu0 0.0
      %500 = vmatpush.msra.mxu0 0.0
      %501 = vmatpush.msra.mxu0 0.0
      %502 = vmatpush.msra.mxu0 0.0
      %503 = vmatpush.msra.mxu0 %v486
      %504 = vmatmul.f32.gmra.mxu0 %v453
      %v505 = vpop.f32.mrf.mxu0
      %v506 = vadd.f32 %v406, %v505
      %507 = vmatmul.f32.gmra.mxu0 %v455
      %v508 = vpop.f32.mrf.mxu0
      %v509 = vadd.f32 %v409, %v508
      %510 = vmatmul.f32.gmra.mxu0 %v457
      %v511 = vpop.f32.mrf.mxu0
      %v512 = vadd.f32 %v412, %v511
      %513 = vmatmul.f32.gmra.mxu0 %v459
      %v514 = vpop.f32.mrf.mxu0
      %v515 = vadd.f32 %v415, %v514
      %516 = vmatmul.f32.gmra.mxu0 %v461
      %v517 = vpop.f32.mrf.mxu0
      %v518 = vadd.f32 %v418, %v517
      %519 = vmatmul.f32.gmra.mxu0 %v463
      %v520 = vpop.f32.mrf.mxu0
      %v521 = vadd.f32 %v421, %v520
      %522 = vmatmul.f32.gmra.mxu0 %v465
      %v523 = vpop.f32.mrf.mxu0
      %v524 = vadd.f32 %v424, %v523
      %525 = vmatmul.f32.gmra.mxu0 %v467
      %v526 = vpop.f32.mrf.mxu0
      %v527 = vadd.f32 %v427, %v526
      %528 = vmatmul.f32.gmra.mxu0 %v469
      %v529 = vpop.f32.mrf.mxu0
      %v530 = vadd.f32 %v430, %v529
      %531 = vmatmul.f32.gmra.mxu0 %v471
      %v532 = vpop.f32.mrf.mxu0
      %v533 = vadd.f32 %v433, %v532
      %534 = vmatmul.f32.gmra.mxu0 %v473
      %v535 = vpop.f32.mrf.mxu0
      %v536 = vadd.f32 %v436, %v535
      %537 = vmatmul.f32.gmra.mxu0 %v475
      %v538 = vpop.f32.mrf.mxu0
      %v539 = vadd.f32 %v439, %v538
      %540 = vmatmul.f32.gmra.mxu0 %v477
      %v541 = vpop.f32.mrf.mxu0
      %v542 = vadd.f32 %v442, %v541
      %543 = vmatmul.f32.gmra.mxu0 %v479
      %v544 = vpop.f32.mrf.mxu0
      %v545 = vadd.f32 %v445, %v544
      %546 = vmatmul.f32.gmra.mxu0 %v481
      %v547 = vpop.f32.mrf.mxu0
      %v548 = vadd.f32 %v448, %v547
      %549 = vmatmul.f32.gmra.mxu0 %v483
      %v550 = vpop.f32.mrf.mxu0
      %v551 = vadd.f32 %v451, %v550
      %552 = vdwg.mxu0
      %vm553 = vcmask 1045504
      %v554 = vrot.slane %v247, 2
      %v555 = vrot.slane %v248, 2
      %v556 = vsel %vm553, %v554, %v555
      %v557 = vrot.slane %v249, 2
      %v558 = vsel %vm553, %v555, %v557
      %v559 = vrot.slane %v250, 2
      %v560 = vrot.slane %v251, 2
      %v561 = vsel %vm553, %v559, %v560
      %v562 = vrot.slane %v252, 2
      %v563 = vsel %vm553, %v560, %v562
      %v564 = vrot.slane %v253, 2
      %v565 = vrot.slane %v254, 2
      %v566 = vsel %vm553, %v564, %v565
      %v567 = vrot.slane %v255, 2
      %v568 = vsel %vm553, %v565, %v567
      %v569 = vrot.slane %v256, 2
      %v570 = vrot.slane %v257, 2
      %v571 = vsel %vm553, %v569, %v570
      %v572 = vrot.slane %v258, 2
      %v573 = vsel %vm553, %v570, %v572
      %v574 = vrot.slane %v259, 2
      %v575 = vrot.slane %v260, 2
      %v576 = vsel %vm553, %v574, %v575
      %v577 = vrot.slane %v261, 2
      %v578 = vsel %vm553, %v575, %v577
      %v579 = vrot.slane %v262, 2
      %v580 = vrot.slane %v263, 2
      %v581 = vsel %vm553, %v579, %v580
      %v582 = vrot.slane %v264, 2
      %v583 = vsel %vm553, %v580, %v582
      %v584 = vrot.slane %v265, 2
      %v585 = vrot.slane %v266, 2
      %v586 = vsel %vm553, %v584, %v585
      %v587 = vrot.slane %v267, 2
      %v588 = vsel %vm553, %v585, %v587
      %v589 = vrot.slane %v268, 2
      %v590 = vrot.slane %v269, 2
      %v591 = vsel %vm553, %v589, %v590
      %v592 = vrot.slane %v270, 2
      %v593 = vsel %vm553, %v590, %v592
      %v594 = vsel %vm351, %v556, 0
      %v596 = vsel %vm351, %v558, 0
      %v598 = vsel %vm351, %v561, 0
      %v600 = vsel %vm351, %v563, 0
      %v602 = vsel %vm351, %v566, 0
      %v604 = vsel %vm351, %v568, 0
      %v606 = vsel %vm351, %v571, 0
      %v608 = vsel %vm351, %v573, 0
      %v610 = vsel %vm351, %v576, 0
      %v612 = vsel %vm351, %v578, 0
      %v614 = vsel %vm351, %v581, 0
      %v616 = vsel %vm351, %v583, 0
      %v618 = vsel %vm351, %v586, 0
      %v620 = vsel %vm351, %v588, 0
      %v622 = vsel %vm351, %v591, 0
      %v624 = vsel %vm351, %v593, 0
      %v627 = vsel %vm384, %v279, 0
      %629 = vmatpush.msra.mxu0 0.0
      %630 = vmatpush.msra.mxu0 0.0
      %631 = vmatpush.msra.mxu0 0.0
      %632 = vmatpush.msra.mxu0 0.0
      %633 = vmatpush.msra.mxu0 0.0
      %634 = vmatpush.msra.mxu0 0.0
      %635 = vmatpush.msra.mxu0 0.0
      %636 = vmatpush.msra.mxu0 0.0
      %637 = vmatpush.msra.mxu0 0.0
      %638 = vmatpush.msra.mxu0 0.0
      %639 = vmatpush.msra.mxu0 0.0
      %640 = vmatpush.msra.mxu0 0.0
      %641 = vmatpush.msra.mxu0 0.0
      %642 = vmatpush.msra.mxu0 0.0
      %643 = vmatpush.msra.mxu0 0.0
      %644 = vmatpush.msra.mxu0 %v627
      %645 = vmatmul.f32.gmra.mxu0 %v594
      %v646 = vpop.f32.mrf.mxu0
      %v647 = vadd.f32 0.0, %v646
      %648 = vmatmul.f32.gmra.mxu0 %v596
      %v649 = vpop.f32.mrf.mxu0
      %v650 = vadd.f32 0.0, %v649
      %651 = vmatmul.f32.gmra.mxu0 %v598
      %v652 = vpop.f32.mrf.mxu0
      %v653 = vadd.f32 0.0, %v652
      %654 = vmatmul.f32.gmra.mxu0 %v600
      %v655 = vpop.f32.mrf.mxu0
      %v656 = vadd.f32 0.0, %v655
      %657 = vmatmul.f32.gmra.mxu0 %v602
      %v658 = vpop.f32.mrf.mxu0
      %v659 = vadd.f32 0.0, %v658
      %660 = vmatmul.f32.gmra.mxu0 %v604
      %v661 = vpop.f32.mrf.mxu0
      %v662 = vadd.f32 0.0, %v661
      %663 = vmatmul.f32.gmra.mxu0 %v606
      %v664 = vpop.f32.mrf.mxu0
      %v665 = vadd.f32 0.0, %v664
      %666 = vmatmul.f32.gmra.mxu0 %v608
      %v667 = vpop.f32.mrf.mxu0
      %v668 = vadd.f32 0.0, %v667
      %669 = vmatmul.f32.gmra.mxu0 %v610
      %v670 = vpop.f32.mrf.mxu0
      %v671 = vadd.f32 0.0, %v670
      %672 = vmatmul.f32.gmra.mxu0 %v612
      %v673 = vpop.f32.mrf.mxu0
      %v674 = vadd.f32 0.0, %v673
      %675 = vmatmul.f32.gmra.mxu0 %v614
      %v676 = vpop.f32.mrf.mxu0
      %v677 = vadd.f32 0.0, %v676
      %678 = vmatmul.f32.gmra.mxu0 %v616
      %v679 = vpop.f32.mrf.mxu0
      %v680 = vadd.f32 0.0, %v679
      %681 = vmatmul.f32.gmra.mxu0 %v618
      %v682 = vpop.f32.mrf.mxu0
      %v683 = vadd.f32 0.0, %v682
      %684 = vmatmul.f32.gmra.mxu0 %v620
      %v685 = vpop.f32.mrf.mxu0
      %v686 = vadd.f32 0.0, %v685
      %687 = vmatmul.f32.gmra.mxu0 %v622
      %v688 = vpop.f32.mrf.mxu0
      %v689 = vadd.f32 0.0, %v688
      %690 = vmatmul.f32.gmra.mxu0 %v624
      %v691 = vpop.f32.mrf.mxu0
      %v692 = vadd.f32 0.0, %v691
      %693 = vdwg.mxu0
      %v694 = vadd.f32 %v506, %v647
      %v695 = vadd.f32 %v509, %v650
      %v696 = vadd.f32 %v512, %v653
      %v697 = vadd.f32 %v515, %v656
      %v698 = vadd.f32 %v518, %v659
      %v699 = vadd.f32 %v521, %v662
      %v700 = vadd.f32 %v524, %v665
      %v701 = vadd.f32 %v527, %v668
      %v702 = vadd.f32 %v530, %v671
      %v703 = vadd.f32 %v533, %v674
      %v704 = vadd.f32 %v536, %v677
      %v705 = vadd.f32 %v539, %v680
      %v706 = vadd.f32 %v542, %v683
      %v707 = vadd.f32 %v545, %v686
      %v708 = vadd.f32 %v548, %v689
      %v709 = vadd.f32 %v551, %v692
      %v711 = vsel %vm351, %v271, 0
      %v714 = vsel %vm351, %v272, 0
      %v717 = vsel %vm384, %v280, 0
      %719 = vmatpush.msra.mxu0 0.0
      %720 = vmatpush.msra.mxu0 0.0
      %721 = vmatpush.msra.mxu0 0.0
      %722 = vmatpush.msra.mxu0 0.0
      %723 = vmatpush.msra.mxu0 0.0
      %724 = vmatpush.msra.mxu0 0.0
      %725 = vmatpush.msra.mxu0 0.0
      %726 = vmatpush.msra.mxu0 0.0
      %727 = vmatpush.msra.mxu0 0.0
      %728 = vmatpush.msra.mxu0 0.0
      %729 = vmatpush.msra.mxu0 0.0
      %730 = vmatpush.msra.mxu0 0.0
      %731 = vmatpush.msra.mxu0 0.0
      %732 = vmatpush.msra.mxu0 0.0
      %733 = vmatpush.msra.mxu0 0.0
      %734 = vmatpush.msra.mxu0 %v717
      %735 = vmatmul.f32.gmra.mxu0 %v457
      %v736 = vpop.f32.mrf.mxu0
      %v737 = vadd.f32 0.0, %v736
      %738 = vmatmul.f32.gmra.mxu0 %v459
      %v739 = vpop.f32.mrf.mxu0
      %v740 = vadd.f32 0.0, %v739
      %741 = vmatmul.f32.gmra.mxu0 %v461
      %v742 = vpop.f32.mrf.mxu0
      %v743 = vadd.f32 0.0, %v742
      %744 = vmatmul.f32.gmra.mxu0 %v463
      %v745 = vpop.f32.mrf.mxu0
      %v746 = vadd.f32 0.0, %v745
      %747 = vmatmul.f32.gmra.mxu0 %v465
      %v748 = vpop.f32.mrf.mxu0
      %v749 = vadd.f32 0.0, %v748
      %750 = vmatmul.f32.gmra.mxu0 %v467
      %v751 = vpop.f32.mrf.mxu0
      %v752 = vadd.f32 0.0, %v751
      %753 = vmatmul.f32.gmra.mxu0 %v469
      %v754 = vpop.f32.mrf.mxu0
      %v755 = vadd.f32 0.0, %v754
      %756 = vmatmul.f32.gmra.mxu0 %v471
      %v757 = vpop.f32.mrf.mxu0
      %v758 = vadd.f32 0.0, %v757
      %759 = vmatmul.f32.gmra.mxu0 %v473
      %v760 = vpop.f32.mrf.mxu0
      %v761 = vadd.f32 0.0, %v760
      %762 = vmatmul.f32.gmra.mxu0 %v475
      %v763 = vpop.f32.mrf.mxu0
      %v764 = vadd.f32 0.0, %v763
      %765 = vmatmul.f32.gmra.mxu0 %v477
      %v766 = vpop.f32.mrf.mxu0
      %v767 = vadd.f32 0.0, %v766
      %768 = vmatmul.f32.gmra.mxu0 %v479
      %v769 = vpop.f32.mrf.mxu0
      %v770 = vadd.f32 0.0, %v769
      %771 = vmatmul.f32.gmra.mxu0 %v481
      %v772 = vpop.f32.mrf.mxu0
      %v773 = vadd.f32 0.0, %v772
      %774 = vmatmul.f32.gmra.mxu0 %v483
      %v775 = vpop.f32.mrf.mxu0
      %v776 = vadd.f32 0.0, %v775
      %777 = vmatmul.f32.gmra.mxu0 %v711
      %v778 = vpop.f32.mrf.mxu0
      %v779 = vadd.f32 0.0, %v778
      %780 = vmatmul.f32.gmra.mxu0 %v714
      %v781 = vpop.f32.mrf.mxu0
      %v782 = vadd.f32 0.0, %v781
      %783 = vdwg.mxu0
      %v784 = vadd.f32 %v694, %v737
      %v785 = vadd.f32 %v695, %v740
      %v786 = vadd.f32 %v696, %v743
      %v787 = vadd.f32 %v697, %v746
      %v788 = vadd.f32 %v698, %v749
      %v789 = vadd.f32 %v699, %v752
      %v790 = vadd.f32 %v700, %v755
      %v791 = vadd.f32 %v701, %v758
      %v792 = vadd.f32 %v702, %v761
      %v793 = vadd.f32 %v703, %v764
      %v794 = vadd.f32 %v704, %v767
      %v795 = vadd.f32 %v705, %v770
      %v796 = vadd.f32 %v706, %v773
      %v797 = vadd.f32 %v707, %v776
      %v798 = vadd.f32 %v708, %v779
      %v799 = vadd.f32 %v709, %v782
      %v801 = vrot.slane %v271, 1
      %v802 = vrot.slane %v272, 1
      %v803 = vsel %vm310, %v801, %v802
      %v804 = vrot.slane %v273, 1
      %v805 = vsel %vm310, %v802, %v804
      %v806 = vsel %vm351, %v803, 0
      %v808 = vsel %vm351, %v805, 0
      %v811 = vsel %vm384, %v281, 0
      %813 = vmatpush.msra.mxu0 0.0
      %814 = vmatpush.msra.mxu0 0.0
      %815 = vmatpush.msra.mxu0 0.0
      %816 = vmatpush.msra.mxu0 0.0
      %817 = vmatpush.msra.mxu0 0.0
      %818 = vmatpush.msra.mxu0 0.0
      %819 = vmatpush.msra.mxu0 0.0
      %820 = vmatpush.msra.mxu0 0.0
      %821 = vmatpush.msra.mxu0 0.0
      %822 = vmatpush.msra.mxu0 0.0
      %823 = vmatpush.msra.mxu0 0.0
      %824 = vmatpush.msra.mxu0 0.0
      %825 = vmatpush.msra.mxu0 0.0
      %826 = vmatpush.msra.mxu0 0.0
      %827 = vmatpush.msra.mxu0 0.0
      %828 = vmatpush.msra.mxu0 %v811
      %829 = vmatmul.f32.gmra.mxu0 %v356
      %v830 = vpop.f32.mrf.mxu0
      %v831 = vadd.f32 0.0, %v830
      %832 = vmatmul.f32.gmra.mxu0 %v358
      %v833 = vpop.f32.mrf.mxu0
      %v834 = vadd.f32 0.0, %v833
      %835 = vmatmul.f32.gmra.mxu0 %v360
      %v836 = vpop.f32.mrf.mxu0
      %v837 = vadd.f32 0.0, %v836
      %838 = vmatmul.f32.gmra.mxu0 %v362
      %v839 = vpop.f32.mrf.mxu0
      %v840 = vadd.f32 0.0, %v839
      %841 = vmatmul.f32.gmra.mxu0 %v364
      %v842 = vpop.f32.mrf.mxu0
      %v843 = vadd.f32 0.0, %v842
      %844 = vmatmul.f32.gmra.mxu0 %v366
      %v845 = vpop.f32.mrf.mxu0
      %v846 = vadd.f32 0.0, %v845
      %847 = vmatmul.f32.gmra.mxu0 %v368
      %v848 = vpop.f32.mrf.mxu0
      %v849 = vadd.f32 0.0, %v848
      %850 = vmatmul.f32.gmra.mxu0 %v370
      %v851 = vpop.f32.mrf.mxu0
      %v852 = vadd.f32 0.0, %v851
      %853 = vmatmul.f32.gmra.mxu0 %v372
      %v854 = vpop.f32.mrf.mxu0
      %v855 = vadd.f32 0.0, %v854
      %856 = vmatmul.f32.gmra.mxu0 %v374
      %v857 = vpop.f32.mrf.mxu0
      %v858 = vadd.f32 0.0, %v857
      %859 = vmatmul.f32.gmra.mxu0 %v376
      %v860 = vpop.f32.mrf.mxu0
      %v861 = vadd.f32 0.0, %v860
      %862 = vmatmul.f32.gmra.mxu0 %v378
      %v863 = vpop.f32.mrf.mxu0
      %v864 = vadd.f32 0.0, %v863
      %865 = vmatmul.f32.gmra.mxu0 %v380
      %v866 = vpop.f32.mrf.mxu0
      %v867 = vadd.f32 0.0, %v866
      %868 = vmatmul.f32.gmra.mxu0 %v382
      %v869 = vpop.f32.mrf.mxu0
      %v870 = vadd.f32 0.0, %v869
      %871 = vmatmul.f32.gmra.mxu0 %v806
      %v872 = vpop.f32.mrf.mxu0
      %v873 = vadd.f32 0.0, %v872
      %874 = vmatmul.f32.gmra.mxu0 %v808
      %v875 = vpop.f32.mrf.mxu0
      %v876 = vadd.f32 0.0, %v875
      %877 = vdwg.mxu0
      %v878 = vadd.f32 %v784, %v831
      %v879 = vadd.f32 %v785, %v834
      %v880 = vadd.f32 %v786, %v837
      %v881 = vadd.f32 %v787, %v840
      %v882 = vadd.f32 %v788, %v843
      %v883 = vadd.f32 %v789, %v846
      %v884 = vadd.f32 %v790, %v849
      %v885 = vadd.f32 %v791, %v852
      %v886 = vadd.f32 %v792, %v855
      %v887 = vadd.f32 %v793, %v858
      %v888 = vadd.f32 %v794, %v861
      %v889 = vadd.f32 %v795, %v864
      %v890 = vadd.f32 %v796, %v867
      %v891 = vadd.f32 %v797, %v870
      %v892 = vadd.f32 %v798, %v873
      %v893 = vadd.f32 %v799, %v876
      %v894 = vrot.slane %v271, 2
      %v895 = vrot.slane %v272, 2
      %v896 = vsel %vm553, %v894, %v895
      %v897 = vrot.slane %v273, 2
      %v898 = vsel %vm553, %v895, %v897
      %v899 = vsel %vm351, %v896, 0
      %v901 = vsel %vm351, %v898, 0
      %v904 = vsel %vm384, %v282, 0
      %906 = vmatpush.msra.mxu0 0.0
      %907 = vmatpush.msra.mxu0 0.0
      %908 = vmatpush.msra.mxu0 0.0
      %909 = vmatpush.msra.mxu0 0.0
      %910 = vmatpush.msra.mxu0 0.0
      %911 = vmatpush.msra.mxu0 0.0
      %912 = vmatpush.msra.mxu0 0.0
      %913 = vmatpush.msra.mxu0 0.0
      %914 = vmatpush.msra.mxu0 0.0
      %915 = vmatpush.msra.mxu0 0.0
      %916 = vmatpush.msra.mxu0 0.0
      %917 = vmatpush.msra.mxu0 0.0
      %918 = vmatpush.msra.mxu0 0.0
      %919 = vmatpush.msra.mxu0 0.0
      %920 = vmatpush.msra.mxu0 0.0
      %921 = vmatpush.msra.mxu0 %v904
      %922 = vmatmul.f32.gmra.mxu0 %v598
      %v923 = vpop.f32.mrf.mxu0
      %v924 = vadd.f32 0.0, %v923
      %925 = vmatmul.f32.gmra.mxu0 %v600
      %v926 = vpop.f32.mrf.mxu0
      %v927 = vadd.f32 0.0, %v926
      %928 = vmatmul.f32.gmra.mxu0 %v602
      %v929 = vpop.f32.mrf.mxu0
      %v930 = vadd.f32 0.0, %v929
      %931 = vmatmul.f32.gmra.mxu0 %v604
      %v932 = vpop.f32.mrf.mxu0
      %v933 = vadd.f32 0.0, %v932
      %934 = vmatmul.f32.gmra.mxu0 %v606
      %v935 = vpop.f32.mrf.mxu0
      %v936 = vadd.f32 0.0, %v935
      %937 = vmatmul.f32.gmra.mxu0 %v608
      %v938 = vpop.f32.mrf.mxu0
      %v939 = vadd.f32 0.0, %v938
      %940 = vmatmul.f32.gmra.mxu0 %v610
      %v941 = vpop.f32.mrf.mxu0
      %v942 = vadd.f32 0.0, %v941
      %943 = vmatmul.f32.gmra.mxu0 %v612
      %v944 = vpop.f32.mrf.mxu0
      %v945 = vadd.f32 0.0, %v944
      %946 = vmatmul.f32.gmra.mxu0 %v614
      %v947 = vpop.f32.mrf.mxu0
      %v948 = vadd.f32 0.0, %v947
      %949 = vmatmul.f32.gmra.mxu0 %v616
      %v950 = vpop.f32.mrf.mxu0
      %v951 = vadd.f32 0.0, %v950
      %952 = vmatmul.f32.gmra.mxu0 %v618
      %v953 = vpop.f32.mrf.mxu0
      %v954 = vadd.f32 0.0, %v953
      %955 = vmatmul.f32.gmra.mxu0 %v620
      %v956 = vpop.f32.mrf.mxu0
      %v957 = vadd.f32 0.0, %v956
      %958 = vmatmul.f32.gmra.mxu0 %v622
      %v959 = vpop.f32.mrf.mxu0
      %v960 = vadd.f32 0.0, %v959
      %961 = vmatmul.f32.gmra.mxu0 %v624
      %v962 = vpop.f32.mrf.mxu0
      %v963 = vadd.f32 0.0, %v962
      %964 = vmatmul.f32.gmra.mxu0 %v899
      %v965 = vpop.f32.mrf.mxu0
      %v966 = vadd.f32 0.0, %v965
      %967 = vmatmul.f32.gmra.mxu0 %v901
      %v968 = vpop.f32.mrf.mxu0
      %v969 = vadd.f32 0.0, %v968
      %970 = vdwg.mxu0
      %v971 = vadd.f32 %v878, %v924
      %v972 = vadd.f32 %v879, %v927
      %v973 = vadd.f32 %v880, %v930
      %v974 = vadd.f32 %v881, %v933
      %v975 = vadd.f32 %v882, %v936
      %v976 = vadd.f32 %v883, %v939
      %v977 = vadd.f32 %v884, %v942
      %v978 = vadd.f32 %v885, %v945
      %v979 = vadd.f32 %v886, %v948
      %v980 = vadd.f32 %v887, %v951
      %v981 = vadd.f32 %v888, %v954
      %v982 = vadd.f32 %v889, %v957
      %v983 = vadd.f32 %v890, %v960
      %v984 = vadd.f32 %v891, %v963
      %v985 = vadd.f32 %v892, %v966
      %v986 = vadd.f32 %v893, %v969
      %v988 = vsel %vm351, %v274, 0
      %v991 = vsel %vm351, %v275, 0
      %v994 = vsel %vm384, %v283, 0
      %996 = vmatpush.msra.mxu0 0.0
      %997 = vmatpush.msra.mxu0 0.0
      %998 = vmatpush.msra.mxu0 0.0
      %999 = vmatpush.msra.mxu0 0.0
      %1000 = vmatpush.msra.mxu0 0.0
      %1001 = vmatpush.msra.mxu0 0.0
      %1002 = vmatpush.msra.mxu0 0.0
      %1003 = vmatpush.msra.mxu0 0.0
      %1004 = vmatpush.msra.mxu0 0.0
      %1005 = vmatpush.msra.mxu0 0.0
      %1006 = vmatpush.msra.mxu0 0.0
      %1007 = vmatpush.msra.mxu0 0.0
      %1008 = vmatpush.msra.mxu0 0.0
      %1009 = vmatpush.msra.mxu0 0.0
      %1010 = vmatpush.msra.mxu0 0.0
      %1011 = vmatpush.msra.mxu0 %v994
      %1012 = vmatmul.f32.gmra.mxu0 %v461
      %v1013 = vpop.f32.mrf.mxu0
      %v1014 = vadd.f32 0.0, %v1013
      %1015 = vmatmul.f32.gmra.mxu0 %v463
      %v1016 = vpop.f32.mrf.mxu0
      %v1017 = vadd.f32 0.0, %v1016
      %1018 = vmatmul.f32.gmra.mxu0 %v465
      %v1019 = vpop.f32.mrf.mxu0
      %v1020 = vadd.f32 0.0, %v1019
      %1021 = vmatmul.f32.gmra.mxu0 %v467
      %v1022 = vpop.f32.mrf.mxu0
      %v1023 = vadd.f32 0.0, %v1022
      %1024 = vmatmul.f32.gmra.mxu0 %v469
      %v1025 = vpop.f32.mrf.mxu0
      %v1026 = vadd.f32 0.0, %v1025
      %1027 = vmatmul.f32.gmra.mxu0 %v471
      %v1028 = vpop.f32.mrf.mxu0
      %v1029 = vadd.f32 0.0, %v1028
      %1030 = vmatmul.f32.gmra.mxu0 %v473
      %v1031 = vpop.f32.mrf.mxu0
      %v1032 = vadd.f32 0.0, %v1031
      %1033 = vmatmul.f32.gmra.mxu0 %v475
      %v1034 = vpop.f32.mrf.mxu0
      %v1035 = vadd.f32 0.0, %v1034
      %1036 = vmatmul.f32.gmra.mxu0 %v477
      %v1037 = vpop.f32.mrf.mxu0
      %v1038 = vadd.f32 0.0, %v1037
      %1039 = vmatmul.f32.gmra.mxu0 %v479
      %v1040 = vpop.f32.mrf.mxu0
      %v1041 = vadd.f32 0.0, %v1040
      %1042 = vmatmul.f32.gmra.mxu0 %v481
      %v1043 = vpop.f32.mrf.mxu0
      %v1044 = vadd.f32 0.0, %v1043
      %1045 = vmatmul.f32.gmra.mxu0 %v483
      %v1046 = vpop.f32.mrf.mxu0
      %v1047 = vadd.f32 0.0, %v1046
      %1048 = vmatmul.f32.gmra.mxu0 %v711
      %v1049 = vpop.f32.mrf.mxu0
      %v1050 = vadd.f32 0.0, %v1049
      %1051 = vmatmul.f32.gmra.mxu0 %v714
      %v1052 = vpop.f32.mrf.mxu0
      %v1053 = vadd.f32 0.0, %v1052
      %1054 = vmatmul.f32.gmra.mxu0 %v988
      %v1055 = vpop.f32.mrf.mxu0
      %v1056 = vadd.f32 0.0, %v1055
      %1057 = vmatmul.f32.gmra.mxu0 %v991
      %v1058 = vpop.f32.mrf.mxu0
      %v1059 = vadd.f32 0.0, %v1058
      %1060 = vdwg.mxu0
      %v1061 = vadd.f32 %v971, %v1014
      %v1062 = vadd.f32 %v972, %v1017
      %v1063 = vadd.f32 %v973, %v1020
      %v1064 = vadd.f32 %v974, %v1023
      %v1065 = vadd.f32 %v975, %v1026
      %v1066 = vadd.f32 %v976, %v1029
      %v1067 = vadd.f32 %v977, %v1032
      %v1068 = vadd.f32 %v978, %v1035
      %v1069 = vadd.f32 %v979, %v1038
      %v1070 = vadd.f32 %v980, %v1041
      %v1071 = vadd.f32 %v981, %v1044
      %v1072 = vadd.f32 %v982, %v1047
      %v1073 = vadd.f32 %v983, %v1050
      %v1074 = vadd.f32 %v984, %v1053
      %v1075 = vadd.f32 %v985, %v1056
      %v1076 = vadd.f32 %v986, %v1059
      %v1078 = vrot.slane %v274, 1
      %v1079 = vrot.slane %v275, 1
      %v1080 = vsel %vm310, %v1078, %v1079
      %v1081 = vrot.slane %v276, 1
      %v1082 = vsel %vm310, %v1079, %v1081
      %v1083 = vsel %vm351, %v1080, 0
      %v1085 = vsel %vm351, %v1082, 0
      %v1088 = vsel %vm384, %v284, 0
      %1090 = vmatpush.msra.mxu0 0.0
      %1091 = vmatpush.msra.mxu0 0.0
      %1092 = vmatpush.msra.mxu0 0.0
      %1093 = vmatpush.msra.mxu0 0.0
      %1094 = vmatpush.msra.mxu0 0.0
      %1095 = vmatpush.msra.mxu0 0.0
      %1096 = vmatpush.msra.mxu0 0.0
      %1097 = vmatpush.msra.mxu0 0.0
      %1098 = vmatpush.msra.mxu0 0.0
      %1099 = vmatpush.msra.mxu0 0.0
      %1100 = vmatpush.msra.mxu0 0.0
      %1101 = vmatpush.msra.mxu0 0.0
      %1102 = vmatpush.msra.mxu0 0.0
      %1103 = vmatpush.msra.mxu0 0.0
      %1104 = vmatpush.msra.mxu0 0.0
      %1105 = vmatpush.msra.mxu0 %v1088
      %1106 = vmatmul.f32.gmra.mxu0 %v360
      %v1107 = vpop.f32.mrf.mxu0
      %v1108 = vadd.f32 0.0, %v1107
      %1109 = vmatmul.f32.gmra.mxu0 %v362
      %v1110 = vpop.f32.mrf.mxu0
      %v1111 = vadd.f32 0.0, %v1110
      %1112 = vmatmul.f32.gmra.mxu0 %v364
      %v1113 = vpop.f32.mrf.mxu0
      %v1114 = vadd.f32 0.0, %v1113
      %1115 = vmatmul.f32.gmra.mxu0 %v366
      %v1116 = vpop.f32.mrf.mxu0
      %v1117 = vadd.f32 0.0, %v1116
      %1118 = vmatmul.f32.gmra.mxu0 %v368
      %v1119 = vpop.f32.mrf.mxu0
      %v1120 = vadd.f32 0.0, %v1119
      %1121 = vmatmul.f32.gmra.mxu0 %v370
      %v1122 = vpop.f32.mrf.mxu0
      %v1123 = vadd.f32 0.0, %v1122
      %1124 = vmatmul.f32.gmra.mxu0 %v372
      %v1125 = vpop.f32.mrf.mxu0
      %v1126 = vadd.f32 0.0, %v1125
      %1127 = vmatmul.f32.gmra.mxu0 %v374
      %v1128 = vpop.f32.mrf.mxu0
      %v1129 = vadd.f32 0.0, %v1128
      %1130 = vmatmul.f32.gmra.mxu0 %v376
      %v1131 = vpop.f32.mrf.mxu0
      %v1132 = vadd.f32 0.0, %v1131
      %1133 = vmatmul.f32.gmra.mxu0 %v378
      %v1134 = vpop.f32.mrf.mxu0
      %v1135 = vadd.f32 0.0, %v1134
      %1136 = vmatmul.f32.gmra.mxu0 %v380
      %v1137 = vpop.f32.mrf.mxu0
      %v1138 = vadd.f32 0.0, %v1137
      %1139 = vmatmul.f32.gmra.mxu0 %v382
      %v1140 = vpop.f32.mrf.mxu0
      %v1141 = vadd.f32 0.0, %v1140
      %1142 = vmatmul.f32.gmra.mxu0 %v806
      %v1143 = vpop.f32.mrf.mxu0
      %v1144 = vadd.f32 0.0, %v1143
      %1145 = vmatmul.f32.gmra.mxu0 %v808
      %v1146 = vpop.f32.mrf.mxu0
      %v1147 = vadd.f32 0.0, %v1146
      %1148 = vmatmul.f32.gmra.mxu0 %v1083
      %v1149 = vpop.f32.mrf.mxu0
      %v1150 = vadd.f32 0.0, %v1149
      %1151 = vmatmul.f32.gmra.mxu0 %v1085
      %v1152 = vpop.f32.mrf.mxu0
      %v1153 = vadd.f32 0.0, %v1152
      %1154 = vdwg.mxu0
      %v1155 = vadd.f32 %v1061, %v1108
      %v1156 = vadd.f32 %v1062, %v1111
      %v1157 = vadd.f32 %v1063, %v1114
      %v1158 = vadd.f32 %v1064, %v1117
      %v1159 = vadd.f32 %v1065, %v1120
      %v1160 = vadd.f32 %v1066, %v1123
      %v1161 = vadd.f32 %v1067, %v1126
      %v1162 = vadd.f32 %v1068, %v1129
      %v1163 = vadd.f32 %v1069, %v1132
      %v1164 = vadd.f32 %v1070, %v1135
      %v1165 = vadd.f32 %v1071, %v1138
      %v1166 = vadd.f32 %v1072, %v1141
      %v1167 = vadd.f32 %v1073, %v1144
      %v1168 = vadd.f32 %v1074, %v1147
      %v1169 = vadd.f32 %v1075, %v1150
      %v1170 = vadd.f32 %v1076, %v1153
      %v1171 = vrot.slane %v274, 2
      %v1172 = vrot.slane %v275, 2
      %v1173 = vsel %vm553, %v1171, %v1172
      %v1174 = vrot.slane %v276, 2
      %v1175 = vsel %vm553, %v1172, %v1174
      %v1176 = vsel %vm351, %v1173, 0
      %v1178 = vsel %vm351, %v1175, 0
      %v1181 = vsel %vm384, %v285, 0
      %1183 = vmatpush.msra.mxu0 0.0
      %1184 = vmatpush.msra.mxu0 0.0
      %1185 = vmatpush.msra.mxu0 0.0
      %1186 = vmatpush.msra.mxu0 0.0
      %1187 = vmatpush.msra.mxu0 0.0
      %1188 = vmatpush.msra.mxu0 0.0
      %1189 = vmatpush.msra.mxu0 0.0
      %1190 = vmatpush.msra.mxu0 0.0
      %1191 = vmatpush.msra.mxu0 0.0
      %1192 = vmatpush.msra.mxu0 0.0
      %1193 = vmatpush.msra.mxu0 0.0
      %1194 = vmatpush.msra.mxu0 0.0
      %1195 = vmatpush.msra.mxu0 0.0
      %1196 = vmatpush.msra.mxu0 0.0
      %1197 = vmatpush.msra.mxu0 0.0
      %1198 = vmatpush.msra.mxu0 %v1181
      %1199 = vmatmul.f32.gmra.mxu0 %v602
      %v1200 = vpop.f32.mrf.mxu0
      %v1201 = vadd.f32 0.0, %v1200
      %1202 = vmatmul.f32.gmra.mxu0 %v604
      %v1203 = vpop.f32.mrf.mxu0
      %v1204 = vadd.f32 0.0, %v1203
      %1205 = vmatmul.f32.gmra.mxu0 %v606
      %v1206 = vpop.f32.mrf.mxu0
      %v1207 = vadd.f32 0.0, %v1206
      %1208 = vmatmul.f32.gmra.mxu0 %v608
      %v1209 = vpop.f32.mrf.mxu0
      %v1210 = vadd.f32 0.0, %v1209
      %1211 = vmatmul.f32.gmra.mxu0 %v610
      %v1212 = vpop.f32.mrf.mxu0
      %v1213 = vadd.f32 0.0, %v1212
      %1214 = vmatmul.f32.gmra.mxu0 %v612
      %v1215 = vpop.f32.mrf.mxu0
      %v1216 = vadd.f32 0.0, %v1215
      %1217 = vmatmul.f32.gmra.mxu0 %v614
      %v1218 = vpop.f32.mrf.mxu0
      %v1219 = vadd.f32 0.0, %v1218
      %1220 = vmatmul.f32.gmra.mxu0 %v616
      %v1221 = vpop.f32.mrf.mxu0
      %v1222 = vadd.f32 0.0, %v1221
      %1223 = vmatmul.f32.gmra.mxu0 %v618
      %v1224 = vpop.f32.mrf.mxu0
      %v1225 = vadd.f32 0.0, %v1224
      %1226 = vmatmul.f32.gmra.mxu0 %v620
      %v1227 = vpop.f32.mrf.mxu0
      %v1228 = vadd.f32 0.0, %v1227
      %1229 = vmatmul.f32.gmra.mxu0 %v622
      %v1230 = vpop.f32.mrf.mxu0
      %v1231 = vadd.f32 0.0, %v1230
      %1232 = vmatmul.f32.gmra.mxu0 %v624
      %v1233 = vpop.f32.mrf.mxu0
      %v1234 = vadd.f32 0.0, %v1233
      %1235 = vmatmul.f32.gmra.mxu0 %v899
      %v1236 = vpop.f32.mrf.mxu0
      %v1237 = vadd.f32 0.0, %v1236
      %1238 = vmatmul.f32.gmra.mxu0 %v901
      %v1239 = vpop.f32.mrf.mxu0
      %v1240 = vadd.f32 0.0, %v1239
      %1241 = vmatmul.f32.gmra.mxu0 %v1176
      %v1242 = vpop.f32.mrf.mxu0
      %v1243 = vadd.f32 0.0, %v1242
      %1244 = vmatmul.f32.gmra.mxu0 %v1178
      %v1245 = vpop.f32.mrf.mxu0
      %v1246 = vadd.f32 0.0, %v1245
      %1247 = vdwg.mxu0
      %v1248 = vadd.f32 %v1155, %v1201
      %v1249 = vadd.f32 %v1156, %v1204
      %v1250 = vadd.f32 %v1157, %v1207
      %v1251 = vadd.f32 %v1158, %v1210
      %v1252 = vadd.f32 %v1159, %v1213
      %v1253 = vadd.f32 %v1160, %v1216
      %v1254 = vadd.f32 %v1161, %v1219
      %v1255 = vadd.f32 %v1162, %v1222
      %v1256 = vadd.f32 %v1163, %v1225
      %v1257 = vadd.f32 %v1164, %v1228
      %v1258 = vadd.f32 %v1165, %v1231
      %v1259 = vadd.f32 %v1166, %v1234
      %v1260 = vadd.f32 %v1167, %v1237
      %v1261 = vadd.f32 %v1168, %v1240
      %v1262 = vadd.f32 %v1169, %v1243
      %v1263 = vadd.f32 %v1170, %v1246
      %v1264 = vld [vmem:[%s2] sm:$0x1]
      %v1266 = vperm.slane %v1264, 0
      %v1268 = vadd.f32 %v1248, %v1266
      %v1269 = vadd.f32 %v1249, %v1266
      %v1270 = vadd.f32 %v1250, %v1266
      %v1271 = vadd.f32 %v1251, %v1266
      %v1272 = vadd.f32 %v1252, %v1266
      %v1273 = vadd.f32 %v1253, %v1266
      %v1274 = vadd.f32 %v1254, %v1266
      %v1275 = vadd.f32 %v1255, %v1266
      %v1276 = vadd.f32 %v1256, %v1266
      %v1277 = vadd.f32 %v1257, %v1266
      %v1278 = vadd.f32 %v1258, %v1266
      %v1279 = vadd.f32 %v1259, %v1266
      %v1280 = vadd.f32 %v1260, %v1266
      %v1281 = vadd.f32 %v1261, %v1266
      %v1282 = vadd.f32 %v1262, %v1266
      %v1283 = vadd.f32 %v1263, %v1266
      %v1284 = vmax.f32 %v1268, 0.0
      %v1285 = vmax.f32 %v1269, 0.0
      %v1286 = vmax.f32 %v1270, 0.0
      %v1287 = vmax.f32 %v1271, 0.0
      %v1288 = vmax.f32 %v1272, 0.0
      %v1289 = vmax.f32 %v1273, 0.0
      %v1290 = vmax.f32 %v1274, 0.0
      %v1291 = vmax.f32 %v1275, 0.0
      %v1292 = vmax.f32 %v1276, 0.0
      %v1293 = vmax.f32 %v1277, 0.0
      %v1294 = vmax.f32 %v1278, 0.0
      %v1295 = vmax.f32 %v1279, 0.0
      %v1296 = vmax.f32 %v1280, 0.0
      %v1297 = vmax.f32 %v1281, 0.0
      %v1298 = vmax.f32 %v1282, 0.0
      %v1299 = vmax.f32 %v1283, 0.0
      %1300 = vst.msk [vmem:[%s234] sm:$0xff] %vm351, %v1284
      %1301 = vst.msk [vmem:[%s234 + $0x8] sm:$0xff] %vm351, %v1285
      %1302 = vst.msk [vmem:[%s234 + $0x10] sm:$0xff] %vm351, %v1286
      %1303 = vst.msk [vmem:[%s234 + $0x18] sm:$0xff] %vm351, %v1287
      %1304 = vst.msk [vmem:[%s234 + $0x20] sm:$0xff] %vm351, %v1288
      %1305 = vst.msk [vmem:[%s234 + $0x28] sm:$0xff] %vm351, %v1289
      %1306 = vst.msk [vmem:[%s234 + $0x30] sm:$0xff] %vm351, %v1290
      %1307 = vst.msk [vmem:[%s234 + $0x38] sm:$0xff] %vm351, %v1291
      %1308 = vst.msk [vmem:[%s234 + $0x40] sm:$0xff] %vm351, %v1292
      %1309 = vst.msk [vmem:[%s234 + $0x48] sm:$0xff] %vm351, %v1293
      %1310 = vst.msk [vmem:[%s234 + $0x50] sm:$0xff] %vm351, %v1294
      %1311 = vst.msk [vmem:[%s234 + $0x58] sm:$0xff] %vm351, %v1295
      %1312 = vst.msk [vmem:[%s234 + $0x60] sm:$0xff] %vm351, %v1296
      %1313 = vst.msk [vmem:[%s234 + $0x68] sm:$0xff] %vm351, %v1297
      %1314 = vst.msk [vmem:[%s234 + $0x70] sm:$0xff] %vm351, %v1298
      %1315 = vst.msk [vmem:[%s234 + $0x78] sm:$0xff] %vm351, %v1299
      %v1316 = vsel %vm351, %v1284, 0.0
      %v1317 = vsel %vm351, %v1285, 0.0
      %v1318 = vadd.f32 %v1316, %v1317
      %v1319 = vsel %vm351, %v1286, 0.0
      %v1320 = vadd.f32 %v1318, %v1319
      %v1321 = vsel %vm351, %v1287, 0.0
      %v1322 = vadd.f32 %v1320, %v1321
      %v1323 = vsel %vm351, %v1288, 0.0
      %v1324 = vadd.f32 %v1322, %v1323
      %v1325 = vsel %vm351, %v1289, 0.0
      %v1326 = vadd.f32 %v1324, %v1325
      %v1327 = vsel %vm351, %v1290, 0.0
      %v1328 = vadd.f32 %v1326, %v1327
      %v1329 = vsel %vm351, %v1291, 0.0
      %v1330 = vadd.f32 %v1328, %v1329
      %v1331 = vsel %vm351, %v1292, 0.0
      %v1332 = vadd.f32 %v1330, %v1331
      %v1333 = vsel %vm351, %v1293, 0.0
      %v1334 = vadd.f32 %v1332, %v1333
      %v1335 = vsel %vm351, %v1294, 0.0
      %v1336 = vadd.f32 %v1334, %v1335
      %v1337 = vsel %vm351, %v1295, 0.0
      %v1338 = vadd.f32 %v1336, %v1337
      %v1339 = vsel %vm351, %v1296, 0.0
      %v1340 = vadd.f32 %v1338, %v1339
      %v1341 = vsel %vm351, %v1297, 0.0
      %v1342 = vadd.f32 %v1340, %v1341
      %v1343 = vsel %vm351, %v1298, 0.0
      %v1344 = vadd.f32 %v1342, %v1343
      %v1345 = vsel %vm351, %v1299, 0.0
      %v1346 = vadd.f32 %v1344, %v1345
      %v1347 = vrot.slane %v1346, 4
      %v1348 = vadd.f32 %v1346, %v1347
      %v1349 = vrot.slane %v1348, 2
      %v1350 = vadd.f32 %v1348, %v1349
      %v1351 = vrot.slane %v1350, 1
      %v1352 = vadd.f32 %v1350, %v1351
      %v1353 = vmul.f32 %v1284, %v1284
      %v1354 = vmul.f32 %v1285, %v1285
      %v1355 = vmul.f32 %v1286, %v1286
      %v1356 = vmul.f32 %v1287, %v1287
      %v1357 = vmul.f32 %v1288, %v1288
      %v1358 = vmul.f32 %v1289, %v1289
      %v1359 = vmul.f32 %v1290, %v1290
      %v1360 = vmul.f32 %v1291, %v1291
      %v1361 = vmul.f32 %v1292, %v1292
      %v1362 = vmul.f32 %v1293, %v1293
      %v1363 = vmul.f32 %v1294, %v1294
      %v1364 = vmul.f32 %v1295, %v1295
      %v1365 = vmul.f32 %v1296, %v1296
      %v1366 = vmul.f32 %v1297, %v1297
      %v1367 = vmul.f32 %v1298, %v1298
      %v1368 = vmul.f32 %v1299, %v1299
      %v1369 = vsel %vm351, %v1353, 0.0
      %v1370 = vsel %vm351, %v1354, 0.0
      %v1371 = vadd.f32 %v1369, %v1370
      %v1372 = vsel %vm351, %v1355, 0.0
      %v1373 = vadd.f32 %v1371, %v1372
      %v1374 = vsel %vm351, %v1356, 0.0
      %v1375 = vadd.f32 %v1373, %v1374
      %v1376 = vsel %vm351, %v1357, 0.0
      %v1377 = vadd.f32 %v1375, %v1376
      %v1378 = vsel %vm351, %v1358, 0.0
      %v1379 = vadd.f32 %v1377, %v1378
      %v1380 = vsel %vm351, %v1359, 0.0
      %v1381 = vadd.f32 %v1379, %v1380
      %v1382 = vsel %vm351, %v1360, 0.0
      %v1383 = vadd.f32 %v1381, %v1382
      %v1384 = vsel %vm351, %v1361, 0.0
      %v1385 = vadd.f32 %v1383, %v1384
      %v1386 = vsel %vm351, %v1362, 0.0
      %v1387 = vadd.f32 %v1385, %v1386
      %v1388 = vsel %vm351, %v1363, 0.0
      %v1389 = vadd.f32 %v1387, %v1388
      %v1390 = vsel %vm351, %v1364, 0.0
      %v1391 = vadd.f32 %v1389, %v1390
      %v1392 = vsel %vm351, %v1365, 0.0
      %v1393 = vadd.f32 %v1391, %v1392
      %v1394 = vsel %vm351, %v1366, 0.0
      %v1395 = vadd.f32 %v1393, %v1394
      %v1396 = vsel %vm351, %v1367, 0.0
      %v1397 = vadd.f32 %v1395, %v1396
      %v1398 = vsel %vm351, %v1368, 0.0
      %v1399 = vadd.f32 %v1397, %v1398
      %v1400 = vrot.slane %v1399, 4
      %v1401 = vadd.f32 %v1399, %v1400
      %v1402 = vrot.slane %v1401, 2
      %v1403 = vadd.f32 %v1401, %v1402
      %v1404 = vrot.slane %v1403, 1
      %v1405 = vadd.f32 %v1403, %v1404
      %vm1406 = vcmask 1040384
      %v1407 = vsel %vm1406, %v1352, %v1405
      %vm1408 = vcmask 25600
      %1409 = vst.msk [vmem:[%s243] sm:$0x3] %vm1408, %v1407
      %s1410 = smul.u32 8, %s21
      %p1411 = scmp.lt.s32.totalorder %s20, 1
      %s1412 = scalar_select %p1411, %s20, 1
      %p1413 = scmp.lt.s32.totalorder %s1410, 15
      %s1414 = scalar_select %p1413, %s1410, 15
      %s1415 = smul.addr %s1414, 2
      %s1416 = smul.addr %s1412, 32
      %s1417 = sadd.s32 %s1415, %s1416
      %s1418 = smul.addr %s1417, 8
      %s1419 = scalar_lea.vmem %s3, %s1418
      %p1420 = scmp.lt.s32.totalorder %s20, 1
      %s1421 = scalar_select %p1420, %s20, 1
      %p1422 = scmp.lt.s32.totalorder %s21, 1
      %s1423 = scalar_select %p1422, %s21, 1
      %s1424 = smul.addr %s1421, 2
      %s1425 = sadd.s32 %s1423, %s1424
      %s1426 = smul.addr %s1425, 2
      %s1427 = scalar_lea.vmem %s4, %s1426
      // Predicated region
      $region33: #{resblock_forward.7} parent=31 // pred_check
        %p1428 = pneg %p116
      $region34: #{resblock_forward.7} parent=31 // pred_check_branch
        %1430 = sbr.rel (%p1428) target = $region36
      $region35: #{resblock_forward.7} parent=31 // pred_region
        %s1431 = smul.u32 8, %s21
      $region36: #{resblock_forward.7} parent=31 // pred_fallthru
        _
      // Predicated region
      $region37: #{resblock_forward.7} parent=31 // pred_check
        %p1432 = pneg %p144
      $region38: #{resblock_forward.7} parent=31 // pred_check_branch
        %1434 = sbr.rel (%p1432) target = $region40
      $region39: #{resblock_forward.7} parent=31 // pred_region
        _
      $region40: #{resblock_forward.7} parent=31 // pred_fallthru
        _
    $region32: #{resblock_forward.7} parent=5 // pred_fallthru
      _
    %p1435 = scmp.le.s32.totalorder 2, %s11
    // Predicated region
    $region41: #{resblock_forward.7} parent=5 // pred_check
      %p1436 = pneg %p1435
    $region42: #{resblock_forward.7} parent=5 // pred_check_branch
      %1438 = sbr.rel (%p1436) target = $region44
    $region43: #{resblock_forward.7} parent=5 // pred_region
      %s1439 = ssub.s32 %s11, 2
      // Predicated region
      $region45: #{resblock_forward.7} parent=43 // pred_check
        %p1440 = pneg %p122
      $region46: #{resblock_forward.7} parent=43 // pred_check_branch
        %1442 = sbr.rel (%p1440) target = $region48
      $region47: #{resblock_forward.7} parent=43 // pred_region
        %s1443 = smul.u32 8, %s23
        %p1444 = scmp.lt.s32.totalorder %s22, 1
        %s1445 = scalar_select %p1444, %s22, 1
        %p1446 = scmp.lt.s32.totalorder %s1443, 15
        %s1447 = scalar_select %p1446, %s1443, 15
        %s1448 = smul.addr %s1447, 2
        %s1449 = smul.addr %s1445, 32
        %s1450 = sadd.s32 %s1448, %s1449
        %s1451 = smul.addr %s1450, 8
        %s1452 = scalar_lea.vmem %s3, %s1451
      $region48: #{resblock_forward.7} parent=43 // pred_fallthru
        _
      // Predicated region
      $region49: #{resblock_forward.7} parent=43 // pred_check
        %p1453 = pneg %p150
      $region50: #{resblock_forward.7} parent=43 // pred_check_branch
        %1455 = sbr.rel (%p1453) target = $region52
      $region51: #{resblock_forward.7} parent=43 // pred_region
        %p1456 = scmp.lt.s32.totalorder %s22, 1
        %s1457 = scalar_select %p1456, %s22, 1
        %p1458 = scmp.lt.s32.totalorder %s23, 1
        %s1459 = scalar_select %p1458, %s23, 1
        %s1460 = smul.addr %s1457, 2
        %s1461 = sadd.s32 %s1459, %s1460
        %s1462 = smul.addr %s1461, 2
        %s1463 = scalar_lea.vmem %s4, %s1462
      $region52: #{resblock_forward.7} parent=43 // pred_fallthru
        _
    $region44: #{resblock_forward.7} parent=5 // pred_fallthru
      _
  $region6: #{resblock_forward.7} parent=0 // loop_footer
    %s15 = sadd.s32 1, %s11
  $region7: #{resblock_forward.7} parent=0 // loop_footer_branch
    %10 = sbr.rel target = $region3
  $region8: #{resblock_forward.7} parent=0 // loop_exit
    _

// kernel: resblock_forward.8
$region0: #{resblock_forward.8}
  #allocation0 [shape = 'u32[]', space=smem, size = 0x4, offset = 0x4, fixed_abs, tag = 'smem constant byte address 0x4 - core index']
  #allocation1 [shape = 'u32[72,128]{1,0:T(1,128)}', space=vmem, size = 0x9000, scoped, tag = 'internal scratch']
  %s0 = inlined_call_operand.vmem [shape: f32[2,18,18,4], index: 0, kind: input, shape index: {}]
  %s1 = inlined_call_operand.vmem [shape: f32[3,3,4,4], index: 1, kind: input, shape index: {}]
  %s2 = inlined_call_operand.vmem [shape: f32[1,4], index: 2, kind: input, shape index: {}]
  %s3 = inlined_call_operand.vmem [shape: f32[1,1,4], index: 3, kind: input, shape index: {}]
  %s4 = inlined_call_operand.vmem [shape: f32[1,1,4], index: 4, kind: input, shape index: {}]
  %s5 = inlined_call_operand.vmem [shape: f32[2,16,16,4], index: 5, kind: output, shape index: {}]
  %s6 = sld [smem:[#allocation0]]
  $region53: #{resblock_forward.8} parent=0
    _
  %s8 = ssub.s32 1, %s6
  %s9 = scalar_select 0, %s8, %s6
  loop: start=0, step=1, limit=6
  $region2: #{resblock_forward.8} parent=0 // loop_pre_header
    _
  $region3: #{resblock_forward.8} parent=0 // loop_header
    %s11 = sphi 0, %s15
    %p12 = scmp.ge.s32.totalorder %s11, 6
    %s18 = sphi 0, %s30
    %s19 = sphi 0, %s26
    %s20 = sphi 0, %s18
    %s21 = sphi 0, %s19
    %s22 = sphi 0, %s20
    %s23 = sphi 0, %s21
    %s33 = sphi 0, %s35
    %s36 = sphi 0, %s33
    %s37 = sphi 0, %s36
    %s53 = sphi 0, %s37
    %s57 = sphi 0, %s57
    %s59 = sphi 0, %s57
    %s60 = sphi 0, %s59
    %s74 = sphi 0, %s60
    %s78 = sphi 0, %s78
    %s80 = sphi 0, %s78
    %s81 = sphi 0, %s80
    %s95 = sphi 0, %s81
    %s99 = sphi 0, %s99
    %s101 = sphi 0, %s99
    %s102 = sphi 0, %s101
    %s116 = sphi 0, %s102
    %s120 = sphi 0, %s120
    %s122 = sphi 0, %s120
    %s123 = sphi 0, %s122
    %s137 = sphi 0, %s123
    %s145 = sphi 0, %s147
    %s148 = sphi 0, %s145
    %s149 = sphi 0, %s148
    %s165 = sphi 0, %s149
  $region4: #{resblock_forward.8} parent=0 // loop_header_branch
    %14 = sbr.rel (%p12) target = $region8
  $region5: #{resblock_forward.8} parent=0 // loop_body
    %s16 = ssub.s32 %s11, 1
    %s17 = ssub.s32 %s11, 2
    %s24 = sadd.s32 1, %s19
    %p25 = scmp.ge.s32.totalorder %s24, 2
    %s26 = scalar_select %p25, 0, %s24
    %s27 = sadd.s32 1, %s18
    %s28 = scalar_select %p25, %s27, %s18
    %p29 = scmp.ge.s32.totalorder %s28, 2
    %s30 = scalar_select %p29, 0, %s28
    %s31 = ssub.s32 %s18, %s30
    %p32 = scmp.eq.s32.totalorder %s31, 0
    %s34 = sadd.s32 %s33, 1
    %s35 = scalar_select %p32, %s33, %s34
    %p38 = pneg %p32
    %p39 = scmp.eq.s32.totalorder %s11, 3
    %p40 = por %p38, %p39
    %p41 = scmp.ne.s32.totalorder %s33, %s36
    %p42 = scmp.eq.s32.totalorder %s11, 0
    %p43 = por %p41, %p42
    %p44 = scmp.ne.s32.totalorder %s33, %s36
    %p45 = scmp.eq.s32.totalorder %s16, 3
    %p46 = por %p44, %p45
    %p47 = scmp.ne.s32.totalorder %s36, %s37
    %p48 = scmp.eq.s32.totalorder %s16, 0
    %p49 = por %p47, %p48
    %p50 = scmp.ne.s32.totalorder %s36, %s37
    %p51 = scmp.eq.s32.totalorder %s17, 3
    %p52 = por %p50, %p51
    %p54 = scmp.ne.s32.totalorder %s37, %s53
    %p55 = scmp.eq.s32.totalorder %s17, 0
    %p56 = por %p54, %p55
    %s58 = sadd.s32 %s57, 1
    %p61 = scmp.eq.s32.totalorder %s11, 3
    %p62 = scmp.ne.s32.totalorder %s57, %s59
    %p63 = scmp.eq.s32.totalorder %s11, 0
    %p64 = por %p62, %p63
    %p65 = scmp.ne.s32.totalorder %s57, %s59
    %p66 = scmp.eq.s32.totalorder %s16, 3
    %p67 = por %p65, %p66
    %p68 = scmp.ne.s32.totalorder %s59, %s60
    %p69 = scmp.eq.s32.totalorder %s16, 0
    %p70 = por %p68, %p69
    %p71 = scmp.ne.s32.totalorder %s59, %s60
    %p72 = scmp.eq.s32.totalorder %s17, 3
    %p73 = por %p71, %p72
    %p75 = scmp.ne.s32.totalorder %s60, %s74
    %p76 = scmp.eq.s32.totalorder %s17, 0
    %p77 = por %p75, %p76
    %s79 = sadd.s32 %s78, 1
    %p82 = scmp.eq.s32.totalorder %s11, 3
    %p83 = scmp.ne.s32.totalorder %s78, %s80
    %p84 = scmp.eq.s32.totalorder %s11, 0
    %p85 = por %p83, %p84
    %p86 = scmp.ne.s32.totalorder %s78, %s80
    %p87 = scmp.eq.s32.totalorder %s16, 3
    %p88 = por %p86, %p87
    %p89 = scmp.ne.s32.totalorder %s80, %s81
    %p90 = scmp.eq.s32.totalorder %s16, 0
    %p91 = por %p89, %p90
    %p92 = scmp.ne.s32.totalorder %s80, %s81
    %p93 = scmp.eq.s32.totalorder %s17, 3
    %p94 = por %p92, %p93
    %p96 = scmp.ne.s32.totalorder %s81, %s95
    %p97 = scmp.eq.s32.totalorder %s17, 0
    %p98 = por %p96, %p97
    %s100 = sadd.s32 %s99, 1
    %p103 = scmp.eq.s32.totalorder %s11, 3
    %p104 = scmp.ne.s32.totalorder %s99, %s101
    %p105 = scmp.eq.s32.totalorder %s11, 0
    %p106 = por %p104, %p105
    %p107 = scmp.ne.s32.totalorder %s99, %s101
    %p108 = scmp.eq.s32.totalorder %s16, 3
    %p109 = por %p107, %p108
    %p110 = scmp.ne.s32.totalorder %s101, %s102
    %p111 = scmp.eq.s32.totalorder %s16, 0
    %p112 = por %p110, %p111
    %p113 = scmp.ne.s32.totalorder %s101, %s102
    %p114 = scmp.eq.s32.totalorder %s17, 3
    %p115 = por %p113, %p114
    %p117 = scmp.ne.s32.totalorder %s102, %s116
    %p118 = scmp.eq.s32.totalorder %s17, 0
    %p119 = por %p117, %p118
    %s121 = sadd.s32 %s120, 1
    %p124 = scmp.eq.s32.totalorder %s11, 3
    %p125 = scmp.ne.s32.totalorder %s120, %s122
    %p126 = scmp.eq.s32.totalorder %s11, 0
    %p127 = por %p125, %p126
    %p128 = scmp.ne.s32.totalorder %s120, %s122
    %p129 = scmp.eq.s32.totalorder %s16, 3
    %p130 = por %p128, %p129
    %p131 = scmp.ne.s32.totalorder %s122, %s123
    %p132 = scmp.eq.s32.totalorder %s16, 0
    %p133 = por %p131, %p132
    %p134 = scmp.ne.s32.totalorder %s122, %s123
    %p135 = scmp.eq.s32.totalorder %s17, 3
    %p136 = por %p134, %p135
    %p138 = scmp.ne.s32.totalorder %s123, %s137
    %p139 = scmp.eq.s32.totalorder %s17, 0
    %p140 = por %p138, %p139
    %s141 = ssub.s32 %s18, %s30
    %s142 = ssub.s32 %s19, %s26
    %s143 = sor.u32 %s141, %s142
    %p144 = scmp.eq.s32.totalorder %s143, 0
    %s146 = sadd.s32 %s145, 1
    %s147 = scalar_select %p144, %s145, %s146
    %p150 = pneg %p144
    %p151 = scmp.eq.s32.totalorder %s11, 3
    %p152 = por %p150, %p151
    %p153 = scmp.ne.s32.totalorder %s145, %s148
    %p154 = scmp.eq.s32.totalorder %s11, 0
    %p155 = por %p153, %p154
    %p156 = scmp.ne.s32.totalorder %s145, %s148
    %p157 = scmp.eq.s32.totalorder %s16, 3
    %p158 = por %p156, %p157
    %p159 = scmp.ne.s32.totalorder %s148, %s149
    %p160 = scmp.eq.s32.totalorder %s16, 0
    %p161 = por %p159, %p160
    %p162 = scmp.ne.s32.totalorder %s148, %s149
    %p163 = scmp.eq.s32.totalorder %s17, 3
    %p164 = por %p162, %p163
    %p166 = scmp.ne.s32.totalorder %s149, %s165
    %p167 = scmp.eq.s32.totalorder %s17, 0
    %p168 = por %p166, %p167
    %p169 = scmp.le.s32.totalorder 1, %s11
    %p170 = scmp.lt.s32.totalorder %s11, 5
    %p171 = pnand %p169, %p170
    %p172 = pneg %p171
    // Predicated region
    $region9: #{resblock_forward.8} parent=5 // pred_check
      _
    $region10: #{resblock_forward.8} parent=5 // pred_check_branch
      %174 = sbr.rel (%p171) target = $region12
    $region11: #{resblock_forward.8} parent=5 // pred_region
      %s175 = ssub.s32 %s11, 1
      // Predicated region
      $region13: #{resblock_forward.8} parent=11 // pred_check
        %p176 = pneg %p70
      $region14: #{resblock_forward.8} parent=11 // pred_check_branch
        %178 = sbr.rel (%p176) target = $region16
      $region15: #{resblock_forward.8} parent=11 // pred_region
        _
      $region16: #{resblock_forward.8} parent=11 // pred_fallthru
        _
      // Predicated region
      $region17: #{resblock_forward.8} parent=11 // pred_check
        %p179 = pneg %p91
      $region18: #{resblock_forward.8} parent=11 // pred_check_branch
        %181 = sbr.rel (%p179) target = $region20
      $region19: #{resblock_forward.8} parent=11 // pred_region
        _
      $region20: #{resblock_forward.8} parent=11 // pred_fallthru
        _
      // Predicated region
      $region21: #{resblock_forward.8} parent=11 // pred_check
        %p182 = pneg %p112
      $region22: #{resblock_forward.8} parent=11 // pred_check_branch
        %184 = sbr.rel (%p182) target = $region24
      $region23: #{resblock_forward.8} parent=11 // pred_region
        _
      $region24: #{resblock_forward.8} parent=11 // pred_fallthru
        _
      // Predicated region
      $region25: #{resblock_forward.8} parent=11 // pred_check
        %p185 = pneg %p133
      $region26: #{resblock_forward.8} parent=11 // pred_check_branch
        %187 = sbr.rel (%p185) target = $region28
      $region27: #{resblock_forward.8} parent=11 // pred_region
        _
      $region28: #{resblock_forward.8} parent=11 // pred_fallthru
        _
    $region12: #{resblock_forward.8} parent=5 // pred_fallthru
      _
    %p188 = scmp.lt.s32.totalorder %s11, 4
    // Predicated region
    $region29: #{resblock_forward.8} parent=5 // pred_check
      %p189 = pneg %p188
    $region30: #{resblock_forward.8} parent=5 // pred_check_branch
      %191 = sbr.rel (%p189) target = $region32
    $region31: #{resblock_forward.8} parent=5 // pred_region
      // Predicated region
      $region33: #{resblock_forward.8} parent=31 // pred_check
        %p192 = pneg %p43
      $region34: #{resblock_forward.8} parent=31 // pred_check_branch
        %194 = sbr.rel (%p192) target = $region36
      $region35: #{resblock_forward.8} parent=31 // pred_region
        %p195 = scmp.lt.s32.totalorder %s18, 1
        %s196 = scalar_select %p195, %s18, 1
        %s197 = smul.addr %s196, 54
        %s198 = smul.addr %s197, 8
        %s199 = scalar_lea.vmem %s0, %s198
      $region36: #{resblock_forward.8} parent=31 // pred_fallthru
        _
    $region32: #{resblock_forward.8} parent=5 // pred_fallthru
      _
    %p200 = scmp.le.s32.totalorder 1, %s11
    %p201 = scmp.lt.s32.totalorder %s11, 5
    %p202 = pnand %p200, %p201
    %p203 = pneg %p202
    // Predicated region
    $region37: #{resblock_forward.8} parent=5 // pred_check
      _
    $region38: #{resblock_forward.8} parent=5 // pred_check_branch
      %205 = sbr.rel (%p202) target = $region40
    $region39: #{resblock_forward.8} parent=5 // pred_region
      %s206 = ssub.s32 %s11, 1
      %p207 = scmp.lt.s32.totalorder %s20, 1
      %s208 = scalar_select %p207, %s20, 1
      %s209 = smul.addr %s208, 54
      %s210 = smul.addr %s209, 8
      %s211 = scalar_lea.vmem %s0, %s210
      %p212 = pneg %p49
      %p213 = pneg %p46
      %p214 = pneg %p70
      %p215 = pneg %p67
      %p216 = pneg %p91
      %p217 = pneg %p88
      %p218 = pneg %p112
      %p219 = pneg %p109
      %p220 = pneg %p133
      %p221 = pneg %p130
      %p222 = pneg %p161
      %p223 = pneg %p158
      %s224 = smul.u32 8, %s21
      %p225 = scmp.lt.s32.totalorder %s20, 1
      %s226 = scalar_select %p225, %s20, 1
      %p227 = scmp.lt.s32.totalorder %s224, 15
      %s228 = scalar_select %p227, %s224, 15
      %s229 = smul.addr %s228, 2
      %s230 = smul.addr %s226, 32
      %s231 = sadd.s32 %s229, %s230
      %s232 = smul.addr %s231, 8
      %s233 = scalar_lea.vmem %s5, %s232
      %p234 = scmp.lt.s32.totalorder %s20, 1
      %s235 = scalar_select %p234, %s20, 1
      %s236 = smul.addr %s235, 54
      %s237 = smul.addr %s236, 8
      %s238 = scalar_lea.vmem %s0, %s237
      %s239 = smul.u32 8, %s21
      %p240 = scmp.lt.s32.totalorder %s20, 1
      %s241 = scalar_select %p240, %s20, 1
      %p242 = scmp.lt.s32.totalorder %s239, 15
      %s243 = scalar_select %p242, %s239, 15
      %s244 = smul.addr %s243, 2
      %s245 = smul.addr %s241, 32
      %s246 = sadd.s32 %s244, %s245
      %s247 = smul.addr %s246, 8
      %s248 = scalar_lea.vmem %s5, %s247
      %s249 = smul.u32 8, %s21
      %s250 = smul.u32 %s21, 8
      %s251 = smul.u32 %s250, 24
      %s252 = scalar_lea.vmem %s238, %s251
      %v253 = vld [vmem:[%s252] sm:$0xff]
      %v254 = vld [vmem:[%s252 + $0x8] sm:$0xff]
      %v255 = vld [vmem:[%s252 + $0x10] sm:$0x3]
      %v256 = vld [vmem:[%s252 + $0x18] sm:$0xff]
      %v257 = vld [vmem:[%s252 + $0x20] sm:$0xff]
      %v258 = vld [vmem:[%s252 + $0x28] sm:$0x3]
      %v259 = vld [vmem:[%s252 + $0x30] sm:$0xff]
      %v260 = vld [vmem:[%s252 + $0x38] sm:$0xff]
      %v261 = vld [vmem:[%s252 + $0x40] sm:$0x3]
      %v262 = vld [vmem:[%s252 + $0x48] sm:$0xff]
      %v263 = vld [vmem:[%s252 + $0x50] sm:$0xff]
      %v264 = vld [vmem:[%s252 + $0x58] sm:$0x3]
      %v265 = vld [vmem:[%s252 + $0x60] sm:$0xff]
      %v266 = vld [vmem:[%s252 + $0x68] sm:$0xff]
      %v267 = vld [vmem:[%s252 + $0x70] sm:$0x3]
      %v268 = vld [vmem:[%s252 + $0x78] sm:$0xff]
      %v269 = vld [vmem:[%s252 + $0x80] sm:$0xff]
      %v270 = vld [vmem:[%s252 + $0x88] sm:$0x3]
      %v271 = vld [vmem:[%s252 + $0x90] sm:$0xff]
      %v272 = vld [vmem:[%s252 + $0x98] sm:$0xff]
      %v273 = vld [vmem:[%s252 + $0xa0] sm:$0x3]
      %v274 = vld [vmem:[%s252 + $0xa8] sm:$0xff]
      %v275 = vld [vmem:[%s252 + $0xb0] sm:$0xff]
      %v276 = vld [vmem:[%s252 + $0xb8] sm:$0x3]
      %v277 = vld [vmem:[%s252 + $0xc0] sm:$0xff]
      %v278 = vld [vmem:[%s252 + $0xc8] sm:$0xff]
      %v279 = vld [vmem:[%s252 + $0xd0] sm:$0x3]
      %v280 = vld [vmem:[%s252 + $0xd8] sm:$0xff]
      %v281 = vld [vmem:[%s252 + $0xe0] sm:$0xff]
      %v282 = vld [vmem:[%s252 + $0xe8] sm:$0x3]
      %v283 = vld [vmem:[%s3] sm:$0x1]
      %v285 = vperm.slane %v283, 0
      %v287 = vmul.f32 %v253, %v285
      %v288 = vmul.f32 %v254, %v285
      %v289 = vmul.f32 %v255, %v285
      %v290 = vmul.f32 %v256, %v285
      %v291 = vmul.f32 %v257, %v285
      %v292 = vmul.f32 %v258, %v285
      %v293 = vmul.f32 %v259, %v285
      %v294 = vmul.f32 %v260, %v285
      %v295 = vmul.f32 %v261, %v285
      %v296 = vmul.f32 %v262, %v285
      %v297 = vmul.f32 %v263, %v285
      %v298 = vmul.f32 %v264, %v285
      %v299 = vmul.f32 %v265, %v285
      %v300 = vmul.f32 %v266, %v285
      %v301 = vmul.f32 %v267, %v285
      %v302 = vmul.f32 %v268, %v285
      %v303 = vmul.f32 %v269, %v285
      %v304 = vmul.f32 %v270, %v285
      %v305 = vmul.f32 %v271, %v285
      %v306 = vmul.f32 %v272, %v285
      %v307 = vmul.f32 %v273, %v285
      %v308 = vmul.f32 %v274, %v285
      %v309 = vmul.f32 %v275, %v285
      %v310 = vmul.f32 %v276, %v285
      %v311 = vmul.f32 %v277, %v285
      %v312 = vmul.f32 %v278, %v285
      %v313 = vmul.f32 %v279, %v285
      %v314 = vmul.f32 %v280, %v285
      %v315 = vmul.f32 %v281, %v285
      %v316 = vmul.f32 %v282, %v285
      %v317 = vld [vmem:[%s4] sm:$0x1]
      %v319 = vperm.slane %v317, 0
      %v321 = vadd.f32 %v287, %v319
      %v322 = vadd.f32 %v288, %v319
      %v323 = vadd.f32 %v289, %v319
      %v324 = vadd.f32 %v290, %v319
      %v325 = vadd.f32 %v291, %v319
      %v326 = vadd.f32 %v292, %v319
      %v327 = vadd.f32 %v293, %v319
      %v328 = vadd.f32 %v294, %v319
      %v329 = vadd.f32 %v295, %v319
      %v330 = vadd.f32 %v296, %v319
      %v331 = vadd.f32 %v297, %v319
      %v332 = vadd.f32 %v298, %v319
      %v333 = vadd.f32 %v299, %v319
      %v334 = vadd.f32 %v300, %v319
      %v335 = vadd.f32 %v301, %v319
      %v336 = vadd.f32 %v302, %v319
      %v337 = vadd.f32 %v303, %v319
      %v338 = vadd.f32 %v304, %v319
      %v339 = vadd.f32 %v305, %v319
      %v340 = vadd.f32 %v306, %v319
      %v341 = vadd.f32 %v307, %v319
      %v342 = vadd.f32 %v308, %v319
      %v343 = vadd.f32 %v309, %v319
      %v344 = vadd.f32 %v310, %v319
      %v345 = vadd.f32 %v311, %v319
      %v346 = vadd.f32 %v312, %v319
      %v347 = vadd.f32 %v313, %v319
      %v348 = vadd.f32 %v314, %v319
      %v349 = vadd.f32 %v315, %v319
      %v350 = vadd.f32 %v316, %v319
      %v351 = vstv %s250
      %v352 = vadd.s32 %v351, 1
      %v353 = vadd.s32 %v351, 2
      %v354 = vadd.s32 %v351, 3
      %v355 = vadd.s32 %v351, 4
      %v356 = vadd.s32 %v351, 5
      %v357 = vadd.s32 %v351, 6
      %v358 = vadd.s32 %v351, 7
      %v359 = vadd.s32 %v351, 8
      %v360 = vadd.s32 %v351, 9
      %v361 = vlaneseq
      %v362 = vshrl.u32 %v361, 7
      %v363 = vadd.s32 %v362, 8
      %v364 = vadd.s32 %v362, 16
      %vm365 = vcmp.ge.s32.totalorder %v351, 1
      %vm366 = vcmp.ge.s32.totalorder %v352, 1
      %vm367 = vcmp.ge.s32.totalorder %v353, 1
      %vm368 = vcmp.ge.s32.totalorder %v354, 1
      %vm369 = vcmp.ge.s32.totalorder %v355, 1
      %vm370 = vcmp.ge.s32.totalorder %v356, 1
      %vm371 = vcmp.ge.s32.totalorder %v357, 1
      %vm372 = vcmp.ge.s32.totalorder %v358, 1
      %vm373 = vcmp.ge.s32.totalorder %v359, 1
      %vm374 = vcmp.ge.s32.totalorder %v360, 1
      %vm375 = vcmp.le.s32.totalorder %v351, 16
      %vm376 = vcmp.le.s32.totalorder %v352, 16
      %vm377 = vcmp.le.s32.totalorder %v353, 16
      %vm378 = vcmp.le.s32.totalorder %v354, 16
      %vm379 = vcmp.le.s32.totalorder %v355, 16
      %vm380 = vcmp.le.s32.totalorder %v356, 16
      %vm381 = vcmp.le.s32.totalorder %v357, 16
      %vm382 = vcmp.le.s32.totalorder %v358, 16
      %vm383 = vcmp.le.s32.totalorder %v359, 16
      %vm384 = vcmp.le.s32.totalorder %v360, 16
      %vm385 = vmand %vm365, %vm375
      %vm386 = vmand %vm366, %vm376
      %vm387 = vmand %vm367, %vm377
      %vm388 = vmand %vm368, %vm378
      %vm389 = vmand %vm369, %vm379
      %vm390 = vmand %vm370, %vm380
      %vm391 = vmand %vm371, %vm381
      %vm392 = vmand %vm372, %vm382
      %vm393 = vmand %vm373, %vm383
      %vm394 = vmand %vm374, %vm384
      %vm395 = vcmp.ge.s32.totalorder %v362, 1
      %vm396 = vcmp.ge.s32.totalorder %v363, 1
      %vm397 = vcmp.ge.s32.totalorder %v364, 1
      %vm398 = vmand %vm385, %vm395
      %vm399 = vmand %vm385, %vm396
      %vm400 = vmand %vm385, %vm397
      %vm401 = vmand %vm386, %vm395
      %vm402 = vmand %vm386, %vm396
      %vm403 = vmand %vm386, %vm397
      %vm404 = vmand %vm387, %vm395
      %vm405 = vmand %vm387, %vm396
      %vm406 = vmand %vm387, %vm397
      %vm407 = vmand %vm388, %vm395
      %vm408 = vmand %vm388, %vm396
      %vm409 = vmand %vm388, %vm397
      %vm410 = vmand %vm389, %vm395
      %vm411 = vmand %vm389, %vm396
      %vm412 = vmand %vm389, %vm397
      %vm413 = vmand %vm390, %vm395
      %vm414 = vmand %vm390, %vm396
      %vm415 = vmand %vm390, %vm397
      %vm416 = vmand %vm391, %vm395
      %vm417 = vmand %vm391, %vm396
      %vm418 = vmand %vm391, %vm397
      %vm419 = vmand %vm392, %vm395
      %vm420 = vmand %vm392, %vm396
      %vm421 = vmand %vm392, %vm397
      %vm422 = vmand %vm393, %vm395
      %vm423 = vmand %vm393, %vm396
      %vm424 = vmand %vm393, %vm397
      %vm425 = vmand %vm394, %vm395
      %vm426 = vmand %vm394, %vm396
      %vm427 = vmand %vm394, %vm397
      %vm428 = vcmp.le.s32.totalorder %v362, 16
      %vm429 = vcmp.le.s32.totalorder %v363, 16
      %vm430 = vcmp.le.s32.totalorder %v364, 16
      %vm431 = vmand %vm398, %vm428
      %vm432 = vmand %vm399, %vm429
      %vm433 = vmand %vm400, %vm430
      %vm434 = vmand %vm401, %vm428
      %vm435 = vmand %vm402, %vm429
      %vm436 = vmand %vm403, %vm430
      %vm437 = vmand %vm404, %vm428
      %vm438 = vmand %vm405, %vm429
      %vm439 = vmand %vm406, %vm430
      %vm440 = vmand %vm407, %vm428
      %vm441 = vmand %vm408, %vm429
      %vm442 = vmand %vm409, %vm430
      %vm443 = vmand %vm410, %vm428
      %vm444 = vmand %vm411, %vm429
      %vm445 = vmand %vm412, %vm430
      %vm446 = vmand %vm413, %vm428
      %vm447 = vmand %vm414, %vm429
      %vm448 = vmand %vm415, %vm430
      %vm449 = vmand %vm416, %vm428
      %vm450 = vmand %vm417, %vm429
      %vm451 = vmand %vm418, %vm430
      %vm452 = vmand %vm419, %vm428
      %vm453 = vmand %vm420, %vm429
      %vm454 = vmand %vm421, %vm430
      %vm455 = vmand %vm422, %vm428
      %vm456 = vmand %vm423, %vm429
      %vm457 = vmand %vm424, %vm430
      %vm458 = vmand %vm425, %vm428
      %vm459 = vmand %vm426, %vm429
      %vm460 = vmand %vm427, %vm430
      %v461 = vsel %vm431, %v321, 0.0
      %v462 = vsel %vm432, %v322, 0.0
      %v463 = vsel %vm433, %v323, 0.0
      %v464 = vsel %vm434, %v324, 0.0
      %v465 = vsel %vm435, %v325, 0.0
      %v466 = vsel %vm436, %v326, 0.0
      %v467 = vsel %vm437, %v327, 0.0
      %v468 = vsel %vm438, %v328, 0.0
      %v469 = vsel %vm439, %v329, 0.0
      %v470 = vsel %vm440, %v330, 0.0
      %v471 = vsel %vm441, %v331, 0.0
      %v472 = vsel %vm442, %v332, 0.0
      %v473 = vsel %vm443, %v333, 0.0
      %v474 = vsel %vm444, %v334, 0.0
      %v475 = vsel %vm445, %v335, 0.0
      %v476 = vsel %vm446, %v336, 0.0
      %v477 = vsel %vm447, %v337, 0.0
      %v478 = vsel %vm448, %v338, 0.0
      %v479 = vsel %vm449, %v339, 0.0
      %v480 = vsel %vm450, %v340, 0.0
      %v481 = vsel %vm451, %v341, 0.0
      %v482 = vsel %vm452, %v342, 0.0
      %v483 = vsel %vm453, %v343, 0.0
      %v484 = vsel %vm454, %v344, 0.0
      %v485 = vsel %vm455, %v345, 0.0
      %v486 = vsel %vm456, %v346, 0.0
      %v487 = vsel %vm457, %v347, 0.0
      %v488 = vsel %vm458, %v348, 0.0
      %v489 = vsel %vm459, %v349, 0.0
      %v490 = vsel %vm460, %v350, 0.0
      %v491 = vld [vmem:[%s1] sm:$0xf]
      %v492 = vld [vmem:[%s1 + $0x4] sm:$0xf]
      %v493 = vld [vmem:[%s1 + $0x8] sm:$0xf]
      %v494 = vld [vmem:[%s1 + $0xc] sm:$0xf]
      %v495 = vld [vmem:[%s1 + $0x10] sm:$0xf]
      %v496 = vld [vmem:[%s1 + $0x14] sm:$0xf]
      %v497 = vld [vmem:[%s1 + $0x18] sm:$0xf]
      %v498 = vld [vmem:[%s1 + $0x1c] sm:$0xf]
      %v499 = vld [vmem:[%s1 + $0x20] sm:$0xf]
      %vm524 = vcmask 1046528
      %v525 = vrot.slane %v461, 1
      %v526 = vrot.slane %v462, 1
      %v527 = vsel %vm524, %v525, %v526
      %v528 = vrot.slane %v463, 1
      %v529 = vsel %vm524, %v526, %v528
      %v530 = vrot.slane %v464, 1
      %v531 = vrot.slane %v465, 1
      %v532 = vsel %vm524, %v530, %v531
      %v533 = vrot.slane %v466, 1
      %v534 = vsel %vm524, %v531, %v533
      %v535 = vrot.slane %v467, 1
      %v536 = vrot.slane %v468, 1
      %v537 = vsel %vm524, %v535, %v536
      %v538 = vrot.slane %v469, 1
      %v539 = vsel %vm524, %v536, %v538
      %v540 = vrot.slane %v470, 1
      %v541 = vrot.slane %v471, 1
      %v542 = vsel %vm524, %v540, %v541
      %v543 = vrot.slane %v472, 1
      %v544 = vsel %vm524, %v541, %v543
      %v545 = vrot.slane %v473, 1
      %v546 = vrot.slane %v474, 1
      %v547 = vsel %vm524, %v545, %v546
      %v548 = vrot.slane %v475, 1
      %v549 = vsel %vm524, %v546, %v548
      %v550 = vrot.slane %v476, 1
      %v551 = vrot.slane %v477, 1
      %v552 = vsel %vm524, %v550, %v551
      %v553 = vrot.slane %v478, 1
      %v554 = vsel %vm524, %v551, %v553
      %v555 = vrot.slane %v479, 1
      %v556 = vrot.slane %v480, 1
      %v557 = vsel %vm524, %v555, %v556
      %v558 = vrot.slane %v481, 1
      %v559 = vsel %vm524, %v556, %v558
      %v560 = vrot.slane %v482, 1
      %v561 = vrot.slane %v483, 1
      %v562 = vsel %vm524, %v560, %v561
      %v563 = vrot.slane %v484, 1
      %v564 = vsel %vm524, %v561, %v563
      %vm565 = vcmask 31744
      %v566 = vsel %vm565, %v527, 0
      %v568 = vsel %vm565, %v529, 0
      %v570 = vsel %vm565, %v532, 0
      %v572 = vsel %vm565, %v534, 0
      %v574 = vsel %vm565, %v537, 0
      %v576 = vsel %vm565, %v539, 0
      %v578 = vsel %vm565, %v542, 0
      %v580 = vsel %vm565, %v544, 0
      %v582 = vsel %vm565, %v547, 0
      %v584 = vsel %vm565, %v549, 0
      %v586 = vsel %vm565, %v552, 0
      %v588 = vsel %vm565, %v554, 0
      %v590 = vsel %vm565, %v557, 0
      %v592 = vsel %vm565, %v559, 0
      %v594 = vsel %vm565, %v562, 0
      %v596 = vsel %vm565, %v564, 0
      %vm598 = vcmask 1043456
      %v600 = vsel %vm598, %v492, 0
      %602 = vmatpush.msra.mxu0 0.0
      %603 = vmatpush.msra.mxu0 0.0
      %604 = vmatpush.msra.mxu0 0.0
      %605 = vmatpush.msra.mxu0 0.0
      %606 = vmatpush.msra.mxu0 0.0
      %607 = vmatpush.msra.mxu0 0.0
      %608 = vmatpush.msra.mxu0 0.0
      %609 = vmatpush.msra.mxu0 0.0
      %610 = vmatpush.msra.mxu0 0.0
      %611 = vmatpush.msra.mxu0 0.0
      %612 = vmatpush.msra.mxu0 0.0
      %613 = vmatpush.msra.mxu0 0.0
      %614 = vmatpush.msra.mxu0 0.0
      %615 = vmatpush.msra.mxu0 0.0
      %616 = vmatpush.msra.mxu0 0.0
      %617 = vmatpush.msra.mxu0 %v600
      %618 = vmatmul.f32.gmra.mxu0 %v566
      %v619 = vpop.f32.mrf.mxu0
      %v620 = vadd.f32 0.0, %v619
      %621 = vmatmul.f32.gmra.mxu0 %v568
      %v622 = vpop.f32.mrf.mxu0
      %v623 = vadd.f32 0.0, %v622
      %624 = vmatmul.f32.gmra.mxu0 %v570
      %v625 = vpop.f32.mrf.mxu0
      %v626 = vadd.f32 0.0, %v625
      %627 = vmatmul.f32.gmra.mxu0 %v572
      %v628 = vpop.f32.mrf.mxu0
      %v629 = vadd.f32 0.0, %v628
      %630 = vmatmul.f32.gmra.mxu0 %v574
      %v631 = vpop.f32.mrf.mxu0
      %v632 = vadd.f32 0.0, %v631
      %633 = vmatmul.f32.gmra.mxu0 %v576
      %v634 = vpop.f32.mrf.mxu0
      %v635 = vadd.f32 0.0, %v634
      %636 = vmatmul.f32.gmra.mxu0 %v578
      %v637 = vpop.f32.mrf.mxu0
      %v638 = vadd.f32 0.0, %v637
      %639 = vmatmul.f32.gmra.mxu0 %v580
      %v640 = vpop.f32.mrf.mxu0
      %v641 = vadd.f32 0.0, %v640
      %642 = vmatmul.f32.gmra.mxu0 %v582
      %v643 = vpop.f32.mrf.mxu0
      %v644 = vadd.f32 0.0, %v643
      %645 = vmatmul.f32.gmra.mxu0 %v584
      %v646 = vpop.f32.mrf.mxu0
      %v647 = vadd.f32 0.0, %v646
      %648 = vmatmul.f32.gmra.mxu0 %v586
      %v649 = vpop.f32.mrf.mxu0
      %v650 = vadd.f32 0.0, %v649
      %651 = vmatmul.f32.gmra.mxu0 %v588
      %v652 = vpop.f32.mrf.mxu0
      %v653 = vadd.f32 0.0, %v652
      %654 = vmatmul.f32.gmra.mxu0 %v590
      %v655 = vpop.f32.mrf.mxu0
      %v656 = vadd.f32 0.0, %v655
      %657 = vmatmul.f32.gmra.mxu0 %v592
      %v658 = vpop.f32.mrf.mxu0
      %v659 = vadd.f32 0.0, %v658
      %660 = vmatmul.f32.gmra.mxu0 %v594
      %v661 = vpop.f32.mrf.mxu0
      %v662 = vadd.f32 0.0, %v661
      %663 = vmatmul.f32.gmra.mxu0 %v596
      %v664 = vpop.f32.mrf.mxu0
      %v665 = vadd.f32 0.0, %v664
      %666 = vdwg.mxu0
      %v667 = vsel %vm565, %v461, 0
      %v669 = vsel %vm565, %v462, 0
      %v671 = vsel %vm565, %v464, 0
      %v673 = vsel %vm565, %v465, 0
      %v675 = vsel %vm565, %v467, 0
      %v677 = vsel %vm565, %v468, 0
      %v679 = vsel %vm565, %v470, 0
      %v681 = vsel %vm565, %v471, 0
      %v683 = vsel %vm565, %v473, 0
      %v685 = vsel %vm565, %v474, 0
      %v687 = vsel %vm565, %v476, 0
      %v689 = vsel %vm565, %v477, 0
      %v691 = vsel %vm565, %v479, 0
      %v693 = vsel %vm565, %v480, 0
      %v695 = vsel %vm565, %v482, 0
      %v697 = vsel %vm565, %v483, 0
      %v700 = vsel %vm598, %v491, 0
      %702 = vmatpush.msra.mxu0 0.0
      %703 = vmatpush.msra.mxu0 0.0
      %704 = vmatpush.msra.mxu0 0.0
      %705 = vmatpush.msra.mxu0 0.0
      %706 = vmatpush.msra.mxu0 0.0
      %707 = vmatpush.msra.mxu0 0.0
      %708 = vmatpush.msra.mxu0 0.0
      %709 = vmatpush.msra.mxu0 0.0
      %710 = vmatpush.msra.mxu0 0.0
      %711 = vmatpush.msra.mxu0 0.0
      %712 = vmatpush.msra.mxu0 0.0
      %713 = vmatpush.msra.mxu0 0.0
      %714 = vmatpush.msra.mxu0 0.0
      %715 = vmatpush.msra.mxu0 0.0
      %716 = vmatpush.msra.mxu0 0.0
      %717 = vmatpush.msra.mxu0 %v700
      %718 = vmatmul.f32.gmra.mxu0 %v667
      %v719 = vpop.f32.mrf.mxu0
      %v720 = vadd.f32 %v620, %v719
      %721 = vmatmul.f32.gmra.mxu0 %v669
      %v722 = vpop.f32.mrf.mxu0
      %v723 = vadd.f32 %v623, %v722
      %724 = vmatmul.f32.gmra.mxu0 %v671
      %v725 = vpop.f32.mrf.mxu0
      %v726 = vadd.f32 %v626, %v725
      %727 = vmatmul.f32.gmra.mxu0 %v673
      %v728 = vpop.f32.mrf.mxu0
      %v729 = vadd.f32 %v629, %v728
      %730 = vmatmul.f32.gmra.mxu0 %v675
      %v731 = vpop.f32.mrf.mxu0
      %v732 = vadd.f32 %v632, %v731
      %733 = vmatmul.f32.gmra.mxu0 %v677
      %v734 = vpop.f32.mrf.mxu0
      %v735 = vadd.f32 %v635, %v734
      %736 = vmatmul.f32.gmra.mxu0 %v679
      %v737 = vpop.f32.mrf.mxu0
      %v738 = vadd.f32 %v638, %v737
      %739 = vmatmul.f32.gmra.mxu0 %v681
      %v740 = vpop.f32.mrf.mxu0
      %v741 = vadd.f32 %v641, %v740
      %742 = vmatmul.f32.gmra.mxu0 %v683
      %v743 = vpop.f32.mrf.mxu0
      %v744 = vadd.f32 %v644, %v743
      %745 = vmatmul.f32.gmra.mxu0 %v685
      %v746 = vpop.f32.mrf.mxu0
      %v747 = vadd.f32 %v647, %v746
      %748 = vmatmul.f32.gmra.mxu0 %v687
      %v749 = vpop.f32.mrf.mxu0
      %v750 = vadd.f32 %v650, %v749
      %751 = vmatmul.f32.gmra.mxu0 %v689
      %v752 = vpop.f32.mrf.mxu0
      %v753 = vadd.f32 %v653, %v752
      %754 = vmatmul.f32.gmra.mxu0 %v691
      %v755 = vpop.f32.mrf.mxu0
      %v756 = vadd.f32 %v656, %v755
      %757 = vmatmul.f32.gmra.mxu0 %v693
      %v758 = vpop.f32.mrf.mxu0
      %v759 = vadd.f32 %v659, %v758
      %760 = vmatmul.f32.gmra.mxu0 %v695
      %v761 = vpop.f32.mrf.mxu0
      %v762 = vadd.f32 %v662, %v761
      %763 = vmatmul.f32.gmra.mxu0 %v697
      %v764 = vpop.f32.mrf.mxu0
      %v765 = vadd.f32 %v665, %v764
      %766 = vdwg.mxu0
      %vm767 = vcmask 1045504
      %v768 = vrot.slane %v461, 2
      %v769 = vrot.slane %v462, 2
      %v770 = vsel %vm767, %v768, %v769
      %v771 = vrot.slane %v463, 2
      %v772 = vsel %vm767, %v769, %v771
      %v773 = vrot.slane %v464, 2
      %v774 = vrot.slane %v465, 2
      %v775 = vsel %vm767, %v773, %v774
      %v776 = vrot.slane %v466, 2
      %v777 = vsel %vm767, %v774, %v776
      %v778 = vrot.slane %v467, 2
      %v779 = vrot.slane %v468, 2
      %v780 = vsel %vm767, %v778, %v779
      %v781 = vrot.slane %v469, 2
      %v782 = vsel %vm767, %v779, %v781
      %v783 = vrot.slane %v470, 2
      %v784 = vrot.slane %v471, 2
      %v785 = vsel %vm767, %v783, %v784
      %v786 = vrot.slane %v472, 2
      %v787 = vsel %vm767, %v784, %v786
      %v788 = vrot.slane %v473, 2
      %v789 = vrot.slane %v474, 2
      %v790 = vsel %vm767, %v788, %v789
      %v791 = vrot.slane %v475, 2
      %v792 = vsel %vm767, %v789, %v791
      %v793 = vrot.slane %v476, 2
      %v794 = vrot.slane %v477, 2
      %v795 = vsel %vm767, %v793, %v794
      %v796 = vrot.slane %v478, 2
      %v797 = vsel %vm767, %v794, %v796
      %v798 = vrot.slane %v479, 2
      %v799 = vrot.slane %v480, 2
      %v800 = vsel %vm767, %v798, %v799
      %v801 = vrot.slane %v481, 2
      %v802 = vsel %vm767, %v799, %v801
      %v803 = vrot.slane %v482, 2
      %v804 = vrot.slane %v483, 2
      %v805 = vsel %vm767, %v803, %v804
      %v806 = vrot.slane %v484, 2
      %v807 = vsel %vm767, %v804, %v806
      %v808 = vsel %vm565, %v770, 0
      %v810 = vsel %vm565, %v772, 0
      %v812 = vsel %vm565, %v775, 0
      %v814 = vsel %vm565, %v777, 0
      %v816 = vsel %vm565, %v780, 0
      %v818 = vsel %vm565, %v782, 0
      %v820 = vsel %vm565, %v785, 0
      %v822 = vsel %vm565, %v787, 0
      %v824 = vsel %vm565, %v790, 0
      %v826 = vsel %vm565, %v792, 0
      %v828 = vsel %vm565, %v795, 0
      %v830 = vsel %vm565, %v797, 0
      %v832 = vsel %vm565, %v800, 0
      %v834 = vsel %vm565, %v802, 0
      %v836 = vsel %vm565, %v805, 0
      %v838 = vsel %vm565, %v807, 0
      %v841 = vsel %vm598, %v493, 0
      %843 = vmatpush.msra.mxu0 0.0
      %844 = vmatpush.msra.mxu0 0.0
      %845 = vmatpush.msra.mxu0 0.0
      %846 = vmatpush.msra.mxu0 0.0
      %847 = vmatpush.msra.mxu0 0.0
      %848 = vmatpush.msra.mxu0 0.0
      %849 = vmatpush.msra.mxu0 0.0
      %850 = vmatpush.msra.mxu0 0.0
      %851 = vmatpush.msra.mxu0 0.0
      %852 = vmatpush.msra.mxu0 0.0
      %853 = vmatpush.msra.mxu0 0.0
      %854 = vmatpush.msra.mxu0 0.0
      %855 = vmatpush.msra.mxu0 0.0
      %856 = vmatpush.msra.mxu0 0.0
      %857 = vmatpush.msra.mxu0 0.0
      %858 = vmatpush.msra.mxu0 %v841
      %859 = vmatmul.f32.gmra.mxu0 %v808
      %v860 = vpop.f32.mrf.mxu0
      %v861 = vadd.f32 0.0, %v860
      %862 = vmatmul.f32.gmra.mxu0 %v810
      %v863 = vpop.f32.mrf.mxu0
      %v864 = vadd.f32 0.0, %v863
      %865 = vmatmul.f32.gmra.mxu0 %v812
      %v866 = vpop.f32.mrf.mxu0
      %v867 = vadd.f32 0.0, %v866
      %868 = vmatmul.f32.gmra.mxu0 %v814
      %v869 = vpop.f32.mrf.mxu0
      %v870 = vadd.f32 0.0, %v869
      %871 = vmatmul.f32.gmra.mxu0 %v816
      %v872 = vpop.f32.mrf.mxu0
      %v873 = vadd.f32 0.0, %v872
      %874 = vmatmul.f32.gmra.mxu0 %v818
      %v875 = vpop.f32.mrf.mxu0
      %v876 = vadd.f32 0.0, %v875
      %877 = vmatmul.f32.gmra.mxu0 %v820
      %v878 = vpop.f32.mrf.mxu0
      %v879 = vadd.f32 0.0, %v878
      %880 = vmatmul.f32.gmra.mxu0 %v822
      %v881 = vpop.f32.mrf.mxu0
      %v882 = vadd.f32 0.0, %v881
      %883 = vmatmul.f32.gmra.mxu0 %v824
      %v884 = vpop.f32.mrf.mxu0
      %v885 = vadd.f32 0.0, %v884
      %886 = vmatmul.f32.gmra.mxu0 %v826
      %v887 = vpop.f32.mrf.mxu0
      %v888 = vadd.f32 0.0, %v887
      %889 = vmatmul.f32.gmra.mxu0 %v828
      %v890 = vpop.f32.mrf.mxu0
      %v891 = vadd.f32 0.0, %v890
      %892 = vmatmul.f32.gmra.mxu0 %v830
      %v893 = vpop.f32.mrf.mxu0
      %v894 = vadd.f32 0.0, %v893
      %895 = vmatmul.f32.gmra.mxu0 %v832
      %v896 = vpop.f32.mrf.mxu0
      %v897 = vadd.f32 0.0, %v896
      %898 = vmatmul.f32.gmra.mxu0 %v834
      %v899 = vpop.f32.mrf.mxu0
      %v900 = vadd.f32 0.0, %v899
      %901 = vmatmul.f32.gmra.mxu0 %v836
      %v902 = vpop.f32.mrf.mxu0
      %v903 = vadd.f32 0.0, %v902
      %904 = vmatmul.f32.gmra.mxu0 %v838
      %v905 = vpop.f32.mrf.mxu0
      %v906 = vadd.f32 0.0, %v905
      %907 = vdwg.mxu0
      %v908 = vadd.f32 %v720, %v861
      %v909 = vadd.f32 %v723, %v864
      %v910 = vadd.f32 %v726, %v867
      %v911 = vadd.f32 %v729, %v870
      %v912 = vadd.f32 %v732, %v873
      %v913 = vadd.f32 %v735, %v876
      %v914 = vadd.f32 %v738, %v879
      %v915 = vadd.f32 %v741, %v882
      %v916 = vadd.f32 %v744, %v885
      %v917 = vadd.f32 %v747, %v888
      %v918 = vadd.f32 %v750, %v891
      %v919 = vadd.f32 %v753, %v894
      %v920 = vadd.f32 %v756, %v897
      %v921 = vadd.f32 %v759, %v900
      %v922 = vadd.f32 %v762, %v903
      %v923 = vadd.f32 %v765, %v906
      %v925 = vsel %vm565, %v485, 0
      %v928 = vsel %vm565, %v486, 0
      %v931 = vsel %vm598, %v494, 0
      %933 = vmatpush.msra.mxu0 0.0
      %934 = vmatpush.msra.mxu0 0.0
      %935 = vmatpush.msra.mxu0 0.0
      %936 = vmatpush.msra.mxu0 0.0
      %937 = vmatpush.msra.mxu0 0.0
      %938 = vmatpush.msra.mxu0 0.0
      %939 = vmatpush.msra.mxu0 0.0
      %940 = vmatpush.msra.mxu0 0.0
      %941 = vmatpush.msra.mxu0 0.0
      %942 = vmatpush.msra.mxu0 0.0
      %943 = vmatpush.msra.mxu0 0.0
      %944 = vmatpush.msra.mxu0 0.0
      %945 = vmatpush.msra.mxu0 0.0
      %946 = vmatpush.msra.mxu0 0.0
      %947 = vmatpush.msra.mxu0 0.0
      %948 = vmatpush.msra.mxu0 %v931
      %949 = vmatmul.f32.gmra.mxu0 %v671
      %v950 = vpop.f32.mrf.mxu0
      %v951 = vadd.f32 0.0, %v950
      %952 = vmatmul.f32.gmra.mxu0 %v673
      %v953 = vpop.f32.mrf.mxu0
      %v954 = vadd.f32 0.0, %v953
      %955 = vmatmul.f32.gmra.mxu0 %v675
      %v956 = vpop.f32.mrf.mxu0
      %v957 = vadd.f32 0.0, %v956
      %958 = vmatmul.f32.gmra.mxu0 %v677
      %v959 = vpop.f32.mrf.mxu0
      %v960 = vadd.f32 0.0, %v959
      %961 = vmatmul.f32.gmra.mxu0 %v679
      %v962 = vpop.f32.mrf.mxu0
      %v963 = vadd.f32 0.0, %v962
      %964 = vmatmul.f32.gmra.mxu0 %v681
      %v965 = vpop.f32.mrf.mxu0
      %v966 = vadd.f32 0.0, %v965
      %967 = vmatmul.f32.gmra.mxu0 %v683
      %v968 = vpop.f32.mrf.mxu0
      %v969 = vadd.f32 0.0, %v968
      %970 = vmatmul.f32.gmra.mxu0 %v685
      %v971 = vpop.f32.mrf.mxu0
      %v972 = vadd.f32 0.0, %v971
      %973 = vmatmul.f32.gmra.mxu0 %v687
      %v974 = vpop.f32.mrf.mxu0
      %v975 = vadd.f32 0.0, %v974
      %976 = vmatmul.f32.gmra.mxu0 %v689
      %v977 = vpop.f32.mrf.mxu0
      %v978 = vadd.f32 0.0, %v977
      %979 = vmatmul.f32.gmra.mxu0 %v691
      %v980 = vpop.f32.mrf.mxu0
      %v981 = vadd.f32 0.0, %v980
      %982 = vmatmul.f32.gmra.mxu0 %v693
      %v983 = vpop.f32.mrf.mxu0
      %v984 = vadd.f32 0.0, %v983
      %985 = vmatmul.f32.gmra.mxu0 %v695
      %v986 = vpop.f32.mrf.mxu0
      %v987 = vadd.f32 0.0, %v986
      %988 = vmatmul.f32.gmra.mxu0 %v697
      %v989 = vpop.f32.mrf.mxu0
      %v990 = vadd.f32 0.0, %v989
      %991 = vmatmul.f32.gmra.mxu0 %v925
      %v992 = vpop.f32.mrf.mxu0
      %v993 = vadd.f32 0.0, %v992
      %994 = vmatmul.f32.gmra.mxu0 %v928
      %v995 = vpop.f32.mrf.mxu0
      %v996 = vadd.f32 0.0, %v995
      %997 = vdwg.mxu0
      %v998 = vadd.f32 %v908, %v951
      %v999 = vadd.f32 %v909, %v954
      %v1000 = vadd.f32 %v910, %v957
      %v1001 = vadd.f32 %v911, %v960
      %v1002 = vadd.f32 %v912, %v963
      %v1003 = vadd.f32 %v913, %v966
      %v1004 = vadd.f32 %v914, %v969
      %v1005 = vadd.f32 %v915, %v972
      %v1006 = vadd.f32 %v916, %v975
      %v1007 = vadd.f32 %v917, %v978
      %v1008 = vadd.f32 %v918, %v981
      %v1009 = vadd.f32 %v919, %v984
      %v1010 = vadd.f32 %v920, %v987
      %v1011 = vadd.f32 %v921, %v990
      %v1012 = vadd.f32 %v922, %v993
      %v1013 = vadd.f32 %v923, %v996
      %v1015 = vrot.slane %v485, 1
      %v1016 = vrot.slane %v486, 1
      %v1017 = vsel %vm524, %v1015, %v1016
      %v1018 = vrot.slane %v487, 1
      %v1019 = vsel %vm524, %v1016, %v1018
      %v1020 = vsel %vm565, %v1017, 0
      %v1022 = vsel %vm565, %v1019, 0
      %v1025 = vsel %vm598, %v495, 0
      %1027 = vmatpush.msra.mxu0 0.0
      %1028 = vmatpush.msra.mxu0 0.0
      %1029 = vmatpush.msra.mxu0 0.0
      %1030 = vmatpush.msra.mxu0 0.0
      %1031 = vmatpush.msra.mxu0 0.0
      %1032 = vmatpush.msra.mxu0 0.0
      %1033 = vmatpush.msra.mxu0 0.0
      %1034 = vmatpush.msra.mxu0 0.0
      %1035 = vmatpush.msra.mxu0 0.0
      %1036 = vmatpush.msra.mxu0 0.0
      %1037 = vmatpush.msra.mxu0 0.0
      %1038 = vmatpush.msra.mxu0 0.0
      %1039 = vmatpush.msra.mxu0 0.0
      %1040 = vmatpush.msra.mxu0 0.0
      %1041 = vmatpush.msra.mxu0 0.0
      %1042 = vmatpush.msra.mxu0 %v1025
      %1043 = vmatmul.f32.gmra.mxu0 %v570
      %v1044 = vpop.f32.mrf.mxu0
      %v1045 = vadd.f32 0.0, %v1044
      %1046 = vmatmul.f32.gmra.mxu0 %v572
      %v1047 = vpop.f32.mrf.mxu0
      %v1048 = vadd.f32 0.0, %v1047
      %1049 = vmatmul.f32.gmra.mxu0 %v574
      %v1050 = vpop.f32.mrf.mxu0
      %v1051 = vadd.f32 0.0, %v1050
      %1052 = vmatmul.f32.gmra.mxu0 %v576
      %v1053 = vpop.f32.mrf.mxu0
      %v1054 = vadd.f32 0.0, %v1053
      %1055 = vmatmul.f32.gmra.mxu0 %v578
      %v1056 = vpop.f32.mrf.mxu0
      %v1057 = vadd.f32 0.0, %v1056
      %1058 = vmatmul.f32.gmra.mxu0 %v580
      %v1059 = vpop.f32.mrf.mxu0
      %v1060 = vadd.f32 0.0, %v1059
      %1061 = vmatmul.f32.gmra.mxu0 %v582
      %v1062 = vpop.f32.mrf.mxu0
      %v1063 = vadd.f32 0.0, %v1062
      %1064 = vmatmul.f32.gmra.mxu0 %v584
      %v1065 = vpop.f32.mrf.mxu0
      %v1066 = vadd.f32 0.0, %v1065
      %1067 = vmatmul.f32.gmra.mxu0 %v586
      %v1068 = vpop.f32.mrf.mxu0
      %v1069 = vadd.f32 0.0, %v1068
      %1070 = vmatmul.f32.gmra.mxu0 %v588
      %v1071 = vpop.f32.mrf.mxu0
      %v1072 = vadd.f32 0.0, %v1071
      %1073 = vmatmul.f32.gmra.mxu0 %v590
      %v1074 = vpop.f32.mrf.mxu0
      %v1075 = vadd.f32 0.0, %v1074
      %1076 = vmatmul.f32.gmra.mxu0 %v592
      %v1077 = vpop.f32.mrf.mxu0
      %v1078 = vadd.f32 0.0, %v1077
      %1079 = vmatmul.f32.gmra.mxu0 %v594
      %v1080 = vpop.f32.mrf.mxu0
      %v1081 = vadd.f32 0.0, %v1080
      %1082 = vmatmul.f32.gmra.mxu0 %v596
      %v1083 = vpop.f32.mrf.mxu0
      %v1084 = vadd.f32 0.0, %v1083
      %1085 = vmatmul.f32.gmra.mxu0 %v1020
      %v1086 = vpop.f32.mrf.mxu0
      %v1087 = vadd.f32 0.0, %v1086
      %1088 = vmatmul.f32.gmra.mxu0 %v1022
      %v1089 = vpop.f32.mrf.mxu0
      %v1090 = vadd.f32 0.0, %v1089
      %1091 = vdwg.mxu0
      %v1092 = vadd.f32 %v998, %v1045
      %v1093 = vadd.f32 %v999, %v1048
      %v1094 = vadd.f32 %v1000, %v1051
      %v1095 = vadd.f32 %v1001, %v1054
      %v1096 = vadd.f32 %v1002, %v1057
      %v1097 = vadd.f32 %v1003, %v1060
      %v1098 = vadd.f32 %v1004, %v1063
      %v1099 = vadd.f32 %v1005, %v1066
      %v1100 = vadd.f32 %v1006, %v1069
      %v1101 = vadd.f32 %v1007, %v1072
      %v1102 = vadd.f32 %v1008, %v1075
      %v1103 = vadd.f32 %v1009, %v1078
      %v1104 = vadd.f32 %v1010, %v1081
      %v1105 = vadd.f32 %v1011, %v1084
      %v1106 = vadd.f32 %v1012, %v1087
      %v1107 = vadd.f32 %v1013, %v1090
      %v1108 = vrot.slane %v485, 2
      %v1109 = vrot.slane %v486, 2
      %v1110 = vsel %vm767, %v1108, %v1109
      %v1111 = vrot.slane %v487, 2
      %v1112 = vsel %vm767, %v1109, %v1111
      %v1113 = vsel %vm565, %v1110, 0
      %v1115 = vsel %vm565, %v1112, 0
      %v1118 = vsel %vm598, %v496, 0
      %1120 = vmatpush.msra.mxu0 0.0
      %1121 = vmatpush.msra.mxu0 0.0
      %1122 = vmatpush.msra.mxu0 0.0
      %1123 = vmatpush.msra.mxu0 0.0
      %1124 = vmatpush.msra.mxu0 0.0
      %1125 = vmatpush.msra.mxu0 0.0
      %1126 = vmatpush.msra.mxu0 0.0
      %1127 = vmatpush.msra.mxu0 0.0
      %1128 = vmatpush.msra.mxu0 0.0
      %1129 = vmatpush.msra.mxu0 0.0
      %1130 = vmatpush.msra.mxu0 0.0
      %1131 = vmatpush.msra.mxu0 0.0
      %1132 = vmatpush.msra.mxu0 0.0
      %1133 = vmatpush.msra.mxu0 0.0
      %1134 = vmatpush.msra.mxu0 0.0
      %1135 = vmatpush.msra.mxu0 %v1118
      %1136 = vmatmul.f32.gmra.mxu0 %v812
      %v1137 = vpop.f32.mrf.mxu0
      %v1138 = vadd.f32 0.0, %v1137
      %1139 = vmatmul.f32.gmra.mxu0 %v814
      %v1140 = vpop.f32.mrf.mxu0
      %v1141 = vadd.f32 0.0, %v1140
      %1142 = vmatmul.f32.gmra.mxu0 %v816
      %v1143 = vpop.f32.mrf.mxu0
      %v1144 = vadd.f32 0.0, %v1143
      %1145 = vmatmul.f32.gmra.mxu0 %v818
      %v1146 = vpop.f32.mrf.mxu0
      %v1147 = vadd.f32 0.0, %v1146
      %1148 = vmatmul.f32.gmra.mxu0 %v820
      %v1149 = vpop.f32.mrf.mxu0
      %v1150 = vadd.f32 0.0, %v1149
      %1151 = vmatmul.f32.gmra.mxu0 %v822
      %v1152 = vpop.f32.mrf.mxu0
      %v1153 = vadd.f32 0.0, %v1152
      %1154 = vmatmul.f32.gmra.mxu0 %v824
      %v1155 = vpop.f32.mrf.mxu0
      %v1156 = vadd.f32 0.0, %v1155
      %1157 = vmatmul.f32.gmra.mxu0 %v826
      %v1158 = vpop.f32.mrf.mxu0
      %v1159 = vadd.f32 0.0, %v1158
      %1160 = vmatmul.f32.gmra.mxu0 %v828
      %v1161 = vpop.f32.mrf.mxu0
      %v1162 = vadd.f32 0.0, %v1161
      %1163 = vmatmul.f32.gmra.mxu0 %v830
      %v1164 = vpop.f32.mrf.mxu0
      %v1165 = vadd.f32 0.0, %v1164
      %1166 = vmatmul.f32.gmra.mxu0 %v832
      %v1167 = vpop.f32.mrf.mxu0
      %v1168 = vadd.f32 0.0, %v1167
      %1169 = vmatmul.f32.gmra.mxu0 %v834
      %v1170 = vpop.f32.mrf.mxu0
      %v1171 = vadd.f32 0.0, %v1170
      %1172 = vmatmul.f32.gmra.mxu0 %v836
      %v1173 = vpop.f32.mrf.mxu0
      %v1174 = vadd.f32 0.0, %v1173
      %1175 = vmatmul.f32.gmra.mxu0 %v838
      %v1176 = vpop.f32.mrf.mxu0
      %v1177 = vadd.f32 0.0, %v1176
      %1178 = vmatmul.f32.gmra.mxu0 %v1113
      %v1179 = vpop.f32.mrf.mxu0
      %v1180 = vadd.f32 0.0, %v1179
      %1181 = vmatmul.f32.gmra.mxu0 %v1115
      %v1182 = vpop.f32.mrf.mxu0
      %v1183 = vadd.f32 0.0, %v1182
      %1184 = vdwg.mxu0
      %v1185 = vadd.f32 %v1092, %v1138
      %v1186 = vadd.f32 %v1093, %v1141
      %v1187 = vadd.f32 %v1094, %v1144
      %v1188 = vadd.f32 %v1095, %v1147
      %v1189 = vadd.f32 %v1096, %v1150
      %v1190 = vadd.f32 %v1097, %v1153
      %v1191 = vadd.f32 %v1098, %v1156
      %v1192 = vadd.f32 %v1099, %v1159
      %v1193 = vadd.f32 %v1100, %v1162
      %v1194 = vadd.f32 %v1101, %v1165
      %v1195 = vadd.f32 %v1102, %v1168
      %v1196 = vadd.f32 %v1103, %v1171
      %v1197 = vadd.f32 %v1104, %v1174
      %v1198 = vadd.f32 %v1105, %v1177
      %v1199 = vadd.f32 %v1106, %v1180
      %v1200 = vadd.f32 %v1107, %v1183
      %v1202 = vsel %vm565, %v488, 0
      %v1205 = vsel %vm565, %v489, 0
      %v1208 = vsel %vm598, %v497, 0
      %1210 = vmatpush.msra.mxu0 0.0
      %1211 = vmatpush.msra.mxu0 0.0
      %1212 = vmatpush.msra.mxu0 0.0
      %1213 = vmatpush.msra.mxu0 0.0
      %1214 = vmatpush.msra.mxu0 0.0
      %1215 = vmatpush.msra.mxu0 0.0
      %1216 = vmatpush.msra.mxu0 0.0
      %1217 = vmatpush.msra.mxu0 0.0
      %1218 = vmatpush.msra.mxu0 0.0
      %1219 = vmatpush.msra.mxu0 0.0
      %1220 = vmatpush.msra.mxu0 0.0
      %1221 = vmatpush.msra.mxu0 0.0
      %1222 = vmatpush.msra.mxu0 0.0
      %1223 = vmatpush.msra.mxu0 0.0
      %1224 = vmatpush.msra.mxu0 0.0
      %1225 = vmatpush.msra.mxu0 %v1208
      %1226 = vmatmul.f32.gmra.mxu0 %v675
      %v1227 = vpop.f32.mrf.mxu0
      %v1228 = vadd.f32 0.0, %v1227
      %1229 = vmatmul.f32.gmra.mxu0 %v677
      %v1230 = vpop.f32.mrf.mxu0
      %v1231 = vadd.f32 0.0, %v1230
      %1232 = vmatmul.f32.gmra.mxu0 %v679
      %v1233 = vpop.f32.mrf.mxu0
      %v1234 = vadd.f32 0.0, %v1233
      %1235 = vmatmul.f32.gmra.mxu0 %v681
      %v1236 = vpop.f32.mrf.mxu0
      %v1237 = vadd.f32 0.0, %v1236
      %1238 = vmatmul.f32.gmra.mxu0 %v683
      %v1239 = vpop.f32.mrf.mxu0
      %v1240 = vadd.f32 0.0, %v1239
      %1241 = vmatmul.f32.gmra.mxu0 %v685
      %v1242 = vpop.f32.mrf.mxu0
      %v1243 = vadd.f32 0.0, %v1242
      %1244 = vmatmul.f32.gmra.mxu0 %v687
      %v1245 = vpop.f32.mrf.mxu0
      %v1246 = vadd.f32 0.0, %v1245
      %1247 = vmatmul.f32.gmra.mxu0 %v689
      %v1248 = vpop.f32.mrf.mxu0
      %v1249 = vadd.f32 0.0, %v1248
      %1250 = vmatmul.f32.gmra.mxu0 %v691
      %v1251 = vpop.f32.mrf.mxu0
      %v1252 = vadd.f32 0.0, %v1251
      %1253 = vmatmul.f32.gmra.mxu0 %v693
      %v1254 = vpop.f32.mrf.mxu0
      %v1255 = vadd.f32 0.0, %v1254
      %1256 = vmatmul.f32.gmra.mxu0 %v695
      %v1257 = vpop.f32.mrf.mxu0
      %v1258 = vadd.f32 0.0, %v1257
      %1259 = vmatmul.f32.gmra.mxu0 %v697
      %v1260 = vpop.f32.mrf.mxu0
      %v1261 = vadd.f32 0.0, %v1260
      %1262 = vmatmul.f32.gmra.mxu0 %v925
      %v1263 = vpop.f32.mrf.mxu0
      %v1264 = vadd.f32 0.0, %v1263
      %1265 = vmatmul.f32.gmra.mxu0 %v928
      %v1266 = vpop.f32.mrf.mxu0
      %v1267 = vadd.f32 0.0, %v1266
      %1268 = vmatmul.f32.gmra.mxu0 %v1202
      %v1269 = vpop.f32.mrf.mxu0
      %v1270 = vadd.f32 0.0, %v1269
      %1271 = vmatmul.f32.gmra.mxu0 %v1205
      %v1272 = vpop.f32.mrf.mxu0
      %v1273 = vadd.f32 0.0, %v1272
      %1274 = vdwg.mxu0
      %v1275 = vadd.f32 %v1185, %v1228
      %v1276 = vadd.f32 %v1186, %v1231
      %v1277 = vadd.f32 %v1187, %v1234
      %v1278 = vadd.f32 %v1188, %v1237
      %v1279 = vadd.f32 %v1189, %v1240
      %v1280 = vadd.f32 %v1190, %v1243
      %v1281 = vadd.f32 %v1191, %v1246
      %v1282 = vadd.f32 %v1192, %v1249
      %v1283 = vadd.f32 %v1193, %v1252
      %v1284 = vadd.f32 %v1194, %v1255
      %v1285 = vadd.f32 %v1195, %v1258
      %v1286 = vadd.f32 %v1196, %v1261
      %v1287 = vadd.f32 %v1197, %v1264
      %v1288 = vadd.f32 %v1198, %v1267
      %v1289 = vadd.f32 %v1199, %v1270
      %v1290 = vadd.f32 %v1200, %v1273
      %v1292 = vrot.slane %v488, 1
      %v1293 = vrot.slane %v489, 1
      %v1294 = vsel %vm524, %v1292, %v1293
      %v1295 = vrot.slane %v490, 1
      %v1296 = vsel %vm524, %v1293, %v1295
      %v1297 = vsel %vm565, %v1294, 0
      %v1299 = vsel %vm565, %v1296, 0
      %v1302 = vsel %vm598, %v498, 0
      %1304 = vmatpush.msra.mxu0 0.0
      %1305 = vmatpush.msra.mxu0 0.0
      %1306 = vmatpush.msra.mxu0 0.0
      %1307 = vmatpush.msra.mxu0 0.0
      %1308 = vmatpush.msra.mxu0 0.0
      %1309 = vmatpush.msra.mxu0 0.0
      %1310 = vmatpush.msra.mxu0 0.0
      %1311 = vmatpush.msra.mxu0 0.0
      %1312 = vmatpush.msra.mxu0 0.0
      %1313 = vmatpush.msra.mxu0 0.0
      %1314 = vmatpush.msra.mxu0 0.0
      %1315 = vmatpush.msra.mxu0 0.0
      %1316 = vmatpush.msra.mxu0 0.0
      %1317 = vmatpush.msra.mxu0 0.0
      %1318 = vmatpush.msra.mxu0 0.0
      %1319 = vmatpush.msra.mxu0 %v1302
      %1320 = vmatmul.f32.gmra.mxu0 %v574
      %v1321 = vpop.f32.mrf.mxu0
      %v1322 = vadd.f32 0.0, %v1321
      %1323 = vmatmul.f32.gmra.mxu0 %v576
      %v1324 = vpop.f32.mrf.mxu0
      %v1325 = vadd.f32 0.0, %v1324
      %1326 = vmatmul.f32.gmra.mxu0 %v578
      %v1327 = vpop.f32.mrf.mxu0
      %v1328 = vadd.f32 0.0, %v1327
      %1329 = vmatmul.f32.gmra.mxu0 %v580
      %v1330 = vpop.f32.mrf.mxu0
      %v1331 = vadd.f32 0.0, %v1330
      %1332 = vmatmul.f32.gmra.mxu0 %v582
      %v1333 = vpop.f32.mrf.mxu0
      %v1334 = vadd.f32 0.0, %v1333
      %1335 = vmatmul.f32.gmra.mxu0 %v584
      %v1336 = vpop.f32.mrf.mxu0
      %v1337 = vadd.f32 0.0, %v1336
      %1338 = vmatmul.f32.gmra.mxu0 %v586
      %v1339 = vpop.f32.mrf.mxu0
      %v1340 = vadd.f32 0.0, %v1339
      %1341 = vmatmul.f32.gmra.mxu0 %v588
      %v1342 = vpop.f32.mrf.mxu0
      %v1343 = vadd.f32 0.0, %v1342
      %1344 = vmatmul.f32.gmra.mxu0 %v590
      %v1345 = vpop.f32.mrf.mxu0
      %v1346 = vadd.f32 0.0, %v1345
      %1347 = vmatmul.f32.gmra.mxu0 %v592
      %v1348 = vpop.f32.mrf.mxu0
      %v1349 = vadd.f32 0.0, %v1348
      %1350 = vmatmul.f32.gmra.mxu0 %v594
      %v1351 = vpop.f32.mrf.mxu0
      %v1352 = vadd.f32 0.0, %v1351
      %1353 = vmatmul.f32.gmra.mxu0 %v596
      %v1354 = vpop.f32.mrf.mxu0
      %v1355 = vadd.f32 0.0, %v1354
      %1356 = vmatmul.f32.gmra.mxu0 %v1020
      %v1357 = vpop.f32.mrf.mxu0
      %v1358 = vadd.f32 0.0, %v1357
      %1359 = vmatmul.f32.gmra.mxu0 %v1022
      %v1360 = vpop.f32.mrf.mxu0
      %v1361 = vadd.f32 0.0, %v1360
      %1362 = vmatmul.f32.gmra.mxu0 %v1297
      %v1363 = vpop.f32.mrf.mxu0
      %v1364 = vadd.f32 0.0, %v1363
      %1365 = vmatmul.f32.gmra.mxu0 %v1299
      %v1366 = vpop.f32.mrf.mxu0
      %v1367 = vadd.f32 0.0, %v1366
      %1368 = vdwg.mxu0
      %v1369 = vadd.f32 %v1275, %v1322
      %v1370 = vadd.f32 %v1276, %v1325
      %v1371 = vadd.f32 %v1277, %v1328
      %v1372 = vadd.f32 %v1278, %v1331
      %v1373 = vadd.f32 %v1279, %v1334
      %v1374 = vadd.f32 %v1280, %v1337
      %v1375 = vadd.f32 %v1281, %v1340
      %v1376 = vadd.f32 %v1282, %v1343
      %v1377 = vadd.f32 %v1283, %v1346
      %v1378 = vadd.f32 %v1284, %v1349
      %v1379 = vadd.f32 %v1285, %v1352
      %v1380 = vadd.f32 %v1286, %v1355
      %v1381 = vadd.f32 %v1287, %v1358
      %v1382 = vadd.f32 %v1288, %v1361
      %v1383 = vadd.f32 %v1289, %v1364
      %v1384 = vadd.f32 %v1290, %v1367
      %v1385 = vrot.slane %v488, 2
      %v1386 = vrot.slane %v489, 2
      %v1387 = vsel %vm767, %v1385, %v1386
      %v1388 = vrot.slane %v490, 2
      %v1389 = vsel %vm767, %v1386, %v1388
      %v1390 = vsel %vm565, %v1387, 0
      %v1392 = vsel %vm565, %v1389, 0
      %v1395 = vsel %vm598, %v499, 0
      %1397 = vmatpush.msra.mxu0 0.0
      %1398 = vmatpush.msra.mxu0 0.0
      %1399 = vmatpush.msra.mxu0 0.0
      %1400 = vmatpush.msra.mxu0 0.0
      %1401 = vmatpush.msra.mxu0 0.0
      %1402 = vmatpush.msra.mxu0 0.0
      %1403 = vmatpush.msra.mxu0 0.0
      %1404 = vmatpush.msra.mxu0 0.0
      %1405 = vmatpush.msra.mxu0 0.0
      %1406 = vmatpush.msra.mxu0 0.0
      %1407 = vmatpush.msra.mxu0 0.0
      %1408 = vmatpush.msra.mxu0 0.0
      %1409 = vmatpush.msra.mxu0 0.0
      %1410 = vmatpush.msra.mxu0 0.0
      %1411 = vmatpush.msra.mxu0 0.0
      %1412 = vmatpush.msra.mxu0 %v1395
      %1413 = vmatmul.f32.gmra.mxu0 %v816
      %v1414 = vpop.f32.mrf.mxu0
      %v1415 = vadd.f32 0.0, %v1414
      %1416 = vmatmul.f32.gmra.mxu0 %v818
      %v1417 = vpop.f32.mrf.mxu0
      %v1418 = vadd.f32 0.0, %v1417
      %1419 = vmatmul.f32.gmra.mxu0 %v820
      %v1420 = vpop.f32.mrf.mxu0
      %v1421 = vadd.f32 0.0, %v1420
      %1422 = vmatmul.f32.gmra.mxu0 %v822
      %v1423 = vpop.f32.mrf.mxu0
      %v1424 = vadd.f32 0.0, %v1423
      %1425 = vmatmul.f32.gmra.mxu0 %v824
      %v1426 = vpop.f32.mrf.mxu0
      %v1427 = vadd.f32 0.0, %v1426
      %1428 = vmatmul.f32.gmra.mxu0 %v826
      %v1429 = vpop.f32.mrf.mxu0
      %v1430 = vadd.f32 0.0, %v1429
      %1431 = vmatmul.f32.gmra.mxu0 %v828
      %v1432 = vpop.f32.mrf.mxu0
      %v1433 = vadd.f32 0.0, %v1432
      %1434 = vmatmul.f32.gmra.mxu0 %v830
      %v1435 = vpop.f32.mrf.mxu0
      %v1436 = vadd.f32 0.0, %v1435
      %1437 = vmatmul.f32.gmra.mxu0 %v832
      %v1438 = vpop.f32.mrf.mxu0
      %v1439 = vadd.f32 0.0, %v1438
      %1440 = vmatmul.f32.gmra.mxu0 %v834
      %v1441 = vpop.f32.mrf.mxu0
      %v1442 = vadd.f32 0.0, %v1441
      %1443 = vmatmul.f32.gmra.mxu0 %v836
      %v1444 = vpop.f32.mrf.mxu0
      %v1445 = vadd.f32 0.0, %v1444
      %1446 = vmatmul.f32.gmra.mxu0 %v838
      %v1447 = vpop.f32.mrf.mxu0
      %v1448 = vadd.f32 0.0, %v1447
      %1449 = vmatmul.f32.gmra.mxu0 %v1113
      %v1450 = vpop.f32.mrf.mxu0
      %v1451 = vadd.f32 0.0, %v1450
      %1452 = vmatmul.f32.gmra.mxu0 %v1115
      %v1453 = vpop.f32.mrf.mxu0
      %v1454 = vadd.f32 0.0, %v1453
      %1455 = vmatmul.f32.gmra.mxu0 %v1390
      %v1456 = vpop.f32.mrf.mxu0
      %v1457 = vadd.f32 0.0, %v1456
      %1458 = vmatmul.f32.gmra.mxu0 %v1392
      %v1459 = vpop.f32.mrf.mxu0
      %v1460 = vadd.f32 0.0, %v1459
      %1461 = vdwg.mxu0
      %v1462 = vadd.f32 %v1369, %v1415
      %v1463 = vadd.f32 %v1370, %v1418
      %v1464 = vadd.f32 %v1371, %v1421
      %v1465 = vadd.f32 %v1372, %v1424
      %v1466 = vadd.f32 %v1373, %v1427
      %v1467 = vadd.f32 %v1374, %v1430
      %v1468 = vadd.f32 %v1375, %v1433
      %v1469 = vadd.f32 %v1376, %v1436
      %v1470 = vadd.f32 %v1377, %v1439
      %v1471 = vadd.f32 %v1378, %v1442
      %v1472 = vadd.f32 %v1379, %v1445
      %v1473 = vadd.f32 %v1380, %v1448
      %v1474 = vadd.f32 %v1381, %v1451
      %v1475 = vadd.f32 %v1382, %v1454
      %v1476 = vadd.f32 %v1383, %v1457
      %v1477 = vadd.f32 %v1384, %v1460
      %v1478 = vld [vmem:[%s2] sm:$0x1]
      %v1480 = vperm.slane %v1478, 0
      %v1482 = vadd.f32 %v1462, %v1480
      %v1483 = vadd.f32 %v1463, %v1480
      %v1484 = vadd.f32 %v1464, %v1480
      %v1485 = vadd.f32 %v1465, %v1480
      %v1486 = vadd.f32 %v1466, %v1480
      %v1487 = vadd.f32 %v1467, %v1480
      %v1488 = vadd.f32 %v1468, %v1480
      %v1489 = vadd.f32 %v1469, %v1480
      %v1490 = vadd.f32 %v1470, %v1480
      %v1491 = vadd.f32 %v1471, %v1480
      %v1492 = vadd.f32 %v1472, %v1480
      %v1493 = vadd.f32 %v1473, %v1480
      %v1494 = vadd.f32 %v1474, %v1480
      %v1495 = vadd.f32 %v1475, %v1480
      %v1496 = vadd.f32 %v1476, %v1480
      %v1497 = vadd.f32 %v1477, %v1480
      %1498 = vst.msk [vmem:[%s248] sm:$0xff] %vm565, %v1482
      %1499 = vst.msk [vmem:[%s248 + $0x8] sm:$0xff] %vm565, %v1483
      %1500 = vst.msk [vmem:[%s248 + $0x10] sm:$0xff] %vm565, %v1484
      %1501 = vst.msk [vmem:[%s248 + $0x18] sm:$0xff] %vm565, %v1485
      %1502 = vst.msk [vmem:[%s248 + $0x20] sm:$0xff] %vm565, %v1486
      %1503 = vst.msk [vmem:[%s248 + $0x28] sm:$0xff] %vm565, %v1487
      %1504 = vst.msk [vmem:[%s248 + $0x30] sm:$0xff] %vm565, %v1488
      %1505 = vst.msk [vmem:[%s248 + $0x38] sm:$0xff] %vm565, %v1489
      %1506 = vst.msk [vmem:[%s248 + $0x40] sm:$0xff] %vm565, %v1490
      %1507 = vst.msk [vmem:[%s248 + $0x48] sm:$0xff] %vm565, %v1491
      %1508 = vst.msk [vmem:[%s248 + $0x50] sm:$0xff] %vm565, %v1492
      %1509 = vst.msk [vmem:[%s248 + $0x58] sm:$0xff] %vm565, %v1493
      %1510 = vst.msk [vmem:[%s248 + $0x60] sm:$0xff] %vm565, %v1494
      %1511 = vst.msk [vmem:[%s248 + $0x68] sm:$0xff] %vm565, %v1495
      %1512 = vst.msk [vmem:[%s248 + $0x70] sm:$0xff] %vm565, %v1496
      %1513 = vst.msk [vmem:[%s248 + $0x78] sm:$0xff] %vm565, %v1497
      %s1514 = smul.u32 8, %s21
      %p1515 = scmp.lt.s32.totalorder %s20, 1
      %s1516 = scalar_select %p1515, %s20, 1
      %p1517 = scmp.lt.s32.totalorder %s1514, 15
      %s1518 = scalar_select %p1517, %s1514, 15
      %s1519 = smul.addr %s1518, 2
      %s1520 = smul.addr %s1516, 32
      %s1521 = sadd.s32 %s1519, %s1520
      %s1522 = smul.addr %s1521, 8
      %s1523 = scalar_lea.vmem %s5, %s1522
      // Predicated region
      $region41: #{resblock_forward.8} parent=39 // pred_check
        %p1524 = pneg %p158
      $region42: #{resblock_forward.8} parent=39 // pred_check_branch
        %1526 = sbr.rel (%p1524) target = $region44
      $region43: #{resblock_forward.8} parent=39 // pred_region
        %s1527 = smul.u32 8, %s21
      $region44: #{resblock_forward.8} parent=39 // pred_fallthru
        _
    $region40: #{resblock_forward.8} parent=5 // pred_fallthru
      _
    %p1528 = scmp.le.s32.totalorder 2, %s11
    // Predicated region
    $region45: #{resblock_forward.8} parent=5 // pred_check
      %p1529 = pneg %p1528
    $region46: #{resblock_forward.8} parent=5 // pred_check_branch
      %1531 = sbr.rel (%p1529) target = $region48
    $region47: #{resblock_forward.8} parent=5 // pred_region
      %s1532 = ssub.s32 %s11, 2
      // Predicated region
      $region49: #{resblock_forward.8} parent=47 // pred_check
        %p1533 = pneg %p164
      $region50: #{resblock_forward.8} parent=47 // pred_check_branch
        %1535 = sbr.rel (%p1533) target = $region52
      $region51: #{resblock_forward.8} parent=47 // pred_region
        %s1536 = smul.u32 8, %s23
        %p1537 = scmp.lt.s32.totalorder %s22, 1
        %s1538 = scalar_select %p1537, %s22, 1
        %p1539 = scmp.lt.s32.totalorder %s1536, 15
        %s1540 = scalar_select %p1539, %s1536, 15
        %s1541 = smul.addr %s1540, 2
        %s1542 = smul.addr %s1538, 32
        %s1543 = sadd.s32 %s1541, %s1542
        %s1544 = smul.addr %s1543, 8
        %s1545 = scalar_lea.vmem %s5, %s1544
      $region52: #{resblock_forward.8} parent=47 // pred_fallthru
        _
    $region48: #{resblock_forward.8} parent=5 // pred_fallthru
      _
  $region6: #{resblock_forward.8} parent=0 // loop_footer
    %s15 = sadd.s32 1, %s11
  $region7: #{resblock_forward.8} parent=0 // loop_footer_branch
    %10 = sbr.rel target = $region3
  $region8: #{resblock_forward.8} parent=0 // loop_exit
    _

// kernel: resblock_forward.12
$region0: #{resblock_forward.12}
  #allocation0 [shape = 'u32[]', space=smem, size = 0x4, offset = 0x4, fixed_abs, tag = 'smem constant byte address 0x4 - core index']
  #allocation1 [shape = 'u32[72,128]{1,0:T(1,128)}', space=vmem, size = 0x9000, scoped, tag = 'internal scratch']
  %s0 = inlined_call_operand.vmem [shape: f32[2,18,18,4], index: 0, kind: input, shape index: {}]
  %s1 = inlined_call_operand.vmem [shape: f32[3,3,4,4], index: 1, kind: input, shape index: {}]
  %s2 = inlined_call_operand.vmem [shape: f32[1,4], index: 2, kind: input, shape index: {}]
  %s3 = inlined_call_operand.vmem [shape: f32[1,1,4], index: 3, kind: input, shape index: {}]
  %s4 = inlined_call_operand.vmem [shape: f32[1,1,4], index: 4, kind: input, shape index: {}]
  %s5 = inlined_call_operand.vmem [shape: f32[2,16,16,4], index: 5, kind: input, shape index: {}]
  %s6 = inlined_call_operand.vmem [shape: f32[2,16,16,4], index: 6, kind: output, shape index: {0}]
  %s7 = inlined_call_operand.vmem [shape: f32[2,2,2,4], index: 7, kind: output, shape index: {1}]
  %8 = xla_tuple %s6, %s7
  %s9 = sld [smem:[#allocation0]]
  $region65: #{resblock_forward.12} parent=0
    _
  %s11 = ssub.s32 1, %s9
  %s12 = scalar_select 0, %s11, %s9
  loop: start=0, step=1, limit=6
  $region2: #{resblock_forward.12} parent=0 // loop_pre_header
    _
  $region3: #{resblock_forward.12} parent=0 // loop_header
    %s14 = sphi 0, %s18
    %p15 = scmp.ge.s32.totalorder %s14, 6
    %s21 = sphi 0, %s33
    %s22 = sphi 0, %s29
    %s23 = sphi 0, %s21
    %s24 = sphi 0, %s22
    %s25 = sphi 0, %s23
    %s26 = sphi 0, %s24
    %s36 = sphi 0, %s38
    %s39 = sphi 0, %s36
    %s40 = sphi 0, %s39
    %s56 = sphi 0, %s40
    %s60 = sphi 0, %s60
    %s62 = sphi 0, %s60
    %s63 = sphi 0, %s62
    %s77 = sphi 0, %s63
    %s81 = sphi 0, %s81
    %s83 = sphi 0, %s81
    %s84 = sphi 0, %s83
    %s98 = sphi 0, %s84
    %s102 = sphi 0, %s102
    %s104 = sphi 0, %s102
    %s105 = sphi 0, %s104
    %s119 = sphi 0, %s105
    %s123 = sphi 0, %s123
    %s125 = sphi 0, %s123
    %s126 = sphi 0, %s125
    %s140 = sphi 0, %s126
    %s148 = sphi 0, %s150
    %s151 = sphi 0, %s148
    %s152 = sphi 0, %s151
    %s168 = sphi 0, %s152
    %s176 = sphi 0, %s178
    %s179 = sphi 0, %s176
    %s180 = sphi 0, %s179
    %s196 = sphi 0, %s180
    %s204 = sphi 0, %s206
    %s207 = sphi 0, %s204
    %s208 = sphi 0, %s207
    %s224 = sphi 0, %s208
  $region4: #{resblock_forward.12} parent=0 // loop_header_branch
    %17 = sbr.rel (%p15) target = $region8
  $region5: #{resblock_forward.12} parent=0 // loop_body
    %s19 = ssub.s32 %s14, 1
    %s20 = ssub.s32 %s14, 2
    %s27 = sadd.s32 1, %s22
    %p28 = scmp.ge.s32.totalorder %s27, 2
    %s29 = scalar_select %p28, 0, %s27
    %s30 = sadd.s32 1, %s21
    %s31 = scalar_select %p28, %s30, %s21
    %p32 = scmp.ge.s32.totalorder %s31, 2
    %s33 = scalar_select %p32, 0, %s31
    %s34 = ssub.s32 %s21, %s33
    %p35 = scmp.eq.s32.totalorder %s34, 0
    %s37 = sadd.s32 %s36, 1
    %s38 = scalar_select %p35, %s36, %s37
    %p41 = pneg %p35
    %p42 = scmp.eq.s32.totalorder %s14, 3
    %p43 = por %p41, %p42
    %p44 = scmp.ne.s32.totalorder %s36, %s39
    %p45 = scmp.eq.s32.totalorder %s14, 0
    %p46 = por %p44, %p45
    %p47 = scmp.ne.s32.totalorder %s36, %s39
    %p48 = scmp.eq.s32.totalorder %s19, 3
    %p49 = por %p47, %p48
    %p50 = scmp.ne.s32.totalorder %s39, %s40
    %p51 = scmp.eq.s32.totalorder %s19, 0
    %p52 = por %p50, %p51
    %p53 = scmp.ne.s32.totalorder %s39, %s40
    %p54 = scmp.eq.s32.totalorder %s20, 3
    %p55 = por %p53, %p54
    %p57 = scmp.ne.s32.totalorder %s40, %s56
    %p58 = scmp.eq.s32.totalorder %s20, 0
    %p59 = por %p57, %p58
    %s61 = sadd.s32 %s60, 1
    %p64 = scmp.eq.s32.totalorder %s14, 3
    %p65 = scmp.ne.s32.totalorder %s60, %s62
    %p66 = scmp.eq.s32.totalorder %s14, 0
    %p67 = por %p65, %p66
    %p68 = scmp.ne.s32.totalorder %s60, %s62
    %p69 = scmp.eq.s32.totalorder %s19, 3
    %p70 = por %p68, %p69
    %p71 = scmp.ne.s32.totalorder %s62, %s63
    %p72 = scmp.eq.s32.totalorder %s19, 0
    %p73 = por %p71, %p72
    %p74 = scmp.ne.s32.totalorder %s62, %s63
    %p75 = scmp.eq.s32.totalorder %s20, 3
    %p76 = por %p74, %p75
    %p78 = scmp.ne.s32.totalorder %s63, %s77
    %p79 = scmp.eq.s32.totalorder %s20, 0
    %p80 = por %p78, %p79
    %s82 = sadd.s32 %s81, 1
    %p85 = scmp.eq.s32.totalorder %s14, 3
    %p86 = scmp.ne.s32.totalorder %s81, %s83
    %p87 = scmp.eq.s32.totalorder %s14, 0
    %p88 = por %p86, %p87
    %p89 = scmp.ne.s32.totalorder %s81, %s83
    %p90 = scmp.eq.s32.totalorder %s19, 3
    %p91 = por %p89, %p90
    %p92 = scmp.ne.s32.totalorder %s83, %s84
    %p93 = scmp.eq.s32.totalorder %s19, 0
    %p94 = por %p92, %p93
    %p95 = scmp.ne.s32.totalorder %s83, %s84
    %p96 = scmp.eq.s32.totalorder %s20, 3
    %p97 = por %p95, %p96
    %p99 = scmp.ne.s32.totalorder %s84, %s98
    %p100 = scmp.eq.s32.totalorder %s20, 0
    %p101 = por %p99, %p100
    %s103 = sadd.s32 %s102, 1
    %p106 = scmp.eq.s32.totalorder %s14, 3
    %p107 = scmp.ne.s32.totalorder %s102, %s104
    %p108 = scmp.eq.s32.totalorder %s14, 0
    %p109 = por %p107, %p108
    %p110 = scmp.ne.s32.totalorder %s102, %s104
    %p111 = scmp.eq.s32.totalorder %s19, 3
    %p112 = por %p110, %p111
    %p113 = scmp.ne.s32.totalorder %s104, %s105
    %p114 = scmp.eq.s32.totalorder %s19, 0
    %p115 = por %p113, %p114
    %p116 = scmp.ne.s32.totalorder %s104, %s105
    %p117 = scmp.eq.s32.totalorder %s20, 3
    %p118 = por %p116, %p117
    %p120 = scmp.ne.s32.totalorder %s105, %s119
    %p121 = scmp.eq.s32.totalorder %s20, 0
    %p122 = por %p120, %p121
    %s124 = sadd.s32 %s123, 1
    %p127 = scmp.eq.s32.totalorder %s14, 3
    %p128 = scmp.ne.s32.totalorder %s123, %s125
    %p129 = scmp.eq.s32.totalorder %s14, 0
    %p130 = por %p128, %p129
    %p131 = scmp.ne.s32.totalorder %s123, %s125
    %p132 = scmp.eq.s32.totalorder %s19, 3
    %p133 = por %p131, %p132
    %p134 = scmp.ne.s32.totalorder %s125, %s126
    %p135 = scmp.eq.s32.totalorder %s19, 0
    %p136 = por %p134, %p135
    %p137 = scmp.ne.s32.totalorder %s125, %s126
    %p138 = scmp.eq.s32.totalorder %s20, 3
    %p139 = por %p137, %p138
    %p141 = scmp.ne.s32.totalorder %s126, %s140
    %p142 = scmp.eq.s32.totalorder %s20, 0
    %p143 = por %p141, %p142
    %s144 = ssub.s32 %s21, %s33
    %s145 = ssub.s32 %s22, %s29
    %s146 = sor.u32 %s144, %s145
    %p147 = scmp.eq.s32.totalorder %s146, 0
    %s149 = sadd.s32 %s148, 1
    %s150 = scalar_select %p147, %s148, %s149
    %p153 = pneg %p147
    %p154 = scmp.eq.s32.totalorder %s14, 3
    %p155 = por %p153, %p154
    %p156 = scmp.ne.s32.totalorder %s148, %s151
    %p157 = scmp.eq.s32.totalorder %s14, 0
    %p158 = por %p156, %p157
    %p159 = scmp.ne.s32.totalorder %s148, %s151
    %p160 = scmp.eq.s32.totalorder %s19, 3
    %p161 = por %p159, %p160
    %p162 = scmp.ne.s32.totalorder %s151, %s152
    %p163 = scmp.eq.s32.totalorder %s19, 0
    %p164 = por %p162, %p163
    %p165 = scmp.ne.s32.totalorder %s151, %s152
    %p166 = scmp.eq.s32.totalorder %s20, 3
    %p167 = por %p165, %p166
    %p169 = scmp.ne.s32.totalorder %s152, %s168
    %p170 = scmp.eq.s32.totalorder %s20, 0
    %p171 = por %p169, %p170
    %s172 = ssub.s32 %s21, %s33
    %s173 = ssub.s32 %s22, %s29
    %s174 = sor.u32 %s172, %s173
    %p175 = scmp.eq.s32.totalorder %s174, 0
    %s177 = sadd.s32 %s176, 1
    %s178 = scalar_select %p175, %s176, %s177
    %p181 = pneg %p175
    %p182 = scmp.eq.s32.totalorder %s14, 3
    %p183 = por %p181, %p182
    %p184 = scmp.ne.s32.totalorder %s176, %s179
    %p185 = scmp.eq.s32.totalorder %s14, 0
    %p186 = por %p184, %p185
    %p187 = scmp.ne.s32.totalorder %s176, %s179
    %p188 = scmp.eq.s32.totalorder %s19, 3
    %p189 = por %p187, %p188
    %p190 = scmp.ne.s32.totalorder %s179, %s180
    %p191 = scmp.eq.s32.totalorder %s19, 0
    %p192 = por %p190, %p191
    %p193 = scmp.ne.s32.totalorder %s179, %s180
    %p194 = scmp.eq.s32.totalorder %s20, 3
    %p195 = por %p193, %p194
    %p197 = scmp.ne.s32.totalorder %s180, %s196
    %p198 = scmp.eq.s32.totalorder %s20, 0
    %p199 = por %p197, %p198
    %s200 = ssub.s32 %s21, %s33
    %s201 = ssub.s32 %s22, %s29
    %s202 = sor.u32 %s200, %s201
    %p203 = scmp.eq.s32.totalorder %s202, 0
    %s205 = sadd.s32 %s204, 1
    %s206 = scalar_select %p203, %s204, %s205
    %p209 = pneg %p203
    %p210 = scmp.eq.s32.totalorder %s14, 3
    %p211 = por %p209, %p210
    %p212 = scmp.ne.s32.totalorder %s204, %s207
    %p213 = scmp.eq.s32.totalorder %s14, 0
    %p214 = por %p212, %p213
    %p215 = scmp.ne.s32.totalorder %s204, %s207
    %p216 = scmp.eq.s32.totalorder %s19, 3
    %p217 = por %p215, %p216
    %p218 = scmp.ne.s32.totalorder %s207, %s208
    %p219 = scmp.eq.s32.totalorder %s19, 0
    %p220 = por %p218, %p219
    %p221 = scmp.ne.s32.totalorder %s207, %s208
    %p222 = scmp.eq.s32.totalorder %s20, 3
    %p223 = por %p221, %p222
    %p225 = scmp.ne.s32.totalorder %s208, %s224
    %p226 = scmp.eq.s32.totalorder %s20, 0
    %p227 = por %p225, %p226
    %p228 = scmp.le.s32.totalorder 1, %s14
    %p229 = scmp.lt.s32.totalorder %s14, 5
    %p230 = pnand %p228, %p229
    %p231 = pneg %p230
    // Predicated region
    $region9: #{resblock_forward.12} parent=5 // pred_check
      _
    $region10: #{resblock_forward.12} parent=5 // pred_check_branch
      %233 = sbr.rel (%p230) target = $region12
    $region11: #{resblock_forward.12} parent=5 // pred_region
      %s234 = ssub.s32 %s14, 1
      // Predicated region
      $region13: #{resblock_forward.12} parent=11 // pred_check
        %p235 = pneg %p73
      $region14: #{resblock_forward.12} parent=11 // pred_check_branch
        %237 = sbr.rel (%p235) target = $region16
      $region15: #{resblock_forward.12} parent=11 // pred_region
        _
      $region16: #{resblock_forward.12} parent=11 // pred_fallthru
        _
      // Predicated region
      $region17: #{resblock_forward.12} parent=11 // pred_check
        %p238 = pneg %p94
      $region18: #{resblock_forward.12} parent=11 // pred_check_branch
        %240 = sbr.rel (%p238) target = $region20
      $region19: #{resblock_forward.12} parent=11 // pred_region
        _
      $region20: #{resblock_forward.12} parent=11 // pred_fallthru
        _
      // Predicated region
      $region21: #{resblock_forward.12} parent=11 // pred_check
        %p241 = pneg %p115
      $region22: #{resblock_forward.12} parent=11 // pred_check_branch
        %243 = sbr.rel (%p241) target = $region24
      $region23: #{resblock_forward.12} parent=11 // pred_region
        _
      $region24: #{resblock_forward.12} parent=11 // pred_fallthru
        _
      // Predicated region
      $region25: #{resblock_forward.12} parent=11 // pred_check
        %p244 = pneg %p136
      $region26: #{resblock_forward.12} parent=11 // pred_check_branch
        %246 = sbr.rel (%p244) target = $region28
      $region27: #{resblock_forward.12} parent=11 // pred_region
        _
      $region28: #{resblock_forward.12} parent=11 // pred_fallthru
        _
    $region12: #{resblock_forward.12} parent=5 // pred_fallthru
      _
    %p247 = scmp.lt.s32.totalorder %s14, 4
    // Predicated region
    $region29: #{resblock_forward.12} parent=5 // pred_check
      %p248 = pneg %p247
    $region30: #{resblock_forward.12} parent=5 // pred_check_branch
      %250 = sbr.rel (%p248) target = $region32
    $region31: #{resblock_forward.12} parent=5 // pred_region
      // Predicated region
      $region33: #{resblock_forward.12} parent=31 // pred_check
        %p251 = pneg %p46
      $region34: #{resblock_forward.12} parent=31 // pred_check_branch
        %253 = sbr.rel (%p251) target = $region36
      $region35: #{resblock_forward.12} parent=31 // pred_region
        %p254 = scmp.lt.s32.totalorder %s21, 1
        %s255 = scalar_select %p254, %s21, 1
        %s256 = smul.addr %s255, 54
        %s257 = smul.addr %s256, 8
        %s258 = scalar_lea.vmem %s0, %s257
      $region36: #{resblock_forward.12} parent=31 // pred_fallthru
        _
      // Predicated region
      $region37: #{resblock_forward.12} parent=31 // pred_check
        %p259 = pneg %p158
      $region38: #{resblock_forward.12} parent=31 // pred_check_branch
        %261 = sbr.rel (%p259) target = $region40
      $region39: #{resblock_forward.12} parent=31 // pred_region
        %s262 = smul.u32 8, %s22
        %p263 = scmp.lt.s32.totalorder %s21, 1
        %s264 = scalar_select %p263, %s21, 1
        %p265 = scmp.lt.s32.totalorder %s262, 15
        %s266 = scalar_select %p265, %s262, 15
        %s267 = smul.addr %s266, 2
        %s268 = smul.addr %s264, 32
        %s269 = sadd.s32 %s267, %s268
        %s270 = smul.addr %s269, 8
        %s271 = scalar_lea.vmem %s5, %s270
        %s272 = smul.u32 8, %s22
      $region40: #{resblock_forward.12} parent=31 // pred_fallthru
        _
    $region32: #{resblock_forward.12} parent=5 // pred_fallthru
      _
    %p273 = scmp.le.s32.totalorder 1, %s14
    %p274 = scmp.lt.s32.totalorder %s14, 5
    %p275 = pnand %p273, %p274
    %p276 = pneg %p275
    // Predicated region
    $region41: #{resblock_forward.12} parent=5 // pred_check
      _
    $region42: #{resblock_forward.12} parent=5 // pred_check_branch
      %278 = sbr.rel (%p275) target = $region44
    $region43: #{resblock_forward.12} parent=5 // pred_region
      %s279 = ssub.s32 %s14, 1
      %p280 = scmp.lt.s32.totalorder %s23, 1
      %s281 = scalar_select %p280, %s23, 1
      %s282 = smul.addr %s281, 54
      %s283 = smul.addr %s282, 8
      %s284 = scalar_lea.vmem %s0, %s283
      %p285 = pneg %p52
      %p286 = pneg %p49
      %p287 = pneg %p73
      %p288 = pneg %p70
      %p289 = pneg %p94
      %p290 = pneg %p91
      %p291 = pneg %p115
      %p292 = pneg %p112
      %p293 = pneg %p136
      %p294 = pneg %p133
      %s295 = smul.u32 8, %s24
      %p296 = scmp.lt.s32.totalorder %s23, 1
      %s297 = scalar_select %p296, %s23, 1
      %p298 = scmp.lt.s32.totalorder %s295, 15
      %s299 = scalar_select %p298, %s295, 15
      %s300 = smul.addr %s299, 2
      %s301 = smul.addr %s297, 32
      %s302 = sadd.s32 %s300, %s301
      %s303 = smul.addr %s302, 8
      %s304 = scalar_lea.vmem %s5, %s303
      %p305 = pneg %p164
      %p306 = pneg %p161
      %p307 = pneg %p192
      %p308 = pneg %p189
      %s309 = smul.u32 8, %s24
      %p310 = scmp.lt.s32.totalorder %s23, 1
      %s311 = scalar_select %p310, %s23, 1
      %p312 = scmp.lt.s32.totalorder %s309, 15
      %s313 = scalar_select %p312, %s309, 15
      %s314 = smul.addr %s313, 2
      %s315 = smul.addr %s311, 32
      %s316 = sadd.s32 %s314, %s315
      %s317 = smul.addr %s316, 8
      %s318 = scalar_lea.vmem %s6, %s317
      %p319 = pneg %p220
      %p320 = pneg %p217
      %p321 = scmp.lt.s32.totalorder %s23, 1
      %s322 = scalar_select %p321, %s23, 1
      %p323 = scmp.lt.s32.totalorder %s24, 1
      %s324 = scalar_select %p323, %s24, 1
      %s325 = smul.addr %s322, 2
      %s326 = sadd.s32 %s324, %s325
      %s327 = smul.addr %s326, 2
      %s328 = scalar_lea.vmem %s7, %s327
      %p329 = scmp.lt.s32.totalorder %s23, 1
      %s330 = scalar_select %p329, %s23, 1
      %s331 = smul.addr %s330, 54
      %s332 = smul.addr %s331, 8
      %s333 = scalar_lea.vmem %s0, %s332
      %s334 = smul.u32 8, %s24
      %p335 = scmp.lt.s32.totalorder %s23, 1
      %s336 = scalar_select %p335, %s23, 1
      %p337 = scmp.lt.s32.totalorder %s334, 15
      %s338 = scalar_select %p337, %s334, 15
      %s339 = smul.addr %s338, 2
      %s340 = smul.addr %s336, 32
      %s341 = sadd.s32 %s339, %s340
      %s342 = smul.addr %s341, 8
      %s343 = scalar_lea.vmem %s5, %s342
      %s344 = smul.u32 8, %s24
      %s345 = smul.u32 8, %s24
      %p346 = scmp.lt.s32.totalorder %s23, 1
      %s347 = scalar_select %p346, %s23, 1
      %p348 = scmp.lt.s32.totalorder %s345, 15
      %s349 = scalar_select %p348, %s345, 15
      %s350 = smul.addr %s349, 2
      %s351 = smul.addr %s347, 32
      %s352 = sadd.s32 %s350, %s351
      %s353 = smul.addr %s352, 8
      %s354 = scalar_lea.vmem %s6, %s353
      %s355 = smul.u32 8, %s24
      %p356 = scmp.lt.s32.totalorder %s23, 1
      %s357 = scalar_select %p356, %s23, 1
      %p358 = scmp.lt.s32.totalorder %s24, 1
      %s359 = scalar_select %p358, %s24, 1
      %s360 = smul.addr %s357, 2
      %s361 = sadd.s32 %s359, %s360
      %s362 = smul.addr %s361, 2
      %s363 = scalar_lea.vmem %s7, %s362
      %s364 = smul.u32 %s24, 8
      %s365 = smul.u32 %s364, 24
      %s366 = scalar_lea.vmem %s333, %s365
      %v367 = vld [vmem:[%s366] sm:$0xff]
      %v368 = vld [vmem:[%s366 + $0x8] sm:$0xff]
      %v369 = vld [vmem:[%s366 + $0x10] sm:$0x3]
      %v370 = vld [vmem:[%s366 + $0x18] sm:$0xff]
      %v371 = vld [vmem:[%s366 + $0x20] sm:$0xff]
      %v372 = vld [vmem:[%s366 + $0x28] sm:$0x3]
      %v373 = vld [vmem:[%s366 + $0x30] sm:$0xff]
      %v374 = vld [vmem:[%s366 + $0x38] sm:$0xff]
      %v375 = vld [vmem:[%s366 + $0x40] sm:$0x3]
      %v376 = vld [vmem:[%s366 + $0x48] sm:$0xff]
      %v377 = vld [vmem:[%s366 + $0x50] sm:$0xff]
      %v378 = vld [vmem:[%s366 + $0x58] sm:$0x3]
      %v379 = vld [vmem:[%s366 + $0x60] sm:$0xff]
      %v380 = vld [vmem:[%s366 + $0x68] sm:$0xff]
      %v381 = vld [vmem:[%s366 + $0x70] sm:$0x3]
      %v382 = vld [vmem:[%s366 + $0x78] sm:$0xff]
      %v383 = vld [vmem:[%s366 + $0x80] sm:$0xff]
      %v384 = vld [vmem:[%s366 + $0x88] sm:$0x3]
      %v385 = vld [vmem:[%s366 + $0x90] sm:$0xff]
      %v386 = vld [vmem:[%s366 + $0x98] sm:$0xff]
      %v387 = vld [vmem:[%s366 + $0xa0] sm:$0x3]
      %v388 = vld [vmem:[%s366 + $0xa8] sm:$0xff]
      %v389 = vld [vmem:[%s366 + $0xb0] sm:$0xff]
      %v390 = vld [vmem:[%s366 + $0xb8] sm:$0x3]
      %v391 = vld [vmem:[%s366 + $0xc0] sm:$0xff]
      %v392 = vld [vmem:[%s366 + $0xc8] sm:$0xff]
      %v393 = vld [vmem:[%s366 + $0xd0] sm:$0x3]
      %v394 = vld [vmem:[%s366 + $0xd8] sm:$0xff]
      %v395 = vld [vmem:[%s366 + $0xe0] sm:$0xff]
      %v396 = vld [vmem:[%s366 + $0xe8] sm:$0x3]
      %v397 = vld [vmem:[%s3] sm:$0x1]
      %v399 = vperm.slane %v397, 0
      %v401 = vmul.f32 %v367, %v399
      %v402 = vmul.f32 %v368, %v399
      %v403 = vmul.f32 %v369, %v399
      %v404 = vmul.f32 %v370, %v399
      %v405 = vmul.f32 %v371, %v399
      %v406 = vmul.f32 %v372, %v399
      %v407 = vmul.f32 %v373, %v399
      %v408 = vmul.f32 %v374, %v399
      %v409 = vmul.f32 %v375, %v399
      %v410 = vmul.f32 %v376, %v399
      %v411 = vmul.f32 %v377, %v399
      %v412 = vmul.f32 %v378, %v399
      %v413 = vmul.f32 %v379, %v399
      %v414 = vmul.f32 %v380, %v399
      %v415 = vmul.f32 %v381, %v399
      %v416 = vmul.f32 %v382, %v399
      %v417 = vmul.f32 %v383, %v399
      %v418 = vmul.f32 %v384, %v399
      %v419 = vmul.f32 %v385, %v399
      %v420 = vmul.f32 %v386, %v399
      %v421 = vmul.f32 %v387, %v399
      %v422 = vmul.f32 %v388, %v399
      %v423 = vmul.f32 %v389, %v399
      %v424 = vmul.f32 %v390, %v399
      %v425 = vmul.f32 %v391, %v399
      %v426 = vmul.f32 %v392, %v399
      %v427 = vmul.f32 %v393, %v399
      %v428 = vmul.f32 %v394, %v399
      %v429 = vmul.f32 %v395, %v399
      %v430 = vmul.f32 %v396, %v399
      %v431 = vld [vmem:[%s4] sm:$0x1]
      %v433 = vperm.slane %v431, 0
      %v435 = vadd.f32 %v401, %v433
      %v436 = vadd.f32 %v402, %v433
      %v437 = vadd.f32 %v403, %v433
      %v438 = vadd.f32 %v404, %v433
      %v439 = vadd.f32 %v405, %v433
      %v440 = vadd.f32 %v406, %v433
      %v441 = vadd.f32 %v407, %v433
      %v442 = vadd.f32 %v408, %v433
      %v443 = vadd.f32 %v409, %v433
      %v444 = vadd.f32 %v410, %v433
      %v445 = vadd.f32 %v411, %v433
      %v446 = vadd.f32 %v412, %v433
      %v447 = vadd.f32 %v413, %v433
      %v448 = vadd.f32 %v414, %v433
      %v449 = vadd.f32 %v415, %v433
      %v450 = vadd.f32 %v416, %v433
      %v451 = vadd.f32 %v417, %v433
      %v452 = vadd.f32 %v418, %v433
      %v453 = vadd.f32 %v419, %v433
      %v454 = vadd.f32 %v420, %v433
      %v455 = vadd.f32 %v421, %v433
      %v456 = vadd.f32 %v422, %v433
      %v457 = vadd.f32 %v423, %v433
      %v458 = vadd.f32 %v424, %v433
      %v459 = vadd.f32 %v425, %v433
      %v460 = vadd.f32 %v426, %v433
      %v461 = vadd.f32 %v427, %v433
      %v462 = vadd.f32 %v428, %v433
      %v463 = vadd.f32 %v429, %v433
      %v464 = vadd.f32 %v430, %v433
      %v465 = vstv %s364
      %v466 = vadd.s32 %v465, 1
      %v467 = vadd.s32 %v465, 2
      %v468 = vadd.s32 %v465, 3
      %v469 = vadd.s32 %v465, 4
      %v470 = vadd.s32 %v465, 5
      %v471 = vadd.s32 %v465, 6
      %v472 = vadd.s32 %v465, 7
      %v473 = vadd.s32 %v465, 8
      %v474 = vadd.s32 %v465, 9
      %v475 = vlaneseq
      %v476 = vshrl.u32 %v475, 7
      %v477 = vadd.s32 %v476, 8
      %v478 = vadd.s32 %v476, 16
      %vm479 = vcmp.ge.s32.totalorder %v465, 1
      %vm480 = vcmp.ge.s32.totalorder %v466, 1
      %vm481 = vcmp.ge.s32.totalorder %v467, 1
      %vm482 = vcmp.ge.s32.totalorder %v468, 1
      %vm483 = vcmp.ge.s32.totalorder %v469, 1
      %vm484 = vcmp.ge.s32.totalorder %v470, 1
      %vm485 = vcmp.ge.s32.totalorder %v471, 1
      %vm486 = vcmp.ge.s32.totalorder %v472, 1
      %vm487 = vcmp.ge.s32.totalorder %v473, 1
      %vm488 = vcmp.ge.s32.totalorder %v474, 1
      %vm489 = vcmp.le.s32.totalorder %v465, 16
      %vm490 = vcmp.le.s32.totalorder %v466, 16
      %vm491 = vcmp.le.s32.totalorder %v467, 16
      %vm492 = vcmp.le.s32.totalorder %v468, 16
      %vm493 = vcmp.le.s32.totalorder %v469, 16
      %vm494 = vcmp.le.s32.totalorder %v470, 16
      %vm495 = vcmp.le.s32.totalorder %v471, 16
      %vm496 = vcmp.le.s32.totalorder %v472, 16
      %vm497 = vcmp.le.s32.totalorder %v473, 16
      %vm498 = vcmp.le.s32.totalorder %v474, 16
      %vm499 = vmand %vm479, %vm489
      %vm500 = vmand %vm480, %vm490
      %vm501 = vmand %vm481, %vm491
      %vm502 = vmand %vm482, %vm492
      %vm503 = vmand %vm483, %vm493
      %vm504 = vmand %vm484, %vm494
      %vm505 = vmand %vm485, %vm495
      %vm506 = vmand %vm486, %vm496
      %vm507 = vmand %vm487, %vm497
      %vm508 = vmand %vm488, %vm498
      %vm509 = vcmp.ge.s32.totalorder %v476, 1
      %vm510 = vcmp.ge.s32.totalorder %v477, 1
      %vm511 = vcmp.ge.s32.totalorder %v478, 1
      %vm512 = vmand %vm499, %vm509
      %vm513 = vmand %vm499, %vm510
      %vm514 = vmand %vm499, %vm511
      %vm515 = vmand %vm500, %vm509
      %vm516 = vmand %vm500, %vm510
      %vm517 = vmand %vm500, %vm511
      %vm518 = vmand %vm501, %vm509
      %vm519 = vmand %vm501, %vm510
      %vm520 = vmand %vm501, %vm511
      %vm521 = vmand %vm502, %vm509
      %vm522 = vmand %vm502, %vm510
      %vm523 = vmand %vm502, %vm511
      %vm524 = vmand %vm503, %vm509
      %vm525 = vmand %vm503, %vm510
      %vm526 = vmand %vm503, %vm511
      %vm527 = vmand %vm504, %vm509
      %vm528 = vmand %vm504, %vm510
      %vm529 = vmand %vm504, %vm511
      %vm530 = vmand %vm505, %vm509
      %vm531 = vmand %vm505, %vm510
      %vm532 = vmand %vm505, %vm511
      %vm533 = vmand %vm506, %vm509
      %vm534 = vmand %vm506, %vm510
      %vm535 = vmand %vm506, %vm511
      %vm536 = vmand %vm507, %vm509
      %vm537 = vmand %vm507, %vm510
      %vm538 = vmand %vm507, %vm511
      %vm539 = vmand %vm508, %vm509
      %vm540 = vmand %vm508, %vm510
      %vm541 = vmand %vm508, %vm511
      %vm542 = vcmp.le.s32.totalorder %v476, 16
      %vm543 = vcmp.le.s32.totalorder %v477, 16
      %vm544 = vcmp.le.s32.totalorder %v478, 16
      %vm545 = vmand %vm512, %vm542
      %vm546 = vmand %vm513, %vm543
      %vm547 = vmand %vm514, %vm544
      %vm548 = vmand %vm515, %vm542
      %vm549 = vmand %vm516, %vm543
      %vm550 = vmand %vm517, %vm544
      %vm551 = vmand %vm518, %vm542
      %vm552 = vmand %vm519, %vm543
      %vm553 = vmand %vm520, %vm544
      %vm554 = vmand %vm521, %vm542
      %vm555 = vmand %vm522, %vm543
      %vm556 = vmand %vm523, %vm544
      %vm557 = vmand %vm524, %vm542
      %vm558 = vmand %vm525, %vm543
      %vm559 = vmand %vm526, %vm544
      %vm560 = vmand %vm527, %vm542
      %vm561 = vmand %vm528, %vm543
      %vm562 = vmand %vm529, %vm544
      %vm563 = vmand %vm530, %vm542
      %vm564 = vmand %vm531, %vm543
      %vm565 = vmand %vm532, %vm544
      %vm566 = vmand %vm533, %vm542
      %vm567 = vmand %vm534, %vm543
      %vm568 = vmand %vm535, %vm544
      %vm569 = vmand %vm536, %vm542
      %vm570 = vmand %vm537, %vm543
      %vm571 = vmand %vm538, %vm544
      %vm572 = vmand %vm539, %vm542
      %vm573 = vmand %vm540, %vm543
      %vm574 = vmand %vm541, %vm544
      %v575 = vsel %vm545, %v435, 0.0
      %v576 = vsel %vm546, %v436, 0.0
      %v577 = vsel %vm547, %v437, 0.0
      %v578 = vsel %vm548, %v438, 0.0
      %v579 = vsel %vm549, %v439, 0.0
      %v580 = vsel %vm550, %v440, 0.0
      %v581 = vsel %vm551, %v441, 0.0
      %v582 = vsel %vm552, %v442, 0.0
      %v583 = vsel %vm553, %v443, 0.0
      %v584 = vsel %vm554, %v444, 0.0
      %v585 = vsel %vm555, %v445, 0.0
      %v586 = vsel %vm556, %v446, 0.0
      %v587 = vsel %vm557, %v447, 0.0
      %v588 = vsel %vm558, %v448, 0.0
      %v589 = vsel %vm559, %v449, 0.0
      %v590 = vsel %vm560, %v450, 0.0
      %v591 = vsel %vm561, %v451, 0.0
      %v592 = vsel %vm562, %v452, 0.0
      %v593 = vsel %vm563, %v453, 0.0
      %v594 = vsel %vm564, %v454, 0.0
      %v595 = vsel %vm565, %v455, 0.0
      %v596 = vsel %vm566, %v456, 0.0
      %v597 = vsel %vm567, %v457, 0.0
      %v598 = vsel %vm568, %v458, 0.0
      %v599 = vsel %vm569, %v459, 0.0
      %v600 = vsel %vm570, %v460, 0.0
      %v601 = vsel %vm571, %v461, 0.0
      %v602 = vsel %vm572, %v462, 0.0
      %v603 = vsel %vm573, %v463, 0.0
      %v604 = vsel %vm574, %v464, 0.0
      %v605 = vld [vmem:[%s1] sm:$0xf]
      %v606 = vld [vmem:[%s1 + $0x4] sm:$0xf]
      %v607 = vld [vmem:[%s1 + $0x8] sm:$0xf]
      %v608 = vld [vmem:[%s1 + $0xc] sm:$0xf]
      %v609 = vld [vmem:[%s1 + $0x10] sm:$0xf]
      %v610 = vld [vmem:[%s1 + $0x14] sm:$0xf]
      %v611 = vld [vmem:[%s1 + $0x18] sm:$0xf]
      %v612 = vld [vmem:[%s1 + $0x1c] sm:$0xf]
      %v613 = vld [vmem:[%s1 + $0x20] sm:$0xf]
      %vm638 = vcmask 1046528
      %v639 = vrot.slane %v575, 1
      %v640 = vrot.slane %v576, 1
      %v641 = vsel %vm638, %v639, %v640
      %v642 = vrot.slane %v577, 1
      %v643 = vsel %vm638, %v640, %v642
      %v644 = vrot.slane %v578, 1
      %v645 = vrot.slane %v579, 1
      %v646 = vsel %vm638, %v644, %v645
      %v647 = vrot.slane %v580, 1
      %v648 = vsel %vm638, %v645, %v647
      %v649 = vrot.slane %v581, 1
      %v650 = vrot.slane %v582, 1
      %v651 = vsel %vm638, %v649, %v650
      %v652 = vrot.slane %v583, 1
      %v653 = vsel %vm638, %v650, %v652
      %v654 = vrot.slane %v584, 1
      %v655 = vrot.slane %v585, 1
      %v656 = vsel %vm638, %v654, %v655
      %v657 = vrot.slane %v586, 1
      %v658 = vsel %vm638, %v655, %v657
      %v659 = vrot.slane %v587, 1
      %v660 = vrot.slane %v588, 1
      %v661 = vsel %vm638, %v659, %v660
      %v662 = vrot.slane %v589, 1
      %v663 = vsel %vm638, %v660, %v662
      %v664 = vrot.slane %v590, 1
      %v665 = vrot.slane %v591, 1
      %v666 = vsel %vm638, %v664, %v665
      %v667 = vrot.slane %v592, 1
      %v668 = vsel %vm638, %v665, %v667
      %v669 = vrot.slane %v593, 1
      %v670 = vrot.slane %v594, 1
      %v671 = vsel %vm638, %v669, %v670
      %v672 = vrot.slane %v595, 1
      %v673 = vsel %vm638, %v670, %v672
      %v674 = vrot.slane %v596, 1
      %v675 = vrot.slane %v597, 1
      %v676 = vsel %vm638, %v674, %v675
      %v677 = vrot.slane %v598, 1
      %v678 = vsel %vm638, %v675, %v677
      %vm679 = vcmask 31744
      %v680 = vsel %vm679, %v641, 0
      %v682 = vsel %vm679, %v643, 0
      %v684 = vsel %vm679, %v646, 0
      %v686 = vsel %vm679, %v648, 0
      %v688 = vsel %vm679, %v651, 0
      %v690 = vsel %vm679, %v653, 0
      %v692 = vsel %vm679, %v656, 0
      %v694 = vsel %vm679, %v658, 0
      %v696 = vsel %vm679, %v661, 0
      %v698 = vsel %vm679, %v663, 0
      %v700 = vsel %vm679, %v666, 0
      %v702 = vsel %vm679, %v668, 0
      %v704 = vsel %vm679, %v671, 0
      %v706 = vsel %vm679, %v673, 0
      %v708 = vsel %vm679, %v676, 0
      %v710 = vsel %vm679, %v678, 0
      %vm712 = vcmask 1043456
      %v714 = vsel %vm712, %v606, 0
      %716 = vmatpush.msra.mxu0 0.0
      %717 = vmatpush.msra.mxu0 0.0
      %718 = vmatpush.msra.mxu0 0.0
      %719 = vmatpush.msra.mxu0 0.0
      %720 = vmatpush.msra.mxu0 0.0
      %721 = vmatpush.msra.mxu0 0.0
      %722 = vmatpush.msra.mxu0 0.0
      %723 = vmatpush.msra.mxu0 0.0
      %724 = vmatpush.msra.mxu0 0.0
      %725 = vmatpush.msra.mxu0 0.0
      %726 = vmatpush.msra.mxu0 0.0
      %727 = vmatpush.msra.mxu0 0.0
      %728 = vmatpush.msra.mxu0 0.0
      %729 = vmatpush.msra.mxu0 0.0
      %730 = vmatpush.msra.mxu0 0.0
      %731 = vmatpush.msra.mxu0 %v714
      %732 = vmatmul.f32.gmra.mxu0 %v680
      %v733 = vpop.f32.mrf.mxu0
      %v734 = vadd.f32 0.0, %v733
      %735 = vmatmul.f32.gmra.mxu0 %v682
      %v736 = vpop.f32.mrf.mxu0
      %v737 = vadd.f32 0.0, %v736
      %738 = vmatmul.f32.gmra.mxu0 %v684
      %v739 = vpop.f32.mrf.mxu0
      %v740 = vadd.f32 0.0, %v739
      %741 = vmatmul.f32.gmra.mxu0 %v686
      %v742 = vpop.f32.mrf.mxu0
      %v743 = vadd.f32 0.0, %v742
      %744 = vmatmul.f32.gmra.mxu0 %v688
      %v745 = vpop.f32.mrf.mxu0
      %v746 = vadd.f32 0.0, %v745
      %747 = vmatmul.f32.gmra.mxu0 %v690
      %v748 = vpop.f32.mrf.mxu0
      %v749 = vadd.f32 0.0, %v748
      %750 = vmatmul.f32.gmra.mxu0 %v692
      %v751 = vpop.f32.mrf.mxu0
      %v752 = vadd.f32 0.0, %v751
      %753 = vmatmul.f32.gmra.mxu0 %v694
      %v754 = vpop.f32.mrf.mxu0
      %v755 = vadd.f32 0.0, %v754
      %756 = vmatmul.f32.gmra.mxu0 %v696
      %v757 = vpop.f32.mrf.mxu0
      %v758 = vadd.f32 0.0, %v757
      %759 = vmatmul.f32.gmra.mxu0 %v698
      %v760 = vpop.f32.mrf.mxu0
      %v761 = vadd.f32 0.0, %v760
      %762 = vmatmul.f32.gmra.mxu0 %v700
      %v763 = vpop.f32.mrf.mxu0
      %v764 = vadd.f32 0.0, %v763
      %765 = vmatmul.f32.gmra.mxu0 %v702
      %v766 = vpop.f32.mrf.mxu0
      %v767 = vadd.f32 0.0, %v766
      %768 = vmatmul.f32.gmra.mxu0 %v704
      %v769 = vpop.f32.mrf.mxu0
      %v770 = vadd.f32 0.0, %v769
      %771 = vmatmul.f32.gmra.mxu0 %v706
      %v772 = vpop.f32.mrf.mxu0
      %v773 = vadd.f32 0.0, %v772
      %774 = vmatmul.f32.gmra.mxu0 %v708
      %v775 = vpop.f32.mrf.mxu0
      %v776 = vadd.f32 0.0, %v775
      %777 = vmatmul.f32.gmra.mxu0 %v710
      %v778 = vpop.f32.mrf.mxu0
      %v779 = vadd.f32 0.0, %v778
      %780 = vdwg.mxu0
      %v781 = vsel %vm679, %v575, 0
      %v783 = vsel %vm679, %v576, 0
      %v785 = vsel %vm679, %v578, 0
      %v787 = vsel %vm679, %v579, 0
      %v789 = vsel %vm679, %v581, 0
      %v791 = vsel %vm679, %v582, 0
      %v793 = vsel %vm679, %v584, 0
      %v795 = vsel %vm679, %v585, 0
      %v797 = vsel %vm679, %v587, 0
      %v799 = vsel %vm679, %v588, 0
      %v801 = vsel %vm679, %v590, 0
      %v803 = vsel %vm679, %v591, 0
      %v805 = vsel %vm679, %v593, 0
      %v807 = vsel %vm679, %v594, 0
      %v809 = vsel %vm679, %v596, 0
      %v811 = vsel %vm679, %v597, 0
      %v814 = vsel %vm712, %v605, 0
      %816 = vmatpush.msra.mxu0 0.0
      %817 = vmatpush.msra.mxu0 0.0
      %818 = vmatpush.msra.mxu0 0.0
      %819 = vmatpush.msra.mxu0 0.0
      %820 = vmatpush.msra.mxu0 0.0
      %821 = vmatpush.msra.mxu0 0.0
      %822 = vmatpush.msra.mxu0 0.0
      %823 = vmatpush.msra.mxu0 0.0
      %824 = vmatpush.msra.mxu0 0.0
      %825 = vmatpush.msra.mxu0 0.0
      %826 = vmatpush.msra.mxu0 0.0
      %827 = vmatpush.msra.mxu0 0.0
      %828 = vmatpush.msra.mxu0 0.0
      %829 = vmatpush.msra.mxu0 0.0
      %830 = vmatpush.msra.mxu0 0.0
      %831 = vmatpush.msra.mxu0 %v814
      %832 = vmatmul.f32.gmra.mxu0 %v781
      %v833 = vpop.f32.mrf.mxu0
      %v834 = vadd.f32 %v734, %v833
      %835 = vmatmul.f32.gmra.mxu0 %v783
      %v836 = vpop.f32.mrf.mxu0
      %v837 = vadd.f32 %v737, %v836
      %838 = vmatmul.f32.gmra.mxu0 %v785
      %v839 = vpop.f32.mrf.mxu0
      %v840 = vadd.f32 %v740, %v839
      %841 = vmatmul.f32.gmra.mxu0 %v787
      %v842 = vpop.f32.mrf.mxu0
      %v843 = vadd.f32 %v743, %v842
      %844 = vmatmul.f32.gmra.mxu0 %v789
      %v845 = vpop.f32.mrf.mxu0
      %v846 = vadd.f32 %v746, %v845
      %847 = vmatmul.f32.gmra.mxu0 %v791
      %v848 = vpop.f32.mrf.mxu0
      %v849 = vadd.f32 %v749, %v848
      %850 = vmatmul.f32.gmra.mxu0 %v793
      %v851 = vpop.f32.mrf.mxu0
      %v852 = vadd.f32 %v752, %v851
      %853 = vmatmul.f32.gmra.mxu0 %v795
      %v854 = vpop.f32.mrf.mxu0
      %v855 = vadd.f32 %v755, %v854
      %856 = vmatmul.f32.gmra.mxu0 %v797
      %v857 = vpop.f32.mrf.mxu0
      %v858 = vadd.f32 %v758, %v857
      %859 = vmatmul.f32.gmra.mxu0 %v799
      %v860 = vpop.f32.mrf.mxu0
      %v861 = vadd.f32 %v761, %v860
      %862 = vmatmul.f32.gmra.mxu0 %v801
      %v863 = vpop.f32.mrf.mxu0
      %v864 = vadd.f32 %v764, %v863
      %865 = vmatmul.f32.gmra.mxu0 %v803
      %v866 = vpop.f32.mrf.mxu0
      %v867 = vadd.f32 %v767, %v866
      %868 = vmatmul.f32.gmra.mxu0 %v805
      %v869 = vpop.f32.mrf.mxu0
      %v870 = vadd.f32 %v770, %v869
      %871 = vmatmul.f32.gmra.mxu0 %v807
      %v872 = vpop.f32.mrf.mxu0
      %v873 = vadd.f32 %v773, %v872
      %874 = vmatmul.f32.gmra.mxu0 %v809
      %v875 = vpop.f32.mrf.mxu0
      %v876 = vadd.f32 %v776, %v875
      %877 = vmatmul.f32.gmra.mxu0 %v811
      %v878 = vpop.f32.mrf.mxu0
      %v879 = vadd.f32 %v779, %v878
      %880 = vdwg.mxu0
      %vm881 = vcmask 1045504
      %v882 = vrot.slane %v575, 2
      %v883 = vrot.slane %v576, 2
      %v884 = vsel %vm881, %v882, %v883
      %v885 = vrot.slane %v577, 2
      %v886 = vsel %vm881, %v883, %v885
      %v887 = vrot.slane %v578, 2
      %v888 = vrot.slane %v579, 2
      %v889 = vsel %vm881, %v887, %v888
      %v890 = vrot.slane %v580, 2
      %v891 = vsel %vm881, %v888, %v890
      %v892 = vrot.slane %v581, 2
      %v893 = vrot.slane %v582, 2
      %v894 = vsel %vm881, %v892, %v893
      %v895 = vrot.slane %v583, 2
      %v896 = vsel %vm881, %v893, %v895
      %v897 = vrot.slane %v584, 2
      %v898 = vrot.slane %v585, 2
      %v899 = vsel %vm881, %v897, %v898
      %v900 = vrot.slane %v586, 2
      %v901 = vsel %vm881, %v898, %v900
      %v902 = vrot.slane %v587, 2
      %v903 = vrot.slane %v588, 2
      %v904 = vsel %vm881, %v902, %v903
      %v905 = vrot.slane %v589, 2
      %v906 = vsel %vm881, %v903, %v905
      %v907 = vrot.slane %v590, 2
      %v908 = vrot.slane %v591, 2
      %v909 = vsel %vm881, %v907, %v908
      %v910 = vrot.slane %v592, 2
      %v911 = vsel %vm881, %v908, %v910
      %v912 = vrot.slane %v593, 2
      %v913 = vrot.slane %v594, 2
      %v914 = vsel %vm881, %v912, %v913
      %v915 = vrot.slane %v595, 2
      %v916 = vsel %vm881, %v913, %v915
      %v917 = vrot.slane %v596, 2
      %v918 = vrot.slane %v597, 2
      %v919 = vsel %vm881, %v917, %v918
      %v920 = vrot.slane %v598, 2
      %v921 = vsel %vm881, %v918, %v920
      %v922 = vsel %vm679, %v884, 0
      %v924 = vsel %vm679, %v886, 0
      %v926 = vsel %vm679, %v889, 0
      %v928 = vsel %vm679, %v891, 0
      %v930 = vsel %vm679, %v894, 0
      %v932 = vsel %vm679, %v896, 0
      %v934 = vsel %vm679, %v899, 0
      %v936 = vsel %vm679, %v901, 0
      %v938 = vsel %vm679, %v904, 0
      %v940 = vsel %vm679, %v906, 0
      %v942 = vsel %vm679, %v909, 0
      %v944 = vsel %vm679, %v911, 0
      %v946 = vsel %vm679, %v914, 0
      %v948 = vsel %vm679, %v916, 0
      %v950 = vsel %vm679, %v919, 0
      %v952 = vsel %vm679, %v921, 0
      %v955 = vsel %vm712, %v607, 0
      %957 = vmatpush.msra.mxu0 0.0
      %958 = vmatpush.msra.mxu0 0.0
      %959 = vmatpush.msra.mxu0 0.0
      %960 = vmatpush.msra.mxu0 0.0
      %961 = vmatpush.msra.mxu0 0.0
      %962 = vmatpush.msra.mxu0 0.0
      %963 = vmatpush.msra.mxu0 0.0
      %964 = vmatpush.msra.mxu0 0.0
      %965 = vmatpush.msra.mxu0 0.0
      %966 = vmatpush.msra.mxu0 0.0
      %967 = vmatpush.msra.mxu0 0.0
      %968 = vmatpush.msra.mxu0 0.0
      %969 = vmatpush.msra.mxu0 0.0
      %970 = vmatpush.msra.mxu0 0.0
      %971 = vmatpush.msra.mxu0 0.0
      %972 = vmatpush.msra.mxu0 %v955
      %973 = vmatmul.f32.gmra.mxu0 %v922
      %v974 = vpop.f32.mrf.mxu0
      %v975 = vadd.f32 0.0, %v974
      %976 = vmatmul.f32.gmra.mxu0 %v924
      %v977 = vpop.f32.mrf.mxu0
      %v978 = vadd.f32 0.0, %v977
      %979 = vmatmul.f32.gmra.mxu0 %v926
      %v980 = vpop.f32.mrf.mxu0
      %v981 = vadd.f32 0.0, %v980
      %982 = vmatmul.f32.gmra.mxu0 %v928
      %v983 = vpop.f32.mrf.mxu0
      %v984 = vadd.f32 0.0, %v983
      %985 = vmatmul.f32.gmra.mxu0 %v930
      %v986 = vpop.f32.mrf.mxu0
      %v987 = vadd.f32 0.0, %v986
      %988 = vmatmul.f32.gmra.mxu0 %v932
      %v989 = vpop.f32.mrf.mxu0
      %v990 = vadd.f32 0.0, %v989
      %991 = vmatmul.f32.gmra.mxu0 %v934
      %v992 = vpop.f32.mrf.mxu0
      %v993 = vadd.f32 0.0, %v992
      %994 = vmatmul.f32.gmra.mxu0 %v936
      %v995 = vpop.f32.mrf.mxu0
      %v996 = vadd.f32 0.0, %v995
      %997 = vmatmul.f32.gmra.mxu0 %v938
      %v998 = vpop.f32.mrf.mxu0
      %v999 = vadd.f32 0.0, %v998
      %1000 = vmatmul.f32.gmra.mxu0 %v940
      %v1001 = vpop.f32.mrf.mxu0
      %v1002 = vadd.f32 0.0, %v1001
      %1003 = vmatmul.f32.gmra.mxu0 %v942
      %v1004 = vpop.f32.mrf.mxu0
      %v1005 = vadd.f32 0.0, %v1004
      %1006 = vmatmul.f32.gmra.mxu0 %v944
      %v1007 = vpop.f32.mrf.mxu0
      %v1008 = vadd.f32 0.0, %v1007
      %1009 = vmatmul.f32.gmra.mxu0 %v946
      %v1010 = vpop.f32.mrf.mxu0
      %v1011 = vadd.f32 0.0, %v1010
      %1012 = vmatmul.f32.gmra.mxu0 %v948
      %v1013 = vpop.f32.mrf.mxu0
      %v1014 = vadd.f32 0.0, %v1013
      %1015 = vmatmul.f32.gmra.mxu0 %v950
      %v1016 = vpop.f32.mrf.mxu0
      %v1017 = vadd.f32 0.0, %v1016
      %1018 = vmatmul.f32.gmra.mxu0 %v952
      %v1019 = vpop.f32.mrf.mxu0
      %v1020 = vadd.f32 0.0, %v1019
      %1021 = vdwg.mxu0
      %v1022 = vadd.f32 %v834, %v975
      %v1023 = vadd.f32 %v837, %v978
      %v1024 = vadd.f32 %v840, %v981
      %v1025 = vadd.f32 %v843, %v984
      %v1026 = vadd.f32 %v846, %v987
      %v1027 = vadd.f32 %v849, %v990
      %v1028 = vadd.f32 %v852, %v993
      %v1029 = vadd.f32 %v855, %v996
      %v1030 = vadd.f32 %v858, %v999
      %v1031 = vadd.f32 %v861, %v1002
      %v1032 = vadd.f32 %v864, %v1005
      %v1033 = vadd.f32 %v867, %v1008
      %v1034 = vadd.f32 %v870, %v1011
      %v1035 = vadd.f32 %v873, %v1014
      %v1036 = vadd.f32 %v876, %v1017
      %v1037 = vadd.f32 %v879, %v1020
      %v1039 = vsel %vm679, %v599, 0
      %v1042 = vsel %vm679, %v600, 0
      %v1045 = vsel %vm712, %v608, 0
      %1047 = vmatpush.msra.mxu0 0.0
      %1048 = vmatpush.msra.mxu0 0.0
      %1049 = vmatpush.msra.mxu0 0.0
      %1050 = vmatpush.msra.mxu0 0.0
      %1051 = vmatpush.msra.mxu0 0.0
      %1052 = vmatpush.msra.mxu0 0.0
      %1053 = vmatpush.msra.mxu0 0.0
      %1054 = vmatpush.msra.mxu0 0.0
      %1055 = vmatpush.msra.mxu0 0.0
      %1056 = vmatpush.msra.mxu0 0.0
      %1057 = vmatpush.msra.mxu0 0.0
      %1058 = vmatpush.msra.mxu0 0.0
      %1059 = vmatpush.msra.mxu0 0.0
      %1060 = vmatpush.msra.mxu0 0.0
      %1061 = vmatpush.msra.mxu0 0.0
      %1062 = vmatpush.msra.mxu0 %v1045
      %1063 = vmatmul.f32.gmra.mxu0 %v785
      %v1064 = vpop.f32.mrf.mxu0
      %v1065 = vadd.f32 0.0, %v1064
      %1066 = vmatmul.f32.gmra.mxu0 %v787
      %v1067 = vpop.f32.mrf.mxu0
      %v1068 = vadd.f32 0.0, %v1067
      %1069 = vmatmul.f32.gmra.mxu0 %v789
      %v1070 = vpop.f32.mrf.mxu0
      %v1071 = vadd.f32 0.0, %v1070
      %1072 = vmatmul.f32.gmra.mxu0 %v791
      %v1073 = vpop.f32.mrf.mxu0
      %v1074 = vadd.f32 0.0, %v1073
      %1075 = vmatmul.f32.gmra.mxu0 %v793
      %v1076 = vpop.f32.mrf.mxu0
      %v1077 = vadd.f32 0.0, %v1076
      %1078 = vmatmul.f32.gmra.mxu0 %v795
      %v1079 = vpop.f32.mrf.mxu0
      %v1080 = vadd.f32 0.0, %v1079
      %1081 = vmatmul.f32.gmra.mxu0 %v797
      %v1082 = vpop.f32.mrf.mxu0
      %v1083 = vadd.f32 0.0, %v1082
      %1084 = vmatmul.f32.gmra.mxu0 %v799
      %v1085 = vpop.f32.mrf.mxu0
      %v1086 = vadd.f32 0.0, %v1085
      %1087 = vmatmul.f32.gmra.mxu0 %v801
      %v1088 = vpop.f32.mrf.mxu0
      %v1089 = vadd.f32 0.0, %v1088
      %1090 = vmatmul.f32.gmra.mxu0 %v803
      %v1091 = vpop.f32.mrf.mxu0
      %v1092 = vadd.f32 0.0, %v1091
      %1093 = vmatmul.f32.gmra.mxu0 %v805
      %v1094 = vpop.f32.mrf.mxu0
      %v1095 = vadd.f32 0.0, %v1094
      %1096 = vmatmul.f32.gmra.mxu0 %v807
      %v1097 = vpop.f32.mrf.mxu0
      %v1098 = vadd.f32 0.0, %v1097
      %1099 = vmatmul.f32.gmra.mxu0 %v809
      %v1100 = vpop.f32.mrf.mxu0
      %v1101 = vadd.f32 0.0, %v1100
      %1102 = vmatmul.f32.gmra.mxu0 %v811
      %v1103 = vpop.f32.mrf.mxu0
      %v1104 = vadd.f32 0.0, %v1103
      %1105 = vmatmul.f32.gmra.mxu0 %v1039
      %v1106 = vpop.f32.mrf.mxu0
      %v1107 = vadd.f32 0.0, %v1106
      %1108 = vmatmul.f32.gmra.mxu0 %v1042
      %v1109 = vpop.f32.mrf.mxu0
      %v1110 = vadd.f32 0.0, %v1109
      %1111 = vdwg.mxu0
      %v1112 = vadd.f32 %v1022, %v1065
      %v1113 = vadd.f32 %v1023, %v1068
      %v1114 = vadd.f32 %v1024, %v1071
      %v1115 = vadd.f32 %v1025, %v1074
      %v1116 = vadd.f32 %v1026, %v1077
      %v1117 = vadd.f32 %v1027, %v1080
      %v1118 = vadd.f32 %v1028, %v1083
      %v1119 = vadd.f32 %v1029, %v1086
      %v1120 = vadd.f32 %v1030, %v1089
      %v1121 = vadd.f32 %v1031, %v1092
      %v1122 = vadd.f32 %v1032, %v1095
      %v1123 = vadd.f32 %v1033, %v1098
      %v1124 = vadd.f32 %v1034, %v1101
      %v1125 = vadd.f32 %v1035, %v1104
      %v1126 = vadd.f32 %v1036, %v1107
      %v1127 = vadd.f32 %v1037, %v1110
      %v1129 = vrot.slane %v599, 1
      %v1130 = vrot.slane %v600, 1
      %v1131 = vsel %vm638, %v1129, %v1130
      %v1132 = vrot.slane %v601, 1
      %v1133 = vsel %vm638, %v1130, %v1132
      %v1134 = vsel %vm679, %v1131, 0
      %v1136 = vsel %vm679, %v1133, 0
      %v1139 = vsel %vm712, %v609, 0
      %1141 = vmatpush.msra.mxu0 0.0
      %1142 = vmatpush.msra.mxu0 0.0
      %1143 = vmatpush.msra.mxu0 0.0
      %1144 = vmatpush.msra.mxu0 0.0
      %1145 = vmatpush.msra.mxu0 0.0
      %1146 = vmatpush.msra.mxu0 0.0
      %1147 = vmatpush.msra.mxu0 0.0
      %1148 = vmatpush.msra.mxu0 0.0
      %1149 = vmatpush.msra.mxu0 0.0
      %1150 = vmatpush.msra.mxu0 0.0
      %1151 = vmatpush.msra.mxu0 0.0
      %1152 = vmatpush.msra.mxu0 0.0
      %1153 = vmatpush.msra.mxu0 0.0
      %1154 = vmatpush.msra.mxu0 0.0
      %1155 = vmatpush.msra.mxu0 0.0
      %1156 = vmatpush.msra.mxu0 %v1139
      %1157 = vmatmul.f32.gmra.mxu0 %v684
      %v1158 = vpop.f32.mrf.mxu0
      %v1159 = vadd.f32 0.0, %v1158
      %1160 = vmatmul.f32.gmra.mxu0 %v686
      %v1161 = vpop.f32.mrf.mxu0
      %v1162 = vadd.f32 0.0, %v1161
      %1163 = vmatmul.f32.gmra.mxu0 %v688
      %v1164 = vpop.f32.mrf.mxu0
      %v1165 = vadd.f32 0.0, %v1164
      %1166 = vmatmul.f32.gmra.mxu0 %v690
      %v1167 = vpop.f32.mrf.mxu0
      %v1168 = vadd.f32 0.0, %v1167
      %1169 = vmatmul.f32.gmra.mxu0 %v692
      %v1170 = vpop.f32.mrf.mxu0
      %v1171 = vadd.f32 0.0, %v1170
      %1172 = vmatmul.f32.gmra.mxu0 %v694
      %v1173 = vpop.f32.mrf.mxu0
      %v1174 = vadd.f32 0.0, %v1173
      %1175 = vmatmul.f32.gmra.mxu0 %v696
      %v1176 = vpop.f32.mrf.mxu0
      %v1177 = vadd.f32 0.0, %v1176
      %1178 = vmatmul.f32.gmra.mxu0 %v698
      %v1179 = vpop.f32.mrf.mxu0
      %v1180 = vadd.f32 0.0, %v1179
      %1181 = vmatmul.f32.gmra.mxu0 %v700
      %v1182 = vpop.f32.mrf.mxu0
      %v1183 = vadd.f32 0.0, %v1182
      %1184 = vmatmul.f32.gmra.mxu0 %v702
      %v1185 = vpop.f32.mrf.mxu0
      %v1186 = vadd.f32 0.0, %v1185
      %1187 = vmatmul.f32.gmra.mxu0 %v704
      %v1188 = vpop.f32.mrf.mxu0
      %v1189 = vadd.f32 0.0, %v1188
      %1190 = vmatmul.f32.gmra.mxu0 %v706
      %v1191 = vpop.f32.mrf.mxu0
      %v1192 = vadd.f32 0.0, %v1191
      %1193 = vmatmul.f32.gmra.mxu0 %v708
      %v1194 = vpop.f32.mrf.mxu0
      %v1195 = vadd.f32 0.0, %v1194
      %1196 = vmatmul.f32.gmra.mxu0 %v710
      %v1197 = vpop.f32.mrf.mxu0
      %v1198 = vadd.f32 0.0, %v1197
      %1199 = vmatmul.f32.gmra.mxu0 %v1134
      %v1200 = vpop.f32.mrf.mxu0
      %v1201 = vadd.f32 0.0, %v1200
      %1202 = vmatmul.f32.gmra.mxu0 %v1136
      %v1203 = vpop.f32.mrf.mxu0
      %v1204 = vadd.f32 0.0, %v1203
      %1205 = vdwg.mxu0
      %v1206 = vadd.f32 %v1112, %v1159
      %v1207 = vadd.f32 %v1113, %v1162
      %v1208 = vadd.f32 %v1114, %v1165
      %v1209 = vadd.f32 %v1115, %v1168
      %v1210 = vadd.f32 %v1116, %v1171
      %v1211 = vadd.f32 %v1117, %v1174
      %v1212 = vadd.f32 %v1118, %v1177
      %v1213 = vadd.f32 %v1119, %v1180
      %v1214 = vadd.f32 %v1120, %v1183
      %v1215 = vadd.f32 %v1121, %v1186
      %v1216 = vadd.f32 %v1122, %v1189
      %v1217 = vadd.f32 %v1123, %v1192
      %v1218 = vadd.f32 %v1124, %v1195
      %v1219 = vadd.f32 %v1125, %v1198
      %v1220 = vadd.f32 %v1126, %v1201
      %v1221 = vadd.f32 %v1127, %v1204
      %v1222 = vrot.slane %v599, 2
      %v1223 = vrot.slane %v600, 2
      %v1224 = vsel %vm881, %v1222, %v1223
      %v1225 = vrot.slane %v601, 2
      %v1226 = vsel %vm881, %v1223, %v1225
      %v1227 = vsel %vm679, %v1224, 0
      %v1229 = vsel %vm679, %v1226, 0
      %v1232 = vsel %vm712, %v610, 0
      %1234 = vmatpush.msra.mxu0 0.0
      %1235 = vmatpush.msra.mxu0 0.0
      %1236 = vmatpush.msra.mxu0 0.0
      %1237 = vmatpush.msra.mxu0 0.0
      %1238 = vmatpush.msra.mxu0 0.0
      %1239 = vmatpush.msra.mxu0 0.0
      %1240 = vmatpush.msra.mxu0 0.0
      %1241 = vmatpush.msra.mxu0 0.0
      %1242 = vmatpush.msra.mxu0 0.0
      %1243 = vmatpush.msra.mxu0 0.0
      %1244 = vmatpush.msra.mxu0 0.0
      %1245 = vmatpush.msra.mxu0 0.0
      %1246 = vmatpush.msra.mxu0 0.0
      %1247 = vmatpush.msra.mxu0 0.0
      %1248 = vmatpush.msra.mxu0 0.0
      %1249 = vmatpush.msra.mxu0 %v1232
      %1250 = vmatmul.f32.gmra.mxu0 %v926
      %v1251 = vpop.f32.mrf.mxu0
      %v1252 = vadd.f32 0.0, %v1251
      %1253 = vmatmul.f32.gmra.mxu0 %v928
      %v1254 = vpop.f32.mrf.mxu0
      %v1255 = vadd.f32 0.0, %v1254
      %1256 = vmatmul.f32.gmra.mxu0 %v930
      %v1257 = vpop.f32.mrf.mxu0
      %v1258 = vadd.f32 0.0, %v1257
      %1259 = vmatmul.f32.gmra.mxu0 %v932
      %v1260 = vpop.f32.mrf.mxu0
      %v1261 = vadd.f32 0.0, %v1260
      %1262 = vmatmul.f32.gmra.mxu0 %v934
      %v1263 = vpop.f32.mrf.mxu0
      %v1264 = vadd.f32 0.0, %v1263
      %1265 = vmatmul.f32.gmra.mxu0 %v936
      %v1266 = vpop.f32.mrf.mxu0
      %v1267 = vadd.f32 0.0, %v1266
      %1268 = vmatmul.f32.gmra.mxu0 %v938
      %v1269 = vpop.f32.mrf.mxu0
      %v1270 = vadd.f32 0.0, %v1269
      %1271 = vmatmul.f32.gmra.mxu0 %v940
      %v1272 = vpop.f32.mrf.mxu0
      %v1273 = vadd.f32 0.0, %v1272
      %1274 = vmatmul.f32.gmra.mxu0 %v942
      %v1275 = vpop.f32.mrf.mxu0
      %v1276 = vadd.f32 0.0, %v1275
      %1277 = vmatmul.f32.gmra.mxu0 %v944
      %v1278 = vpop.f32.mrf.mxu0
      %v1279 = vadd.f32 0.0, %v1278
      %1280 = vmatmul.f32.gmra.mxu0 %v946
      %v1281 = vpop.f32.mrf.mxu0
      %v1282 = vadd.f32 0.0, %v1281
      %1283 = vmatmul.f32.gmra.mxu0 %v948
      %v1284 = vpop.f32.mrf.mxu0
      %v1285 = vadd.f32 0.0, %v1284
      %1286 = vmatmul.f32.gmra.mxu0 %v950
      %v1287 = vpop.f32.mrf.mxu0
      %v1288 = vadd.f32 0.0, %v1287
      %1289 = vmatmul.f32.gmra.mxu0 %v952
      %v1290 = vpop.f32.mrf.mxu0
      %v1291 = vadd.f32 0.0, %v1290
      %1292 = vmatmul.f32.gmra.mxu0 %v1227
      %v1293 = vpop.f32.mrf.mxu0
      %v1294 = vadd.f32 0.0, %v1293
      %1295 = vmatmul.f32.gmra.mxu0 %v1229
      %v1296 = vpop.f32.mrf.mxu0
      %v1297 = vadd.f32 0.0, %v1296
      %1298 = vdwg.mxu0
      %v1299 = vadd.f32 %v1206, %v1252
      %v1300 = vadd.f32 %v1207, %v1255
      %v1301 = vadd.f32 %v1208, %v1258
      %v1302 = vadd.f32 %v1209, %v1261
      %v1303 = vadd.f32 %v1210, %v1264
      %v1304 = vadd.f32 %v1211, %v1267
      %v1305 = vadd.f32 %v1212, %v1270
      %v1306 = vadd.f32 %v1213, %v1273
      %v1307 = vadd.f32 %v1214, %v1276
      %v1308 = vadd.f32 %v1215, %v1279
      %v1309 = vadd.f32 %v1216, %v1282
      %v1310 = vadd.f32 %v1217, %v1285
      %v1311 = vadd.f32 %v1218, %v1288
      %v1312 = vadd.f32 %v1219, %v1291
      %v1313 = vadd.f32 %v1220, %v1294
      %v1314 = vadd.f32 %v1221, %v1297
      %v1316 = vsel %vm679, %v602, 0
      %v1319 = vsel %vm679, %v603, 0
      %v1322 = vsel %vm712, %v611, 0
      %1324 = vmatpush.msra.mxu0 0.0
      %1325 = vmatpush.msra.mxu0 0.0
      %1326 = vmatpush.msra.mxu0 0.0
      %1327 = vmatpush.msra.mxu0 0.0
      %1328 = vmatpush.msra.mxu0 0.0
      %1329 = vmatpush.msra.mxu0 0.0
      %1330 = vmatpush.msra.mxu0 0.0
      %1331 = vmatpush.msra.mxu0 0.0
      %1332 = vmatpush.msra.mxu0 0.0
      %1333 = vmatpush.msra.mxu0 0.0
      %1334 = vmatpush.msra.mxu0 0.0
      %1335 = vmatpush.msra.mxu0 0.0
      %1336 = vmatpush.msra.mxu0 0.0
      %1337 = vmatpush.msra.mxu0 0.0
      %1338 = vmatpush.msra.mxu0 0.0
      %1339 = vmatpush.msra.mxu0 %v1322
      %1340 = vmatmul.f32.gmra.mxu0 %v789
      %v1341 = vpop.f32.mrf.mxu0
      %v1342 = vadd.f32 0.0, %v1341
      %1343 = vmatmul.f32.gmra.mxu0 %v791
      %v1344 = vpop.f32.mrf.mxu0
      %v1345 = vadd.f32 0.0, %v1344
      %1346 = vmatmul.f32.gmra.mxu0 %v793
      %v1347 = vpop.f32.mrf.mxu0
      %v1348 = vadd.f32 0.0, %v1347
      %1349 = vmatmul.f32.gmra.mxu0 %v795
      %v1350 = vpop.f32.mrf.mxu0
      %v1351 = vadd.f32 0.0, %v1350
      %1352 = vmatmul.f32.gmra.mxu0 %v797
      %v1353 = vpop.f32.mrf.mxu0
      %v1354 = vadd.f32 0.0, %v1353
      %1355 = vmatmul.f32.gmra.mxu0 %v799
      %v1356 = vpop.f32.mrf.mxu0
      %v1357 = vadd.f32 0.0, %v1356
      %1358 = vmatmul.f32.gmra.mxu0 %v801
      %v1359 = vpop.f32.mrf.mxu0
      %v1360 = vadd.f32 0.0, %v1359
      %1361 = vmatmul.f32.gmra.mxu0 %v803
      %v1362 = vpop.f32.mrf.mxu0
      %v1363 = vadd.f32 0.0, %v1362
      %1364 = vmatmul.f32.gmra.mxu0 %v805
      %v1365 = vpop.f32.mrf.mxu0
      %v1366 = vadd.f32 0.0, %v1365
      %1367 = vmatmul.f32.gmra.mxu0 %v807
      %v1368 = vpop.f32.mrf.mxu0
      %v1369 = vadd.f32 0.0, %v1368
      %1370 = vmatmul.f32.gmra.mxu0 %v809
      %v1371 = vpop.f32.mrf.mxu0
      %v1372 = vadd.f32 0.0, %v1371
      %1373 = vmatmul.f32.gmra.mxu0 %v811
      %v1374 = vpop.f32.mrf.mxu0
      %v1375 = vadd.f32 0.0, %v1374
      %1376 = vmatmul.f32.gmra.mxu0 %v1039
      %v1377 = vpop.f32.mrf.mxu0
      %v1378 = vadd.f32 0.0, %v1377
      %1379 = vmatmul.f32.gmra.mxu0 %v1042
      %v1380 = vpop.f32.mrf.mxu0
      %v1381 = vadd.f32 0.0, %v1380
      %1382 = vmatmul.f32.gmra.mxu0 %v1316
      %v1383 = vpop.f32.mrf.mxu0
      %v1384 = vadd.f32 0.0, %v1383
      %1385 = vmatmul.f32.gmra.mxu0 %v1319
      %v1386 = vpop.f32.mrf.mxu0
      %v1387 = vadd.f32 0.0, %v1386
      %1388 = vdwg.mxu0
      %v1389 = vadd.f32 %v1299, %v1342
      %v1390 = vadd.f32 %v1300, %v1345
      %v1391 = vadd.f32 %v1301, %v1348
      %v1392 = vadd.f32 %v1302, %v1351
      %v1393 = vadd.f32 %v1303, %v1354
      %v1394 = vadd.f32 %v1304, %v1357
      %v1395 = vadd.f32 %v1305, %v1360
      %v1396 = vadd.f32 %v1306, %v1363
      %v1397 = vadd.f32 %v1307, %v1366
      %v1398 = vadd.f32 %v1308, %v1369
      %v1399 = vadd.f32 %v1309, %v1372
      %v1400 = vadd.f32 %v1310, %v1375
      %v1401 = vadd.f32 %v1311, %v1378
      %v1402 = vadd.f32 %v1312, %v1381
      %v1403 = vadd.f32 %v1313, %v1384
      %v1404 = vadd.f32 %v1314, %v1387
      %v1406 = vrot.slane %v602, 1
      %v1407 = vrot.slane %v603, 1
      %v1408 = vsel %vm638, %v1406, %v1407
      %v1409 = vrot.slane %v604, 1
      %v1410 = vsel %vm638, %v1407, %v1409
      %v1411 = vsel %vm679, %v1408, 0
      %v1413 = vsel %vm679, %v1410, 0
      %v1416 = vsel %vm712, %v612, 0
      %1418 = vmatpush.msra.mxu0 0.0
      %1419 = vmatpush.msra.mxu0 0.0
      %1420 = vmatpush.msra.mxu0 0.0
      %1421 = vmatpush.msra.mxu0 0.0
      %1422 = vmatpush.msra.mxu0 0.0
      %1423 = vmatpush.msra.mxu0 0.0
      %1424 = vmatpush.msra.mxu0 0.0
      %1425 = vmatpush.msra.mxu0 0.0
      %1426 = vmatpush.msra.mxu0 0.0
      %1427 = vmatpush.msra.mxu0 0.0
      %1428 = vmatpush.msra.mxu0 0.0
      %1429 = vmatpush.msra.mxu0 0.0
      %1430 = vmatpush.msra.mxu0 0.0
      %1431 = vmatpush.msra.mxu0 0.0
      %1432 = vmatpush.msra.mxu0 0.0
      %1433 = vmatpush.msra.mxu0 %v1416
      %1434 = vmatmul.f32.gmra.mxu0 %v688
      %v1435 = vpop.f32.mrf.mxu0
      %v1436 = vadd.f32 0.0, %v1435
      %1437 = vmatmul.f32.gmra.mxu0 %v690
      %v1438 = vpop.f32.mrf.mxu0
      %v1439 = vadd.f32 0.0, %v1438
      %1440 = vmatmul.f32.gmra.mxu0 %v692
      %v1441 = vpop.f32.mrf.mxu0
      %v1442 = vadd.f32 0.0, %v1441
      %1443 = vmatmul.f32.gmra.mxu0 %v694
      %v1444 = vpop.f32.mrf.mxu0
      %v1445 = vadd.f32 0.0, %v1444
      %1446 = vmatmul.f32.gmra.mxu0 %v696
      %v1447 = vpop.f32.mrf.mxu0
      %v1448 = vadd.f32 0.0, %v1447
      %1449 = vmatmul.f32.gmra.mxu0 %v698
      %v1450 = vpop.f32.mrf.mxu0
      %v1451 = vadd.f32 0.0, %v1450
      %1452 = vmatmul.f32.gmra.mxu0 %v700
      %v1453 = vpop.f32.mrf.mxu0
      %v1454 = vadd.f32 0.0, %v1453
      %1455 = vmatmul.f32.gmra.mxu0 %v702
      %v1456 = vpop.f32.mrf.mxu0
      %v1457 = vadd.f32 0.0, %v1456
      %1458 = vmatmul.f32.gmra.mxu0 %v704
      %v1459 = vpop.f32.mrf.mxu0
      %v1460 = vadd.f32 0.0, %v1459
      %1461 = vmatmul.f32.gmra.mxu0 %v706
      %v1462 = vpop.f32.mrf.mxu0
      %v1463 = vadd.f32 0.0, %v1462
      %1464 = vmatmul.f32.gmra.mxu0 %v708
      %v1465 = vpop.f32.mrf.mxu0
      %v1466 = vadd.f32 0.0, %v1465
      %1467 = vmatmul.f32.gmra.mxu0 %v710
      %v1468 = vpop.f32.mrf.mxu0
      %v1469 = vadd.f32 0.0, %v1468
      %1470 = vmatmul.f32.gmra.mxu0 %v1134
      %v1471 = vpop.f32.mrf.mxu0
      %v1472 = vadd.f32 0.0, %v1471
      %1473 = vmatmul.f32.gmra.mxu0 %v1136
      %v1474 = vpop.f32.mrf.mxu0
      %v1475 = vadd.f32 0.0, %v1474
      %1476 = vmatmul.f32.gmra.mxu0 %v1411
      %v1477 = vpop.f32.mrf.mxu0
      %v1478 = vadd.f32 0.0, %v1477
      %1479 = vmatmul.f32.gmra.mxu0 %v1413
      %v1480 = vpop.f32.mrf.mxu0
      %v1481 = vadd.f32 0.0, %v1480
      %1482 = vdwg.mxu0
      %v1483 = vadd.f32 %v1389, %v1436
      %v1484 = vadd.f32 %v1390, %v1439
      %v1485 = vadd.f32 %v1391, %v1442
      %v1486 = vadd.f32 %v1392, %v1445
      %v1487 = vadd.f32 %v1393, %v1448
      %v1488 = vadd.f32 %v1394, %v1451
      %v1489 = vadd.f32 %v1395, %v1454
      %v1490 = vadd.f32 %v1396, %v1457
      %v1491 = vadd.f32 %v1397, %v1460
      %v1492 = vadd.f32 %v1398, %v1463
      %v1493 = vadd.f32 %v1399, %v1466
      %v1494 = vadd.f32 %v1400, %v1469
      %v1495 = vadd.f32 %v1401, %v1472
      %v1496 = vadd.f32 %v1402, %v1475
      %v1497 = vadd.f32 %v1403, %v1478
      %v1498 = vadd.f32 %v1404, %v1481
      %v1499 = vrot.slane %v602, 2
      %v1500 = vrot.slane %v603, 2
      %v1501 = vsel %vm881, %v1499, %v1500
      %v1502 = vrot.slane %v604, 2
      %v1503 = vsel %vm881, %v1500, %v1502
      %v1504 = vsel %vm679, %v1501, 0
      %v1506 = vsel %vm679, %v1503, 0
      %v1509 = vsel %vm712, %v613, 0
      %1511 = vmatpush.msra.mxu0 0.0
      %1512 = vmatpush.msra.mxu0 0.0
      %1513 = vmatpush.msra.mxu0 0.0
      %1514 = vmatpush.msra.mxu0 0.0
      %1515 = vmatpush.msra.mxu0 0.0
      %1516 = vmatpush.msra.mxu0 0.0
      %1517 = vmatpush.msra.mxu0 0.0
      %1518 = vmatpush.msra.mxu0 0.0
      %1519 = vmatpush.msra.mxu0 0.0
      %1520 = vmatpush.msra.mxu0 0.0
      %1521 = vmatpush.msra.mxu0 0.0
      %1522 = vmatpush.msra.mxu0 0.0
      %1523 = vmatpush.msra.mxu0 0.0
      %1524 = vmatpush.msra.mxu0 0.0
      %1525 = vmatpush.msra.mxu0 0.0
      %1526 = vmatpush.msra.mxu0 %v1509
      %1527 = vmatmul.f32.gmra.mxu0 %v930
      %v1528 = vpop.f32.mrf.mxu0
      %v1529 = vadd.f32 0.0, %v1528
      %1530 = vmatmul.f32.gmra.mxu0 %v932
      %v1531 = vpop.f32.mrf.mxu0
      %v1532 = vadd.f32 0.0, %v1531
      %1533 = vmatmul.f32.gmra.mxu0 %v934
      %v1534 = vpop.f32.mrf.mxu0
      %v1535 = vadd.f32 0.0, %v1534
      %1536 = vmatmul.f32.gmra.mxu0 %v936
      %v1537 = vpop.f32.mrf.mxu0
      %v1538 = vadd.f32 0.0, %v1537
      %1539 = vmatmul.f32.gmra.mxu0 %v938
      %v1540 = vpop.f32.mrf.mxu0
      %v1541 = vadd.f32 0.0, %v1540
      %1542 = vmatmul.f32.gmra.mxu0 %v940
      %v1543 = vpop.f32.mrf.mxu0
      %v1544 = vadd.f32 0.0, %v1543
      %1545 = vmatmul.f32.gmra.mxu0 %v942
      %v1546 = vpop.f32.mrf.mxu0
      %v1547 = vadd.f32 0.0, %v1546
      %1548 = vmatmul.f32.gmra.mxu0 %v944
      %v1549 = vpop.f32.mrf.mxu0
      %v1550 = vadd.f32 0.0, %v1549
      %1551 = vmatmul.f32.gmra.mxu0 %v946
      %v1552 = vpop.f32.mrf.mxu0
      %v1553 = vadd.f32 0.0, %v1552
      %1554 = vmatmul.f32.gmra.mxu0 %v948
      %v1555 = vpop.f32.mrf.mxu0
      %v1556 = vadd.f32 0.0, %v1555
      %1557 = vmatmul.f32.gmra.mxu0 %v950
      %v1558 = vpop.f32.mrf.mxu0
      %v1559 = vadd.f32 0.0, %v1558
      %1560 = vmatmul.f32.gmra.mxu0 %v952
      %v1561 = vpop.f32.mrf.mxu0
      %v1562 = vadd.f32 0.0, %v1561
      %1563 = vmatmul.f32.gmra.mxu0 %v1227
      %v1564 = vpop.f32.mrf.mxu0
      %v1565 = vadd.f32 0.0, %v1564
      %1566 = vmatmul.f32.gmra.mxu0 %v1229
      %v1567 = vpop.f32.mrf.mxu0
      %v1568 = vadd.f32 0.0, %v1567
      %1569 = vmatmul.f32.gmra.mxu0 %v1504
      %v1570 = vpop.f32.mrf.mxu0
      %v1571 = vadd.f32 0.0, %v1570
      %1572 = vmatmul.f32.gmra.mxu0 %v1506
      %v1573 = vpop.f32.mrf.mxu0
      %v1574 = vadd.f32 0.0, %v1573
      %1575 = vdwg.mxu0
      %v1576 = vadd.f32 %v1483, %v1529
      %v1577 = vadd.f32 %v1484, %v1532
      %v1578 = vadd.f32 %v1485, %v1535
      %v1579 = vadd.f32 %v1486, %v1538
      %v1580 = vadd.f32 %v1487, %v1541
      %v1581 = vadd.f32 %v1488, %v1544
      %v1582 = vadd.f32 %v1489, %v1547
      %v1583 = vadd.f32 %v1490, %v1550
      %v1584 = vadd.f32 %v1491, %v1553
      %v1585 = vadd.f32 %v1492, %v1556
      %v1586 = vadd.f32 %v1493, %v1559
      %v1587 = vadd.f32 %v1494, %v1562
      %v1588 = vadd.f32 %v1495, %v1565
      %v1589 = vadd.f32 %v1496, %v1568
      %v1590 = vadd.f32 %v1497, %v1571
      %v1591 = vadd.f32 %v1498, %v1574
      %v1592 = vld [vmem:[%s2] sm:$0x1]
      %v1594 = vperm.slane %v1592, 0
      %v1596 = vadd.f32 %v1576, %v1594
      %v1597 = vadd.f32 %v1577, %v1594
      %v1598 = vadd.f32 %v1578, %v1594
      %v1599 = vadd.f32 %v1579, %v1594
      %v1600 = vadd.f32 %v1580, %v1594
      %v1601 = vadd.f32 %v1581, %v1594
      %v1602 = vadd.f32 %v1582, %v1594
      %v1603 = vadd.f32 %v1583, %v1594
      %v1604 = vadd.f32 %v1584, %v1594
      %v1605 = vadd.f32 %v1585, %v1594
      %v1606 = vadd.f32 %v1586, %v1594
      %v1607 = vadd.f32 %v1587, %v1594
      %v1608 = vadd.f32 %v1588, %v1594
      %v1609 = vadd.f32 %v1589, %v1594
      %v1610 = vadd.f32 %v1590, %v1594
      %v1611 = vadd.f32 %v1591, %v1594
      %v1612 = vld [vmem:[%s343] sm:$0xff]
      %v1613 = vld [vmem:[%s343 + $0x8] sm:$0xff]
      %v1614 = vld [vmem:[%s343 + $0x10] sm:$0xff]
      %v1615 = vld [vmem:[%s343 + $0x18] sm:$0xff]
      %v1616 = vld [vmem:[%s343 + $0x20] sm:$0xff]
      %v1617 = vld [vmem:[%s343 + $0x28] sm:$0xff]
      %v1618 = vld [vmem:[%s343 + $0x30] sm:$0xff]
      %v1619 = vld [vmem:[%s343 + $0x38] sm:$0xff]
      %v1620 = vld [vmem:[%s343 + $0x40] sm:$0xff]
      %v1621 = vld [vmem:[%s343 + $0x48] sm:$0xff]
      %v1622 = vld [vmem:[%s343 + $0x50] sm:$0xff]
      %v1623 = vld [vmem:[%s343 + $0x58] sm:$0xff]
      %v1624 = vld [vmem:[%s343 + $0x60] sm:$0xff]
      %v1625 = vld [vmem:[%s343 + $0x68] sm:$0xff]
      %v1626 = vld [vmem:[%s343 + $0x70] sm:$0xff]
      %v1627 = vld [vmem:[%s343 + $0x78] sm:$0xff]
      %v1628 = vadd.f32 %v1596, %v1612
      %v1629 = vadd.f32 %v1597, %v1613
      %v1630 = vadd.f32 %v1598, %v1614
      %v1631 = vadd.f32 %v1599, %v1615
      %v1632 = vadd.f32 %v1600, %v1616
      %v1633 = vadd.f32 %v1601, %v1617
      %v1634 = vadd.f32 %v1602, %v1618
      %v1635 = vadd.f32 %v1603, %v1619
      %v1636 = vadd.f32 %v1604, %v1620
      %v1637 = vadd.f32 %v1605, %v1621
      %v1638 = vadd.f32 %v1606, %v1622
      %v1639 = vadd.f32 %v1607, %v1623
      %v1640 = vadd.f32 %v1608, %v1624
      %v1641 = vadd.f32 %v1609, %v1625
      %v1642 = vadd.f32 %v1610, %v1626
      %v1643 = vadd.f32 %v1611, %v1627
      %v1644 = vmax.f32 %v1628, 0.0
      %v1645 = vmax.f32 %v1629, 0.0
      %v1646 = vmax.f32 %v1630, 0.0
      %v1647 = vmax.f32 %v1631, 0.0
      %v1648 = vmax.f32 %v1632, 0.0
      %v1649 = vmax.f32 %v1633, 0.0
      %v1650 = vmax.f32 %v1634, 0.0
      %v1651 = vmax.f32 %v1635, 0.0
      %v1652 = vmax.f32 %v1636, 0.0
      %v1653 = vmax.f32 %v1637, 0.0
      %v1654 = vmax.f32 %v1638, 0.0
      %v1655 = vmax.f32 %v1639, 0.0
      %v1656 = vmax.f32 %v1640, 0.0
      %v1657 = vmax.f32 %v1641, 0.0
      %v1658 = vmax.f32 %v1642, 0.0
      %v1659 = vmax.f32 %v1643, 0.0
      %1660 = vst.msk [vmem:[%s354] sm:$0xff] %vm679, %v1644
      %1661 = vst.msk [vmem:[%s354 + $0x8] sm:$0xff] %vm679, %v1645
      %1662 = vst.msk [vmem:[%s354 + $0x10] sm:$0xff] %vm679, %v1646
      %1663 = vst.msk [vmem:[%s354 + $0x18] sm:$0xff] %vm679, %v1647
      %1664 = vst.msk [vmem:[%s354 + $0x20] sm:$0xff] %vm679, %v1648
      %1665 = vst.msk [vmem:[%s354 + $0x28] sm:$0xff] %vm679, %v1649
      %1666 = vst.msk [vmem:[%s354 + $0x30] sm:$0xff] %vm679, %v1650
      %1667 = vst.msk [vmem:[%s354 + $0x38] sm:$0xff] %vm679, %v1651
      %1668 = vst.msk [vmem:[%s354 + $0x40] sm:$0xff] %vm679, %v1652
      %1669 = vst.msk [vmem:[%s354 + $0x48] sm:$0xff] %vm679, %v1653
      %1670 = vst.msk [vmem:[%s354 + $0x50] sm:$0xff] %vm679, %v1654
      %1671 = vst.msk [vmem:[%s354 + $0x58] sm:$0xff] %vm679, %v1655
      %1672 = vst.msk [vmem:[%s354 + $0x60] sm:$0xff] %vm679, %v1656
      %1673 = vst.msk [vmem:[%s354 + $0x68] sm:$0xff] %vm679, %v1657
      %1674 = vst.msk [vmem:[%s354 + $0x70] sm:$0xff] %vm679, %v1658
      %1675 = vst.msk [vmem:[%s354 + $0x78] sm:$0xff] %vm679, %v1659
      %v1676 = vsel %vm679, %v1644, 0.0
      %v1677 = vsel %vm679, %v1645, 0.0
      %v1678 = vadd.f32 %v1676, %v1677
      %v1679 = vsel %vm679, %v1646, 0.0
      %v1680 = vadd.f32 %v1678, %v1679
      %v1681 = vsel %vm679, %v1647, 0.0
      %v1682 = vadd.f32 %v1680, %v1681
      %v1683 = vsel %vm679, %v1648, 0.0
      %v1684 = vadd.f32 %v1682, %v1683
      %v1685 = vsel %vm679, %v1649, 0.0
      %v1686 = vadd.f32 %v1684, %v1685
      %v1687 = vsel %vm679, %v1650, 0.0
      %v1688 = vadd.f32 %v1686, %v1687
      %v1689 = vsel %vm679, %v1651, 0.0
      %v1690 = vadd.f32 %v1688, %v1689
      %v1691 = vsel %vm679, %v1652, 0.0
      %v1692 = vadd.f32 %v1690, %v1691
      %v1693 = vsel %vm679, %v1653, 0.0
      %v1694 = vadd.f32 %v1692, %v1693
      %v1695 = vsel %vm679, %v1654, 0.0
      %v1696 = vadd.f32 %v1694, %v1695
      %v1697 = vsel %vm679, %v1655, 0.0
      %v1698 = vadd.f32 %v1696, %v1697
      %v1699 = vsel %vm679, %v1656, 0.0
      %v1700 = vadd.f32 %v1698, %v1699
      %v1701 = vsel %vm679, %v1657, 0.0
      %v1702 = vadd.f32 %v1700, %v1701
      %v1703 = vsel %vm679, %v1658, 0.0
      %v1704 = vadd.f32 %v1702, %v1703
      %v1705 = vsel %vm679, %v1659, 0.0
      %v1706 = vadd.f32 %v1704, %v1705
      %v1707 = vrot.slane %v1706, 4
      %v1708 = vadd.f32 %v1706, %v1707
      %v1709 = vrot.slane %v1708, 2
      %v1710 = vadd.f32 %v1708, %v1709
      %v1711 = vrot.slane %v1710, 1
      %v1712 = vadd.f32 %v1710, %v1711
      %v1713 = vmul.f32 %v1644, %v1644
      %v1714 = vmul.f32 %v1645, %v1645
      %v1715 = vmul.f32 %v1646, %v1646
      %v1716 = vmul.f32 %v1647, %v1647
      %v1717 = vmul.f32 %v1648, %v1648
      %v1718 = vmul.f32 %v1649, %v1649
      %v1719 = vmul.f32 %v1650, %v1650
      %v1720 = vmul.f32 %v1651, %v1651
      %v1721 = vmul.f32 %v1652, %v1652
      %v1722 = vmul.f32 %v1653, %v1653
      %v1723 = vmul.f32 %v1654, %v1654
      %v1724 = vmul.f32 %v1655, %v1655
      %v1725 = vmul.f32 %v1656, %v1656
      %v1726 = vmul.f32 %v1657, %v1657
      %v1727 = vmul.f32 %v1658, %v1658
      %v1728 = vmul.f32 %v1659, %v1659
      %v1729 = vsel %vm679, %v1713, 0.0
      %v1730 = vsel %vm679, %v1714, 0.0
      %v1731 = vadd.f32 %v1729, %v1730
      %v1732 = vsel %vm679, %v1715, 0.0
      %v1733 = vadd.f32 %v1731, %v1732
      %v1734 = vsel %vm679, %v1716, 0.0
      %v1735 = vadd.f32 %v1733, %v1734
      %v1736 = vsel %vm679, %v1717, 0.0
      %v1737 = vadd.f32 %v1735, %v1736
      %v1738 = vsel %vm679, %v1718, 0.0
      %v1739 = vadd.f32 %v1737, %v1738
      %v1740 = vsel %vm679, %v1719, 0.0
      %v1741 = vadd.f32 %v1739, %v1740
      %v1742 = vsel %vm679, %v1720, 0.0
      %v1743 = vadd.f32 %v1741, %v1742
      %v1744 = vsel %vm679, %v1721, 0.0
      %v1745 = vadd.f32 %v1743, %v1744
      %v1746 = vsel %vm679, %v1722, 0.0
      %v1747 = vadd.f32 %v1745, %v1746
      %v1748 = vsel %vm679, %v1723, 0.0
      %v1749 = vadd.f32 %v1747, %v1748
      %v1750 = vsel %vm679, %v1724, 0.0
      %v1751 = vadd.f32 %v1749, %v1750
      %v1752 = vsel %vm679, %v1725, 0.0
      %v1753 = vadd.f32 %v1751, %v1752
      %v1754 = vsel %vm679, %v1726, 0.0
      %v1755 = vadd.f32 %v1753, %v1754
      %v1756 = vsel %vm679, %v1727, 0.0
      %v1757 = vadd.f32 %v1755, %v1756
      %v1758 = vsel %vm679, %v1728, 0.0
      %v1759 = vadd.f32 %v1757, %v1758
      %v1760 = vrot.slane %v1759, 4
      %v1761 = vadd.f32 %v1759, %v1760
      %v1762 = vrot.slane %v1761, 2
      %v1763 = vadd.f32 %v1761, %v1762
      %v1764 = vrot.slane %v1763, 1
      %v1765 = vadd.f32 %v1763, %v1764
      %vm1766 = vcmask 1040384
      %v1767 = vsel %vm1766, %v1712, %v1765
      %vm1768 = vcmask 25600
      %1769 = vst.msk [vmem:[%s363] sm:$0x3] %vm1768, %v1767
      %s1770 = smul.u32 8, %s24
      %p1771 = scmp.lt.s32.totalorder %s23, 1
      %s1772 = scalar_select %p1771, %s23, 1
      %p1773 = scmp.lt.s32.totalorder %s1770, 15
      %s1774 = scalar_select %p1773, %s1770, 15
      %s1775 = smul.addr %s1774, 2
      %s1776 = smul.addr %s1772, 32
      %s1777 = sadd.s32 %s1775, %s1776
      %s1778 = smul.addr %s1777, 8
      %s1779 = scalar_lea.vmem %s6, %s1778
      %p1780 = scmp.lt.s32.totalorder %s23, 1
      %s1781 = scalar_select %p1780, %s23, 1
      %p1782 = scmp.lt.s32.totalorder %s24, 1
      %s1783 = scalar_select %p1782, %s24, 1
      %s1784 = smul.addr %s1781, 2
      %s1785 = sadd.s32 %s1783, %s1784
      %s1786 = smul.addr %s1785, 2
      %s1787 = scalar_lea.vmem %s7, %s1786
      // Predicated region
      $region45: #{resblock_forward.12} parent=43 // pred_check
        %p1788 = pneg %p189
      $region46: #{resblock_forward.12} parent=43 // pred_check_branch
        %1790 = sbr.rel (%p1788) target = $region48
      $region47: #{resblock_forward.12} parent=43 // pred_region
        %s1791 = smul.u32 8, %s24
      $region48: #{resblock_forward.12} parent=43 // pred_fallthru
        _
      // Predicated region
      $region49: #{resblock_forward.12} parent=43 // pred_check
        %p1792 = pneg %p217
      $region50: #{resblock_forward.12} parent=43 // pred_check_branch
        %1794 = sbr.rel (%p1792) target = $region52
      $region51: #{resblock_forward.12} parent=43 // pred_region
        _
      $region52: #{resblock_forward.12} parent=43 // pred_fallthru
        _
    $region44: #{resblock_forward.12} parent=5 // pred_fallthru
      _
    %p1795 = scmp.le.s32.totalorder 2, %s14
    // Predicated region
    $region53: #{resblock_forward.12} parent=5 // pred_check
      %p1796 = pneg %p1795
    $region54: #{resblock_forward.12} parent=5 // pred_check_branch
      %1798 = sbr.rel (%p1796) target = $region56
    $region55: #{resblock_forward.12} parent=5 // pred_region
      %s1799 = ssub.s32 %s14, 2
      // Predicated region
      $region57: #{resblock_forward.12} parent=55 // pred_check
        %p1800 = pneg %p195
      $region58: #{resblock_forward.12} parent=55 // pred_check_branch
        %1802 = sbr.rel (%p1800) target = $region60
      $region59: #{resblock_forward.12} parent=55 // pred_region
        %s1803 = smul.u32 8, %s26
        %p1804 = scmp.lt.s32.totalorder %s25, 1
        %s1805 = scalar_select %p1804, %s25, 1
        %p1806 = scmp.lt.s32.totalorder %s1803, 15
        %s1807 = scalar_select %p1806, %s1803, 15
        %s1808 = smul.addr %s1807, 2
        %s1809 = smul.addr %s1805, 32
        %s1810 = sadd.s32 %s1808, %s1809
        %s1811 = smul.addr %s1810, 8
        %s1812 = scalar_lea.vmem %s6, %s1811
      $region60: #{resblock_forward.12} parent=55 // pred_fallthru
        _
      // Predicated region
      $region61: #{resblock_forward.12} parent=55 // pred_check
        %p1813 = pneg %p223
      $region62: #{resblock_forward.12} parent=55 // pred_check_branch
        %1815 = sbr.rel (%p1813) target = $region64
      $region63: #{resblock_forward.12} parent=55 // pred_region
        %p1816 = scmp.lt.s32.totalorder %s25, 1
        %s1817 = scalar_select %p1816, %s25, 1
        %p1818 = scmp.lt.s32.totalorder %s26, 1
        %s1819 = scalar_select %p1818, %s26, 1
        %s1820 = smul.addr %s1817, 2
        %s1821 = sadd.s32 %s1819, %s1820
        %s1822 = smul.addr %s1821, 2
        %s1823 = scalar_lea.vmem %s7, %s1822
      $region64: #{resblock_forward.12} parent=55 // pred_fallthru
        _
    $region56: #{resblock_forward.12} parent=5 // pred_fallthru
      _
  $region6: #{resblock_forward.12} parent=0 // loop_footer
    %s18 = sadd.s32 1, %s14
  $region7: #{resblock_forward.12} parent=0 // loop_footer_branch
    %13 = sbr.rel target = $region3
  $region8: #{resblock_forward.12} parent=0 // loop_exit
    _

</llo_original>
